<compile_context>
chip_gen: v6e
topology: v6e:2x2x1
jax: 0.10.0
libtpu: 0.0.40
codegen_flags: <defaults>
</compile_context>

<pallas_src>
import functools

import jax
import jax.numpy as jnp
from jax import lax
from jax.experimental import pallas as pl
from jax.experimental.pallas import tpu as pltpu


# ----------------------------- fused Pallas kernel -----------------------------

def _encoder_stack_kernel(
    lens_ref,                                     # [B] int32 in SMEM (scalar prefetch)
    x_ref,                                        # [S, D]  activations (this batch row)
    wq_ref, wk_ref, wv_ref,                       # [H, Dh, D] bf16
    bq_ref, bk_ref, bv_ref,                       # [H, 1, Dh] f32
    wo_ref,                                       # [H, D, Dh] bf16
    bo_ref,                                       # [1, D] f32
    w1_ref, b1_ref,                               # [D, Dff] bf16, [1, Dff] f32
    w2_ref, b2_ref,                               # [Dff, D] bf16, [1, D] f32
    ln1g_ref, ln1b_ref, ln2g_ref, ln2b_ref,       # [1, D] f32
    lnfg_ref, lnfb_ref,                           # [1, D] f32 (Encoder.norm)
    o_ref,                                        # [S, D] f32 output
    *, n_layer, n_head, eps,
):
    S, D = x_ref.shape
    Dh = D // n_head
    scale = 1.0 / (float(Dh) ** 0.5)
    f32 = jnp.float32
    bf16 = jnp.bfloat16

    # Additive key-padding mask built in-kernel from the per-batch length (no
    # [B,S,S] f32 mask DMA'd from HBM).  NOTE: a fully-masked row (len == 0) would
    # yield a uniform attention distribution rather than NaN.
    kv_len = lens_ref[pl.program_id(0)]
    col = lax.broadcasted_iota(jnp.int32, (S, S), 1)
    mask = jnp.where(col < kv_len, 0.0, -1e9).astype(f32)            # [S, S]

    def layer_norm(y, g_ref, b_ref):
        mu = jnp.mean(y, axis=-1, keepdims=True)
        var = jnp.mean(jnp.square(y - mu), axis=-1, keepdims=True)
        return (y - mu) * lax.rsqrt(var + eps) * g_ref[...] + b_ref[...]

    def layer(_, x):                                                 # x: [S, D] f32
        xb = x.astype(bf16)
        xh = jnp.broadcast_to(xb, (n_head, S, D))                    # [H, S, D] bf16

        # Per-head projections as one batched matmul each (full-D contraction),
        # producing the batch-head layout directly (no lane-slicing of a fused QKV).
        q = jnp.einsum('hsd,hed->hse', xh, wq_ref[...],
                       preferred_element_type=f32) + bq_ref[...]     # [H, S, Dh]
        k = jnp.einsum('hsd,hed->hse', xh, wk_ref[...],
                       preferred_element_type=f32) + bk_ref[...]
        v = jnp.einsum('hsd,hed->hse', xh, wv_ref[...],
                       preferred_element_type=f32) + bv_ref[...]

        # Attention scores for all heads in one batched dot_general.
        s = jnp.einsum('hqe,hke->hqk', q.astype(bf16), k.astype(bf16),
                       preferred_element_type=f32) * scale + mask[None]   # [H, S, S]
        s = s - jnp.max(s, axis=-1, keepdims=True)
        p = jnp.exp(s)
        p = p / jnp.sum(p, axis=-1, keepdims=True)                   # exact softmax (f32)

        # P.V for all heads, then the output projection folded per head and summed
        # (avoids reassembling a [S, H*Dh] tensor with non-128 lane offsets).
        oh = jnp.einsum('hqk,hke->hqe', p.astype(bf16), v.astype(bf16),
                        preferred_element_type=f32)                  # [H, S, Dh]
        ah = jnp.einsum('hse,hde->hsd', oh.astype(bf16), wo_ref[...],
                        preferred_element_type=f32)                  # [H, S, D]
        a = jnp.sum(ah, axis=0) + bo_ref[...]                        # [S, D]

        x = layer_norm(x + a, ln1g_ref, ln1b_ref)

        # Position-wise FFN (bf16 operands, f32 accumulation / elementwise).
        f = jnp.dot(x.astype(bf16), w1_ref[...],
                    preferred_element_type=f32) + b1_ref[...]
        f = jnp.maximum(f, 0.0)
        f = jnp.dot(f.astype(bf16), w2_ref[...],
                    preferred_element_type=f32) + b2_ref[...]
        return layer_norm(x + f, ln2g_ref, ln2b_ref)

    x = lax.fori_loop(0, n_layer, layer, x_ref[...])                 # rolled layer loop

    # Encoder.forward final norm.
    o_ref[...] = layer_norm(x, lnfg_ref, lnfb_ref)


# ----------------------------- wrapper -----------------------------

_WEIGHT_ORDER = ("wq", "wk", "wv", "bq", "bk", "bv", "wo", "bo",
                 "w1", "b1", "w2", "b2",
                 "ln1_g", "ln1_b", "ln2_g", "ln2_b", "norm_g", "norm_b")


def encoder_forward(src, lens, kparams, *, n_layer, n_head,
                    single_buffer_weights=True):
    """src: [B, S, D] f32; lens: [B] int32 key-padding lengths; kparams: packed weights."""
    B, S, D = src.shape
    assert D % n_head == 0
    d_ff = kparams["w1"].shape[-1]
    weights = [kparams[n] for n in _WEIGHT_ORDER]

    def rep(arr):
        # Weights: constant block index -> resident in VMEM across the whole grid.
        nd = arr.ndim
        kw = {}
        if single_buffer_weights:
            kw["pipeline_mode"] = pl.Buffered(1)   # don't double-buffer constants
        return pl.BlockSpec(arr.shape, lambda b, lens_ref, nd=nd: (0,) * nd, **kw)

    # Advisory cost estimate for the whole fused stack.
    flops = 2 * B * n_layer * S * D * (4 * D + 2 * S + 2 * d_ff)
    transcendentals = B * n_layer * n_head * S * S
    bytes_accessed = (2 * B * S * D * 4 + B * 4
                      + sum(int(w.size) * w.dtype.itemsize for w in weights))

    kernel = functools.partial(
        _encoder_stack_kernel, n_layer=n_layer, n_head=n_head, eps=1e-5)

    return pl.pallas_call(
        kernel,
        out_shape=jax.ShapeDtypeStruct((B, S, D), jnp.float32),
        grid_spec=pltpu.PrefetchScalarGridSpec(
            num_scalar_prefetch=1,                 # lens -> SMEM
            grid=(B,),
            in_specs=[pl.BlockSpec((None, S, D), lambda b, lens_ref: (b, 0, 0))]
                     + [rep(w) for w in weights],
            out_specs=pl.BlockSpec((None, S, D), lambda b, lens_ref: (b, 0, 0)),
        ),
        compiler_params=pltpu.CompilerParams(
            dimension_semantics=("parallel",),
            vmem_limit_bytes=64 * 1024 * 1024),
        cost_estimate=pl.CostEstimate(
            flops=flops, transcendentals=transcendentals,
            bytes_accessed=bytes_accessed),
    )(lens, src, *weights)


# ----------------------------- params -----------------------------

def init_params(key, d_model, d_ff):
    """PyTorch-layout f32 parameters for one encoder block + final norm."""
    ks = jax.random.split(key, 6)
    std = 0.02

    def w(k, fi, fo):
        return std * jax.random.normal(k, (fi, fo), jnp.float32)

    zeros = lambda n: jnp.zeros((n,), jnp.float32)
    ones = lambda n: jnp.ones((n,), jnp.float32)

    block = dict(
        wq=w(ks[0], d_model, d_model), bq=zeros(d_model),
        wk=w(ks[1], d_model, d_model), bk=zeros(d_model),
        wv=w(ks[2], d_model, d_model), bv=zeros(d_model),
        wo=w(ks[3], d_model, d_model), bo=zeros(d_model),
        w1=w(ks[4], d_model, d_ff), b1=zeros(d_ff),
        w2=w(ks[5], d_ff, d_model), b2=zeros(d_model),
        ln1_g=ones(d_model), ln1_b=zeros(d_model),
        ln2_g=ones(d_model), ln2_b=zeros(d_model),
    )
    return dict(block=block, norm_g=ones(d_model), norm_b=zeros(d_model))


def pack_params(params, n_head):
    """Reshape/cast the PyTorch-layout params into the kernel layout (done once,
    outside jit): per-head bf16 projection weights, f32 biases / LN params."""
    p = params["block"]
    D = p["wq"].shape[0]
    Dh = D // n_head

    def heads_w(w):   # [D, H*Dh] -> [H, Dh, D] bf16 (contract on last dim in-kernel)
        return w.reshape(D, n_head, Dh).transpose(1, 2, 0).astype(jnp.bfloat16)

    def heads_b(b):   # [H*Dh] -> [H, 1, Dh] f32
        return b.reshape(n_head, Dh)[:, None, :].astype(jnp.float32)

    def row(v):       # [N] -> [1, N] f32
        return v.reshape(1, -1).astype(jnp.float32)

    return dict(
        wq=heads_w(p["wq"]), wk=heads_w(p["wk"]), wv=heads_w(p["wv"]),
        bq=heads_b(p["bq"]), bk=heads_b(p["bk"]), bv=heads_b(p["bv"]),
        # wo: [H*Dh, D] -> [H, D, Dh] bf16 (contract per-head Dh on last dim)
        wo=p["wo"].reshape(n_head, Dh, D).transpose(0, 2, 1).astype(jnp.bfloat16),
        bo=row(p["bo"]),
        w1=p["w1"].astype(jnp.bfloat16), b1=row(p["b1"]),
        w2=p["w2"].astype(jnp.bfloat16), b2=row(p["b2"]),
        ln1_g=row(p["ln1_g"]), ln1_b=row(p["ln1_b"]),
        ln2_g=row(p["ln2_g"]), ln2_b=row(p["ln2_b"]),
        norm_g=row(params["norm_g"]), norm_b=row(params["norm_b"]),
    )


# ----------------------------- pure-JAX reference -----------------------------

def encoder_reference(src, src_mask, params, n_layer, n_head):
    """Pure-JAX f32 reference with identical math (sanity check only)."""
    B, S, D = src.shape
    Dh = D // n_head
    p = params["block"]
    mask_add = jnp.where(src_mask, 0.0, -1e9).astype(jnp.float32)

    def ln(y, g, b, eps=1e-5):
        mu = jnp.mean(y, axis=-1, keepdims=True)
        var = jnp.mean(jnp.square(y - mu), axis=-1, keepdims=True)
        return (y - mu) / jnp.sqrt(var + eps) * g + b

    def split(t):
        return t.reshape(B, S, n_head, Dh).transpose(0, 2, 1, 3)

    x = src
    for _ in range(n_layer):
        q = split(x @ p["wq"] + p["bq"])
        k = split(x @ p["wk"] + p["bk"])
        v = split(x @ p["wv"] + p["bv"])
        s = jnp.einsum("bhqd,bhkd->bhqk", q, k) / (Dh ** 0.5) + mask_add[:, None]
        attn = jax.nn.softmax(s, axis=-1)
        o = jnp.einsum("bhqk,bhkd->bhqd", attn, v).transpose(0, 2, 1, 3).reshape(B, S, D)
        a = o @ p["wo"] + p["bo"]
        x = ln(x + a, p["ln1_g"], p["ln1_b"])
        f = jax.nn.relu(x @ p["w1"] + p["b1"])
        f = f @ p["w2"] + p["b2"]
        x = ln(x + f, p["ln2_g"], p["ln2_b"])
    return ln(x, params["norm_g"], params["norm_b"])


# ----------------------------- demo -----------------------------

if __name__ == "__main__":
    B, S, D, H, D_FF, N_LAYER = 2, 8, 32, 4, 64, 2

    key = jax.random.PRNGKey(0)
    k_src, k_par = jax.random.split(key)
    src = jax.random.normal(k_src, (B, S, D), dtype=jnp.float32)

    # key-padding lengths: batch 0 attends to all 8 positions, batch 1 to first 5.
    lens = jnp.array([8, 5], dtype=jnp.int32)
    key_pos = jnp.arange(S)[None, None, :]
    src_mask = jnp.broadcast_to(key_pos < lens[:, None, None], (B, S, S))  # reference only

    params = init_params(k_par, D, D_FF)
    kparams = pack_params(params, H)

    fwd = functools.partial(encoder_forward, n_layer=N_LAYER, n_head=H)
    try:
        out = jax.block_until_ready(jax.jit(fwd)(src, lens, kparams))
    except Exception:
        # Fallback: this jax/libtpu version rejects pl.Buffered(1) single-buffering
        # of the constant weight inputs; rerun with default double-buffering.
        fwd = functools.partial(encoder_forward, n_layer=N_LAYER, n_head=H,
                                single_buffer_weights=False)
        out = jax.block_until_ready(jax.jit(fwd)(src, lens, kparams))

    assert out.shape == (B, S, D) and out.dtype == jnp.float32
    assert bool(jnp.all(jnp.isfinite(out)))

    # Softmax is exact now; the only deviation vs the f32 reference is bf16 MXU operands.
    ref = encoder_reference(src, src_mask, params, N_LAYER, H)
    err = float(jnp.max(jnp.abs(out - ref)))
    assert err < 5e-2, f"max abs err {err}"

    print("KERNEL_OK")
</pallas_src>

<mosaic_0001>
module attributes {stable_mosaic.version = 11 : i64} {
  func.func @_encoder_stack_kernel(%arg0: i32, %arg1: memref<2xi32, #tpu.memory_space<smem>>, %arg2: memref<1x8x32xf32, #tpu.memory_space<vmem>>, %arg3: memref<4x8x32xbf16, #tpu.memory_space<vmem>>, %arg4: memref<4x8x32xbf16, #tpu.memory_space<vmem>>, %arg5: memref<4x8x32xbf16, #tpu.memory_space<vmem>>, %arg6: memref<4x1x8xf32, #tpu.memory_space<vmem>>, %arg7: memref<4x1x8xf32, #tpu.memory_space<vmem>>, %arg8: memref<4x1x8xf32, #tpu.memory_space<vmem>>, %arg9: memref<4x32x8xbf16, #tpu.memory_space<vmem>>, %arg10: memref<1x32xf32, #tpu.memory_space<vmem>>, %arg11: memref<32x64xbf16, #tpu.memory_space<vmem>>, %arg12: memref<1x64xf32, #tpu.memory_space<vmem>>, %arg13: memref<64x32xbf16, #tpu.memory_space<vmem>>, %arg14: memref<1x32xf32, #tpu.memory_space<vmem>>, %arg15: memref<1x32xf32, #tpu.memory_space<vmem>>, %arg16: memref<1x32xf32, #tpu.memory_space<vmem>>, %arg17: memref<1x32xf32, #tpu.memory_space<vmem>>, %arg18: memref<1x32xf32, #tpu.memory_space<vmem>>, %arg19: memref<1x32xf32, #tpu.memory_space<vmem>>, %arg20: memref<1x32xf32, #tpu.memory_space<vmem>>, %arg21: memref<1x8x32xf32, #tpu.memory_space<vmem>>) attributes {dimension_semantics = [#tpu.dimension_semantics<parallel>], iteration_bounds = array<i64: 2>, scalar_prefetch = 1 : i64, scratch_operands = 0 : i64, tpu.core_type = #tpu.core_type<tc>, window_params = [{transform_indices = @transform_0, window_bounds = array<i64: 1, 8, 32>}, {pipeline_mode = #tpu.pipeline_mode<synchronous>, transform_indices = @transform_1, window_bounds = array<i64: 4, 8, 32>}, {pipeline_mode = #tpu.pipeline_mode<synchronous>, transform_indices = @transform_2, window_bounds = array<i64: 4, 8, 32>}, {pipeline_mode = #tpu.pipeline_mode<synchronous>, transform_indices = @transform_3, window_bounds = array<i64: 4, 8, 32>}, {pipeline_mode = #tpu.pipeline_mode<synchronous>, transform_indices = @transform_4, window_bounds = array<i64: 4, 1, 8>}, {pipeline_mode = #tpu.pipeline_mode<synchronous>, transform_indices = @transform_5, window_bounds = array<i64: 4, 1, 8>}, {pipeline_mode = #tpu.pipeline_mode<synchronous>, transform_indices = @transform_6, window_bounds = array<i64: 4, 1, 8>}, {pipeline_mode = #tpu.pipeline_mode<synchronous>, transform_indices = @transform_7, window_bounds = array<i64: 4, 32, 8>}, {pipeline_mode = #tpu.pipeline_mode<synchronous>, transform_indices = @transform_8, window_bounds = array<i64: 1, 32>}, {pipeline_mode = #tpu.pipeline_mode<synchronous>, transform_indices = @transform_9, window_bounds = array<i64: 32, 64>}, {pipeline_mode = #tpu.pipeline_mode<synchronous>, transform_indices = @transform_10, window_bounds = array<i64: 1, 64>}, {pipeline_mode = #tpu.pipeline_mode<synchronous>, transform_indices = @transform_11, window_bounds = array<i64: 64, 32>}, {pipeline_mode = #tpu.pipeline_mode<synchronous>, transform_indices = @transform_12, window_bounds = array<i64: 1, 32>}, {pipeline_mode = #tpu.pipeline_mode<synchronous>, transform_indices = @transform_13, window_bounds = array<i64: 1, 32>}, {pipeline_mode = #tpu.pipeline_mode<synchronous>, transform_indices = @transform_14, window_bounds = array<i64: 1, 32>}, {pipeline_mode = #tpu.pipeline_mode<synchronous>, transform_indices = @transform_15, window_bounds = array<i64: 1, 32>}, {pipeline_mode = #tpu.pipeline_mode<synchronous>, transform_indices = @transform_16, window_bounds = array<i64: 1, 32>}, {pipeline_mode = #tpu.pipeline_mode<synchronous>, transform_indices = @transform_17, window_bounds = array<i64: 1, 32>}, {pipeline_mode = #tpu.pipeline_mode<synchronous>, transform_indices = @transform_18, window_bounds = array<i64: 1, 32>}, {transform_indices = @transform_19, window_bounds = array<i64: 1, 8, 32>}]} {
    %0 = arith.index_cast %arg0 : i32 to index
    %1 = memref.load %arg1[%0] : memref<2xi32, #tpu.memory_space<smem>>
    %2 = tpu.iota {dimensions = array<i32: 1>} : vector<8x8xi32>
    %3 = vector.broadcast %1 : i32 to vector<8x8xi32>
    %4 = arith.cmpi slt, %2, %3 : vector<8x8xi32>
    %cst = arith.constant 0.000000e+00 : f32
    %cst_0 = arith.constant -1.000000e+09 : f32
    %5 = vector.broadcast %cst : f32 to vector<8x8xf32>
    %6 = vector.broadcast %cst_0 : f32 to vector<8x8xf32>
    %7 = arith.select %4, %5, %6 : vector<8x8xi1>, vector<8x8xf32>
    %c0 = arith.constant 0 : index
    %c0_1 = arith.constant 0 : index
    %c0_2 = arith.constant 0 : index
    %8 = vector.load %arg2[%c0, %c0_1, %c0_2] : memref<1x8x32xf32, #tpu.memory_space<vmem>>, vector<1x8x32xf32>
    %9 = vector.shape_cast %8 : vector<1x8x32xf32> to vector<8x32xf32>
    %c0_i32 = arith.constant 0 : i32
    %c2_i32 = arith.constant 2 : i32
    %10 = arith.addi %c0_i32, %c2_i32 : i32
    %c1_i32 = arith.constant 1 : i32
    %11 = scf.for %arg22 = %c0_i32 to %10 step %c1_i32 iter_args(%arg23 = %9) -> (vector<8x32xf32>)  : i32 {
      %39 = arith.truncf %arg23 : vector<8x32xf32> to vector<8x32xbf16>
      %40 = vector.shape_cast %39 : vector<8x32xbf16> to vector<1x8x32xbf16>
      %41 = vector.broadcast %40 : vector<1x8x32xbf16> to vector<4x8x32xbf16>
      %c0_15 = arith.constant 0 : index
      %c0_16 = arith.constant 0 : index
      %c0_17 = arith.constant 0 : index
      %42 = vector.load %arg3[%c0_15, %c0_16, %c0_17] : memref<4x8x32xbf16, #tpu.memory_space<vmem>>, vector<4x8x32xbf16>
      "tpu.trace_start"() <{level = 10 : i32, message = "hsd,hed->hse"}> : () -> ()
      %cst_18 = arith.constant dense<0.000000e+00> : vector<4x8x8xf32>
      %43 = tpu.matmul %41, %42, %cst_18 {dimension_numbers = #tpu.dot_dimension_numbers<[2], [2], [1], [1], [0, 0, 0, 1, 1, 1], [0], [0]>} : vector<4x8x32xbf16>, vector<4x8x32xbf16>, vector<4x8x8xf32> -> vector<4x8x8xf32>
      "tpu.trace_stop"() : () -> ()
      %c0_19 = arith.constant 0 : index
      %c0_20 = arith.constant 0 : index
      %c0_21 = arith.constant 0 : index
      %44 = vector.load %arg6[%c0_19, %c0_20, %c0_21] : memref<4x1x8xf32, #tpu.memory_space<vmem>>, vector<4x1x8xf32>
      %45 = vector.broadcast %44 : vector<4x1x8xf32> to vector<4x8x8xf32>
      %46 = arith.addf %43, %45 : vector<4x8x8xf32>
      %c0_22 = arith.constant 0 : index
      %c0_23 = arith.constant 0 : index
      %c0_24 = arith.constant 0 : index
      %47 = vector.load %arg4[%c0_22, %c0_23, %c0_24] : memref<4x8x32xbf16, #tpu.memory_space<vmem>>, vector<4x8x32xbf16>
      "tpu.trace_start"() <{level = 10 : i32, message = "hsd,hed->hse"}> : () -> ()
      %cst_25 = arith.constant dense<0.000000e+00> : vector<4x8x8xf32>
      %48 = tpu.matmul %41, %47, %cst_25 {dimension_numbers = #tpu.dot_dimension_numbers<[2], [2], [1], [1], [0, 0, 0, 1, 1, 1], [0], [0]>} : vector<4x8x32xbf16>, vector<4x8x32xbf16>, vector<4x8x8xf32> -> vector<4x8x8xf32>
      "tpu.trace_stop"() : () -> ()
      %c0_26 = arith.constant 0 : index
      %c0_27 = arith.constant 0 : index
      %c0_28 = arith.constant 0 : index
      %49 = vector.load %arg7[%c0_26, %c0_27, %c0_28] : memref<4x1x8xf32, #tpu.memory_space<vmem>>, vector<4x1x8xf32>
      %50 = vector.broadcast %49 : vector<4x1x8xf32> to vector<4x8x8xf32>
      %51 = arith.addf %48, %50 : vector<4x8x8xf32>
      %c0_29 = arith.constant 0 : index
      %c0_30 = arith.constant 0 : index
      %c0_31 = arith.constant 0 : index
      %52 = vector.load %arg5[%c0_29, %c0_30, %c0_31] : memref<4x8x32xbf16, #tpu.memory_space<vmem>>, vector<4x8x32xbf16>
      "tpu.trace_start"() <{level = 10 : i32, message = "hsd,hed->hse"}> : () -> ()
      %cst_32 = arith.constant dense<0.000000e+00> : vector<4x8x8xf32>
      %53 = tpu.matmul %41, %52, %cst_32 {dimension_numbers = #tpu.dot_dimension_numbers<[2], [2], [1], [1], [0, 0, 0, 1, 1, 1], [0], [0]>} : vector<4x8x32xbf16>, vector<4x8x32xbf16>, vector<4x8x8xf32> -> vector<4x8x8xf32>
      "tpu.trace_stop"() : () -> ()
      %c0_33 = arith.constant 0 : index
      %c0_34 = arith.constant 0 : index
      %c0_35 = arith.constant 0 : index
      %54 = vector.load %arg8[%c0_33, %c0_34, %c0_35] : memref<4x1x8xf32, #tpu.memory_space<vmem>>, vector<4x1x8xf32>
      %55 = vector.broadcast %54 : vector<4x1x8xf32> to vector<4x8x8xf32>
      %56 = arith.addf %53, %55 : vector<4x8x8xf32>
      %57 = arith.truncf %46 : vector<4x8x8xf32> to vector<4x8x8xbf16>
      %58 = arith.truncf %51 : vector<4x8x8xf32> to vector<4x8x8xbf16>
      "tpu.trace_start"() <{level = 10 : i32, message = "hqe,hke->hqk"}> : () -> ()
      %cst_36 = arith.constant dense<0.000000e+00> : vector<4x8x8xf32>
      %59 = tpu.matmul %57, %58, %cst_36 {dimension_numbers = #tpu.dot_dimension_numbers<[2], [2], [1], [1], [0, 0, 0, 1, 1, 1], [0], [0]>} : vector<4x8x8xbf16>, vector<4x8x8xbf16>, vector<4x8x8xf32> -> vector<4x8x8xf32>
      "tpu.trace_stop"() : () -> ()
      %cst_37 = arith.constant 0.353553385 : f32
      %60 = vector.broadcast %cst_37 : f32 to vector<4x8x8xf32>
      %61 = arith.mulf %59, %60 : vector<4x8x8xf32>
      %62 = vector.shape_cast %7 : vector<8x8xf32> to vector<1x8x8xf32>
      %63 = vector.broadcast %62 : vector<1x8x8xf32> to vector<4x8x8xf32>
      %64 = arith.addf %61, %63 : vector<4x8x8xf32>
      %cst_38 = arith.constant dense<0xFF800000> : vector<4x8xf32>
      %65 = vector.multi_reduction <maximumf>, %64, %cst_38 [2] : vector<4x8x8xf32> to vector<4x8xf32>
      %66 = vector.shape_cast %65 : vector<4x8xf32> to vector<4x8x1xf32>
      %67 = vector.broadcast %66 : vector<4x8x1xf32> to vector<4x8x8xf32>
      %68 = arith.subf %64, %67 : vector<4x8x8xf32>
      %69 = math.exp %68 : vector<4x8x8xf32>
      %cst_39 = arith.constant dense<0.000000e+00> : vector<4x8xf32>
      %70 = vector.multi_reduction <add>, %69, %cst_39 [2] : vector<4x8x8xf32> to vector<4x8xf32>
      %71 = vector.shape_cast %70 : vector<4x8xf32> to vector<4x8x1xf32>
      %72 = vector.broadcast %71 : vector<4x8x1xf32> to vector<4x8x8xf32>
      %73 = arith.divf %69, %72 : vector<4x8x8xf32>
      %74 = arith.truncf %73 : vector<4x8x8xf32> to vector<4x8x8xbf16>
      %75 = arith.truncf %56 : vector<4x8x8xf32> to vector<4x8x8xbf16>
      "tpu.trace_start"() <{level = 10 : i32, message = "hqk,hke->hqe"}> : () -> ()
      %cst_40 = arith.constant dense<0.000000e+00> : vector<4x8x8xf32>
      %76 = tpu.matmul %74, %75, %cst_40 {dimension_numbers = #tpu.dot_dimension_numbers<[2], [1], [1], [2], [0, 0, 0, 1, 1, 2], [0], [0]>} : vector<4x8x8xbf16>, vector<4x8x8xbf16>, vector<4x8x8xf32> -> vector<4x8x8xf32>
      "tpu.trace_stop"() : () -> ()
      %77 = arith.truncf %76 : vector<4x8x8xf32> to vector<4x8x8xbf16>
      %c0_41 = arith.constant 0 : index
      %c0_42 = arith.constant 0 : index
      %c0_43 = arith.constant 0 : index
      %78 = vector.load %arg9[%c0_41, %c0_42, %c0_43] : memref<4x32x8xbf16, #tpu.memory_space<vmem>>, vector<4x32x8xbf16>
      "tpu.trace_start"() <{level = 10 : i32, message = "hse,hde->hsd"}> : () -> ()
      %cst_44 = arith.constant dense<0.000000e+00> : vector<4x8x32xf32>
      %79 = tpu.matmul %77, %78, %cst_44 {dimension_numbers = #tpu.dot_dimension_numbers<[2], [2], [1], [1], [0, 0, 0, 1, 1, 1], [0], [0]>} : vector<4x8x8xbf16>, vector<4x32x8xbf16>, vector<4x8x32xf32> -> vector<4x8x32xf32>
      "tpu.trace_stop"() : () -> ()
      %cst_45 = arith.constant dense<0.000000e+00> : vector<8x32xf32>
      %80 = vector.multi_reduction <add>, %79, %cst_45 [0] : vector<4x8x32xf32> to vector<8x32xf32>
      %c0_46 = arith.constant 0 : index
      %c0_47 = arith.constant 0 : index
      %81 = vector.load %arg10[%c0_46, %c0_47] : memref<1x32xf32, #tpu.memory_space<vmem>>, vector<1x32xf32>
      %82 = vector.broadcast %81 : vector<1x32xf32> to vector<8x32xf32>
      %83 = arith.addf %80, %82 : vector<8x32xf32>
      %84 = arith.addf %arg23, %83 : vector<8x32xf32>
      %cst_48 = arith.constant dense<0.000000e+00> : vector<8xf32>
      %85 = vector.multi_reduction <add>, %84, %cst_48 [1] : vector<8x32xf32> to vector<8xf32>
      %86 = vector.shape_cast %85 : vector<8xf32> to vector<8x1xf32>
      %cst_49 = arith.constant 3.200000e+01 : f32
      %87 = vector.broadcast %cst_49 : f32 to vector<8x1xf32>
      %88 = arith.divf %86, %87 : vector<8x1xf32>
      %89 = vector.broadcast %88 : vector<8x1xf32> to vector<8x32xf32>
      %90 = arith.subf %84, %89 : vector<8x32xf32>
      %91 = arith.mulf %90, %90 : vector<8x32xf32>
      %cst_50 = arith.constant dense<0.000000e+00> : vector<8xf32>
      %92 = vector.multi_reduction <add>, %91, %cst_50 [1] : vector<8x32xf32> to vector<8xf32>
      %93 = vector.shape_cast %92 : vector<8xf32> to vector<8x1xf32>
      %cst_51 = arith.constant 3.200000e+01 : f32
      %94 = vector.broadcast %cst_51 : f32 to vector<8x1xf32>
      %95 = arith.divf %93, %94 : vector<8x1xf32>
      %96 = vector.broadcast %88 : vector<8x1xf32> to vector<8x32xf32>
      %97 = arith.subf %84, %96 : vector<8x32xf32>
      %cst_52 = arith.constant 9.99999974E-6 : f32
      %98 = vector.broadcast %cst_52 : f32 to vector<8x1xf32>
      %99 = arith.addf %95, %98 : vector<8x1xf32>
      %100 = math.rsqrt %99 : vector<8x1xf32>
      %101 = vector.broadcast %100 : vector<8x1xf32> to vector<8x32xf32>
      %102 = arith.mulf %97, %101 : vector<8x32xf32>
      %c0_53 = arith.constant 0 : index
      %c0_54 = arith.constant 0 : index
      %103 = vector.load %arg15[%c0_53, %c0_54] : memref<1x32xf32, #tpu.memory_space<vmem>>, vector<1x32xf32>
      %104 = vector.broadcast %103 : vector<1x32xf32> to vector<8x32xf32>
      %105 = arith.mulf %102, %104 : vector<8x32xf32>
      %c0_55 = arith.constant 0 : index
      %c0_56 = arith.constant 0 : index
      %106 = vector.load %arg16[%c0_55, %c0_56] : memref<1x32xf32, #tpu.memory_space<vmem>>, vector<1x32xf32>
      %107 = vector.broadcast %106 : vector<1x32xf32> to vector<8x32xf32>
      %108 = arith.addf %105, %107 : vector<8x32xf32>
      %109 = arith.truncf %108 : vector<8x32xf32> to vector<8x32xbf16>
      %c0_57 = arith.constant 0 : index
      %c0_58 = arith.constant 0 : index
      %110 = vector.load %arg11[%c0_57, %c0_58] : memref<32x64xbf16, #tpu.memory_space<vmem>>, vector<32x64xbf16>
      %cst_59 = arith.constant dense<0.000000e+00> : vector<8x64xf32>
      %111 = tpu.matmul %109, %110, %cst_59 {dimension_numbers = #tpu.dot_dimension_numbers<[1], [0], [0], [1], [0, 0, 1, 1], [], []>} : vector<8x32xbf16>, vector<32x64xbf16>, vector<8x64xf32> -> vector<8x64xf32>
      %c0_60 = arith.constant 0 : index
      %c0_61 = arith.constant 0 : index
      %112 = vector.load %arg12[%c0_60, %c0_61] : memref<1x64xf32, #tpu.memory_space<vmem>>, vector<1x64xf32>
      %113 = vector.broadcast %112 : vector<1x64xf32> to vector<8x64xf32>
      %114 = arith.addf %111, %113 : vector<8x64xf32>
      %cst_62 = arith.constant 0.000000e+00 : f32
      %115 = vector.broadcast %cst_62 : f32 to vector<8x64xf32>
      %116 = arith.maximumf %114, %115 : vector<8x64xf32>
      %117 = arith.truncf %116 : vector<8x64xf32> to vector<8x64xbf16>
      %c0_63 = arith.constant 0 : index
      %c0_64 = arith.constant 0 : index
      %118 = vector.load %arg13[%c0_63, %c0_64] : memref<64x32xbf16, #tpu.memory_space<vmem>>, vector<64x32xbf16>
      %cst_65 = arith.constant dense<0.000000e+00> : vector<8x32xf32>
      %119 = tpu.matmul %117, %118, %cst_65 {dimension_numbers = #tpu.dot_dimension_numbers<[1], [0], [0], [1], [0, 0, 1, 1], [], []>} : vector<8x64xbf16>, vector<64x32xbf16>, vector<8x32xf32> -> vector<8x32xf32>
      %c0_66 = arith.constant 0 : index
      %c0_67 = arith.constant 0 : index
      %120 = vector.load %arg14[%c0_66, %c0_67] : memref<1x32xf32, #tpu.memory_space<vmem>>, vector<1x32xf32>
      %121 = vector.broadcast %120 : vector<1x32xf32> to vector<8x32xf32>
      %122 = arith.addf %119, %121 : vector<8x32xf32>
      %123 = arith.addf %108, %122 : vector<8x32xf32>
      %cst_68 = arith.constant dense<0.000000e+00> : vector<8xf32>
      %124 = vector.multi_reduction <add>, %123, %cst_68 [1] : vector<8x32xf32> to vector<8xf32>
      %125 = vector.shape_cast %124 : vector<8xf32> to vector<8x1xf32>
      %cst_69 = arith.constant 3.200000e+01 : f32
      %126 = vector.broadcast %cst_69 : f32 to vector<8x1xf32>
      %127 = arith.divf %125, %126 : vector<8x1xf32>
      %128 = vector.broadcast %127 : vector<8x1xf32> to vector<8x32xf32>
      %129 = arith.subf %123, %128 : vector<8x32xf32>
      %130 = arith.mulf %129, %129 : vector<8x32xf32>
      %cst_70 = arith.constant dense<0.000000e+00> : vector<8xf32>
      %131 = vector.multi_reduction <add>, %130, %cst_70 [1] : vector<8x32xf32> to vector<8xf32>
      %132 = vector.shape_cast %131 : vector<8xf32> to vector<8x1xf32>
      %cst_71 = arith.constant 3.200000e+01 : f32
      %133 = vector.broadcast %cst_71 : f32 to vector<8x1xf32>
      %134 = arith.divf %132, %133 : vector<8x1xf32>
      %135 = vector.broadcast %127 : vector<8x1xf32> to vector<8x32xf32>
      %136 = arith.subf %123, %135 : vector<8x32xf32>
      %cst_72 = arith.constant 9.99999974E-6 : f32
      %137 = vector.broadcast %cst_72 : f32 to vector<8x1xf32>
      %138 = arith.addf %134, %137 : vector<8x1xf32>
      %139 = math.rsqrt %138 : vector<8x1xf32>
      %140 = vector.broadcast %139 : vector<8x1xf32> to vector<8x32xf32>
      %141 = arith.mulf %136, %140 : vector<8x32xf32>
      %c0_73 = arith.constant 0 : index
      %c0_74 = arith.constant 0 : index
      %142 = vector.load %arg17[%c0_73, %c0_74] : memref<1x32xf32, #tpu.memory_space<vmem>>, vector<1x32xf32>
      %143 = vector.broadcast %142 : vector<1x32xf32> to vector<8x32xf32>
      %144 = arith.mulf %141, %143 : vector<8x32xf32>
      %c0_75 = arith.constant 0 : index
      %c0_76 = arith.constant 0 : index
      %145 = vector.load %arg18[%c0_75, %c0_76] : memref<1x32xf32, #tpu.memory_space<vmem>>, vector<1x32xf32>
      %146 = vector.broadcast %145 : vector<1x32xf32> to vector<8x32xf32>
      %147 = arith.addf %144, %146 : vector<8x32xf32>
      scf.yield %147 : vector<8x32xf32>
    }
    %cst_3 = arith.constant dense<0.000000e+00> : vector<8xf32>
    %12 = vector.multi_reduction <add>, %11, %cst_3 [1] : vector<8x32xf32> to vector<8xf32>
    %13 = vector.shape_cast %12 : vector<8xf32> to vector<8x1xf32>
    %cst_4 = arith.constant 3.200000e+01 : f32
    %14 = vector.broadcast %cst_4 : f32 to vector<8x1xf32>
    %15 = arith.divf %13, %14 : vector<8x1xf32>
    %16 = vector.broadcast %15 : vector<8x1xf32> to vector<8x32xf32>
    %17 = arith.subf %11, %16 : vector<8x32xf32>
    %18 = arith.mulf %17, %17 : vector<8x32xf32>
    %cst_5 = arith.constant dense<0.000000e+00> : vector<8xf32>
    %19 = vector.multi_reduction <add>, %18, %cst_5 [1] : vector<8x32xf32> to vector<8xf32>
    %20 = vector.shape_cast %19 : vector<8xf32> to vector<8x1xf32>
    %cst_6 = arith.constant 3.200000e+01 : f32
    %21 = vector.broadcast %cst_6 : f32 to vector<8x1xf32>
    %22 = arith.divf %20, %21 : vector<8x1xf32>
    %23 = vector.broadcast %15 : vector<8x1xf32> to vector<8x32xf32>
    %24 = arith.subf %11, %23 : vector<8x32xf32>
    %cst_7 = arith.constant 9.99999974E-6 : f32
    %25 = vector.broadcast %cst_7 : f32 to vector<8x1xf32>
    %26 = arith.addf %22, %25 : vector<8x1xf32>
    %27 = math.rsqrt %26 : vector<8x1xf32>
    %28 = vector.broadcast %27 : vector<8x1xf32> to vector<8x32xf32>
    %29 = arith.mulf %24, %28 : vector<8x32xf32>
    %c0_8 = arith.constant 0 : index
    %c0_9 = arith.constant 0 : index
    %30 = vector.load %arg19[%c0_8, %c0_9] : memref<1x32xf32, #tpu.memory_space<vmem>>, vector<1x32xf32>
    %31 = vector.broadcast %30 : vector<1x32xf32> to vector<8x32xf32>
    %32 = arith.mulf %29, %31 : vector<8x32xf32>
    %c0_10 = arith.constant 0 : index
    %c0_11 = arith.constant 0 : index
    %33 = vector.load %arg20[%c0_10, %c0_11] : memref<1x32xf32, #tpu.memory_space<vmem>>, vector<1x32xf32>
    %34 = vector.broadcast %33 : vector<1x32xf32> to vector<8x32xf32>
    %35 = arith.addf %32, %34 : vector<8x32xf32>
    %c0_12 = arith.constant 0 : index
    %c0_13 = arith.constant 0 : index
    %c0_14 = arith.constant 0 : index
    %36 = vector.load %arg21[%c0_12, %c0_13, %c0_14] : memref<1x8x32xf32, #tpu.memory_space<vmem>>, vector<1x8x32xf32>
    %37 = vector.shape_cast %36 : vector<1x8x32xf32> to vector<8x32xf32>
    %38 = vector.shape_cast %35 : vector<8x32xf32> to vector<1x8x32xf32>
    tpu.vector_store %arg21[%c0_12, %c0_13, %c0_14], %38 {strides = array<i32>} : memref<1x8x32xf32, #tpu.memory_space<vmem>>, vector<1x8x32xf32>,
    return
  }
  func.func @transform_0(%arg0: i32, %arg1: memref<2xi32, #tpu.memory_space<smem>>) -> (i32, i32, i32) {
    %c0_i32 = arith.constant 0 : i32
    %c0_i32_0 = arith.constant 0 : i32
    %c0_i32_1 = arith.constant 0 : i32
    return %arg0, %c0_i32, %c0_i32_0 : i32, i32, i32
  }
  func.func @transform_1(%arg0: i32, %arg1: memref<2xi32, #tpu.memory_space<smem>>) -> (i32, i32, i32) {
    %c0_i32 = arith.constant 0 : i32
    %c0_i32_0 = arith.constant 0 : i32
    %c0_i32_1 = arith.constant 0 : i32
    %c0_i32_2 = arith.constant 0 : i32
    return %c0_i32, %c0_i32_0, %c0_i32_1 : i32, i32, i32
  }
  func.func @transform_2(%arg0: i32, %arg1: memref<2xi32, #tpu.memory_space<smem>>) -> (i32, i32, i32) {
    %c0_i32 = arith.constant 0 : i32
    %c0_i32_0 = arith.constant 0 : i32
    %c0_i32_1 = arith.constant 0 : i32
    %c0_i32_2 = arith.constant 0 : i32
    return %c0_i32, %c0_i32_0, %c0_i32_1 : i32, i32, i32
  }
  func.func @transform_3(%arg0: i32, %arg1: memref<2xi32, #tpu.memory_space<smem>>) -> (i32, i32, i32) {
    %c0_i32 = arith.constant 0 : i32
    %c0_i32_0 = arith.constant 0 : i32
    %c0_i32_1 = arith.constant 0 : i32
    %c0_i32_2 = arith.constant 0 : i32
    return %c0_i32, %c0_i32_0, %c0_i32_1 : i32, i32, i32
  }
  func.func @transform_4(%arg0: i32, %arg1: memref<2xi32, #tpu.memory_space<smem>>) -> (i32, i32, i32) {
    %c0_i32 = arith.constant 0 : i32
    %c0_i32_0 = arith.constant 0 : i32
    %c0_i32_1 = arith.constant 0 : i32
    %c0_i32_2 = arith.constant 0 : i32
    return %c0_i32, %c0_i32_0, %c0_i32_1 : i32, i32, i32
  }
  func.func @transform_5(%arg0: i32, %arg1: memref<2xi32, #tpu.memory_space<smem>>) -> (i32, i32, i32) {
    %c0_i32 = arith.constant 0 : i32
    %c0_i32_0 = arith.constant 0 : i32
    %c0_i32_1 = arith.constant 0 : i32
    %c0_i32_2 = arith.constant 0 : i32
    return %c0_i32, %c0_i32_0, %c0_i32_1 : i32, i32, i32
  }
  func.func @transform_6(%arg0: i32, %arg1: memref<2xi32, #tpu.memory_space<smem>>) -> (i32, i32, i32) {
    %c0_i32 = arith.constant 0 : i32
    %c0_i32_0 = arith.constant 0 : i32
    %c0_i32_1 = arith.constant 0 : i32
    %c0_i32_2 = arith.constant 0 : i32
    return %c0_i32, %c0_i32_0, %c0_i32_1 : i32, i32, i32
  }
  func.func @transform_7(%arg0: i32, %arg1: memref<2xi32, #tpu.memory_space<smem>>) -> (i32, i32, i32) {
    %c0_i32 = arith.constant 0 : i32
    %c0_i32_0 = arith.constant 0 : i32
    %c0_i32_1 = arith.constant 0 : i32
    %c0_i32_2 = arith.constant 0 : i32
    return %c0_i32, %c0_i32_0, %c0_i32_1 : i32, i32, i32
  }
  func.func @transform_8(%arg0: i32, %arg1: memref<2xi32, #tpu.memory_space<smem>>) -> (i32, i32) {
    %c0_i32 = arith.constant 0 : i32
    %c0_i32_0 = arith.constant 0 : i32
    %c0_i32_1 = arith.constant 0 : i32
    return %c0_i32, %c0_i32_0 : i32, i32
  }
  func.func @transform_9(%arg0: i32, %arg1: memref<2xi32, #tpu.memory_space<smem>>) -> (i32, i32) {
    %c0_i32 = arith.constant 0 : i32
    %c0_i32_0 = arith.constant 0 : i32
    %c0_i32_1 = arith.constant 0 : i32
    return %c0_i32, %c0_i32_0 : i32, i32
  }
  func.func @transform_10(%arg0: i32, %arg1: memref<2xi32, #tpu.memory_space<smem>>) -> (i32, i32) {
    %c0_i32 = arith.constant 0 : i32
    %c0_i32_0 = arith.constant 0 : i32
    %c0_i32_1 = arith.constant 0 : i32
    return %c0_i32, %c0_i32_0 : i32, i32
  }
  func.func @transform_11(%arg0: i32, %arg1: memref<2xi32, #tpu.memory_space<smem>>) -> (i32, i32) {
    %c0_i32 = arith.constant 0 : i32
    %c0_i32_0 = arith.constant 0 : i32
    %c0_i32_1 = arith.constant 0 : i32
    return %c0_i32, %c0_i32_0 : i32, i32
  }
  func.func @transform_12(%arg0: i32, %arg1: memref<2xi32, #tpu.memory_space<smem>>) -> (i32, i32) {
    %c0_i32 = arith.constant 0 : i32
    %c0_i32_0 = arith.constant 0 : i32
    %c0_i32_1 = arith.constant 0 : i32
    return %c0_i32, %c0_i32_0 : i32, i32
  }
  func.func @transform_13(%arg0: i32, %arg1: memref<2xi32, #tpu.memory_space<smem>>) -> (i32, i32) {
    %c0_i32 = arith.constant 0 : i32
    %c0_i32_0 = arith.constant 0 : i32
    %c0_i32_1 = arith.constant 0 : i32
    return %c0_i32, %c0_i32_0 : i32, i32
  }
  func.func @transform_14(%arg0: i32, %arg1: memref<2xi32, #tpu.memory_space<smem>>) -> (i32, i32) {
    %c0_i32 = arith.constant 0 : i32
    %c0_i32_0 = arith.constant 0 : i32
    %c0_i32_1 = arith.constant 0 : i32
    return %c0_i32, %c0_i32_0 : i32, i32
  }
  func.func @transform_15(%arg0: i32, %arg1: memref<2xi32, #tpu.memory_space<smem>>) -> (i32, i32) {
    %c0_i32 = arith.constant 0 : i32
    %c0_i32_0 = arith.constant 0 : i32
    %c0_i32_1 = arith.constant 0 : i32
    return %c0_i32, %c0_i32_0 : i32, i32
  }
  func.func @transform_16(%arg0: i32, %arg1: memref<2xi32, #tpu.memory_space<smem>>) -> (i32, i32) {
    %c0_i32 = arith.constant 0 : i32
    %c0_i32_0 = arith.constant 0 : i32
    %c0_i32_1 = arith.constant 0 : i32
    return %c0_i32, %c0_i32_0 : i32, i32
  }
  func.func @transform_17(%arg0: i32, %arg1: memref<2xi32, #tpu.memory_space<smem>>) -> (i32, i32) {
    %c0_i32 = arith.constant 0 : i32
    %c0_i32_0 = arith.constant 0 : i32
    %c0_i32_1 = arith.constant 0 : i32
    return %c0_i32, %c0_i32_0 : i32, i32
  }
  func.func @transform_18(%arg0: i32, %arg1: memref<2xi32, #tpu.memory_space<smem>>) -> (i32, i32) {
    %c0_i32 = arith.constant 0 : i32
    %c0_i32_0 = arith.constant 0 : i32
    %c0_i32_1 = arith.constant 0 : i32
    return %c0_i32, %c0_i32_0 : i32, i32
  }
  func.func @transform_19(%arg0: i32, %arg1: memref<2xi32, #tpu.memory_space<smem>>) -> (i32, i32, i32) {
    %c0_i32 = arith.constant 0 : i32
    %c0_i32_0 = arith.constant 0 : i32
    %c0_i32_1 = arith.constant 0 : i32
    return %arg0, %c0_i32, %c0_i32_0 : i32, i32, i32
  }
}

module attributes {stable_mosaic.version = 11 : i64} {
  func.func @_encoder_stack_kernel(%arg0: i32, %arg1: memref<2xi32, #tpu.memory_space<smem>>, %arg2: memref<1x8x32xf32, #tpu.memory_space<vmem>>, %arg3: memref<4x8x32xbf16, #tpu.memory_space<vmem>>, %arg4: memref<4x8x32xbf16, #tpu.memory_space<vmem>>, %arg5: memref<4x8x32xbf16, #tpu.memory_space<vmem>>, %arg6: memref<4x1x8xf32, #tpu.memory_space<vmem>>, %arg7: memref<4x1x8xf32, #tpu.memory_space<vmem>>, %arg8: memref<4x1x8xf32, #tpu.memory_space<vmem>>, %arg9: memref<4x32x8xbf16, #tpu.memory_space<vmem>>, %arg10: memref<1x32xf32, #tpu.memory_space<vmem>>, %arg11: memref<32x64xbf16, #tpu.memory_space<vmem>>, %arg12: memref<1x64xf32, #tpu.memory_space<vmem>>, %arg13: memref<64x32xbf16, #tpu.memory_space<vmem>>, %arg14: memref<1x32xf32, #tpu.memory_space<vmem>>, %arg15: memref<1x32xf32, #tpu.memory_space<vmem>>, %arg16: memref<1x32xf32, #tpu.memory_space<vmem>>, %arg17: memref<1x32xf32, #tpu.memory_space<vmem>>, %arg18: memref<1x32xf32, #tpu.memory_space<vmem>>, %arg19: memref<1x32xf32, #tpu.memory_space<vmem>>, %arg20: memref<1x32xf32, #tpu.memory_space<vmem>>, %arg21: memref<1x8x32xf32, #tpu.memory_space<vmem>>) attributes {dimension_semantics = [#tpu.dimension_semantics<parallel>], iteration_bounds = array<i64: 2>, scalar_prefetch = 1 : i64, scratch_operands = 0 : i64, tpu.core_type = #tpu.core_type<tc>, window_params = [{transform_indices = @transform_0, window_bounds = array<i64: 1, 8, 32>}, {pipeline_mode = #tpu.pipeline_mode<synchronous>, transform_indices = @transform_1, window_bounds = array<i64: 4, 8, 32>}, {pipeline_mode = #tpu.pipeline_mode<synchronous>, transform_indices = @transform_2, window_bounds = array<i64: 4, 8, 32>}, {pipeline_mode = #tpu.pipeline_mode<synchronous>, transform_indices = @transform_3, window_bounds = array<i64: 4, 8, 32>}, {pipeline_mode = #tpu.pipeline_mode<synchronous>, transform_indices = @transform_4, window_bounds = array<i64: 4, 1, 8>}, {pipeline_mode = #tpu.pipeline_mode<synchronous>, transform_indices = @transform_5, window_bounds = array<i64: 4, 1, 8>}, {pipeline_mode = #tpu.pipeline_mode<synchronous>, transform_indices = @transform_6, window_bounds = array<i64: 4, 1, 8>}, {pipeline_mode = #tpu.pipeline_mode<synchronous>, transform_indices = @transform_7, window_bounds = array<i64: 4, 32, 8>}, {pipeline_mode = #tpu.pipeline_mode<synchronous>, transform_indices = @transform_8, window_bounds = array<i64: 1, 32>}, {pipeline_mode = #tpu.pipeline_mode<synchronous>, transform_indices = @transform_9, window_bounds = array<i64: 32, 64>}, {pipeline_mode = #tpu.pipeline_mode<synchronous>, transform_indices = @transform_10, window_bounds = array<i64: 1, 64>}, {pipeline_mode = #tpu.pipeline_mode<synchronous>, transform_indices = @transform_11, window_bounds = array<i64: 64, 32>}, {pipeline_mode = #tpu.pipeline_mode<synchronous>, transform_indices = @transform_12, window_bounds = array<i64: 1, 32>}, {pipeline_mode = #tpu.pipeline_mode<synchronous>, transform_indices = @transform_13, window_bounds = array<i64: 1, 32>}, {pipeline_mode = #tpu.pipeline_mode<synchronous>, transform_indices = @transform_14, window_bounds = array<i64: 1, 32>}, {pipeline_mode = #tpu.pipeline_mode<synchronous>, transform_indices = @transform_15, window_bounds = array<i64: 1, 32>}, {pipeline_mode = #tpu.pipeline_mode<synchronous>, transform_indices = @transform_16, window_bounds = array<i64: 1, 32>}, {pipeline_mode = #tpu.pipeline_mode<synchronous>, transform_indices = @transform_17, window_bounds = array<i64: 1, 32>}, {pipeline_mode = #tpu.pipeline_mode<synchronous>, transform_indices = @transform_18, window_bounds = array<i64: 1, 32>}, {transform_indices = @transform_19, window_bounds = array<i64: 1, 8, 32>}]} {
    %0 = arith.index_cast %arg0 : i32 to index
    %1 = memref.load %arg1[%0] : memref<2xi32, #tpu.memory_space<smem>>
    %2 = tpu.iota {dimensions = array<i32: 1>} : vector<8x8xi32>
    %3 = vector.broadcast %1 : i32 to vector<8x8xi32>
    %4 = arith.cmpi slt, %2, %3 : vector<8x8xi32>
    %cst = arith.constant 0.000000e+00 : f32
    %cst_0 = arith.constant -1.000000e+09 : f32
    %5 = vector.broadcast %cst : f32 to vector<8x8xf32>
    %6 = vector.broadcast %cst_0 : f32 to vector<8x8xf32>
    %7 = arith.select %4, %5, %6 : vector<8x8xi1>, vector<8x8xf32>
    %c0 = arith.constant 0 : index
    %c0_1 = arith.constant 0 : index
    %c0_2 = arith.constant 0 : index
    %8 = vector.load %arg2[%c0, %c0_1, %c0_2] : memref<1x8x32xf32, #tpu.memory_space<vmem>>, vector<1x8x32xf32>
    %9 = vector.shape_cast %8 : vector<1x8x32xf32> to vector<8x32xf32>
    %c0_i32 = arith.constant 0 : i32
    %c2_i32 = arith.constant 2 : i32
    %10 = arith.addi %c0_i32, %c2_i32 : i32
    %c1_i32 = arith.constant 1 : i32
    %11 = scf.for %arg22 = %c0_i32 to %10 step %c1_i32 iter_args(%arg23 = %9) -> (vector<8x32xf32>)  : i32 {
      %39 = arith.truncf %arg23 : vector<8x32xf32> to vector<8x32xbf16>
      %40 = vector.shape_cast %39 : vector<8x32xbf16> to vector<1x8x32xbf16>
      %41 = vector.broadcast %40 : vector<1x8x32xbf16> to vector<4x8x32xbf16>
      %c0_15 = arith.constant 0 : index
      %c0_16 = arith.constant 0 : index
      %c0_17 = arith.constant 0 : index
      %42 = vector.load %arg3[%c0_15, %c0_16, %c0_17] : memref<4x8x32xbf16, #tpu.memory_space<vmem>>, vector<4x8x32xbf16>
      "tpu.trace_start"() <{level = 10 : i32, message = "hsd,hed->hse"}> : () -> ()
      %cst_18 = arith.constant dense<0.000000e+00> : vector<4x8x8xf32>
      %43 = tpu.matmul %41, %42, %cst_18 {dimension_numbers = #tpu.dot_dimension_numbers<[2], [2], [1], [1], [0, 0, 0, 1, 1, 1], [0], [0]>} : vector<4x8x32xbf16>, vector<4x8x32xbf16>, vector<4x8x8xf32> -> vector<4x8x8xf32>
      "tpu.trace_stop"() : () -> ()
      %c0_19 = arith.constant 0 : index
      %c0_20 = arith.constant 0 : index
      %c0_21 = arith.constant 0 : index
      %44 = vector.load %arg6[%c0_19, %c0_20, %c0_21] : memref<4x1x8xf32, #tpu.memory_space<vmem>>, vector<4x1x8xf32>
      %45 = vector.broadcast %44 : vector<4x1x8xf32> to vector<4x8x8xf32>
      %46 = arith.addf %43, %45 : vector<4x8x8xf32>
      %c0_22 = arith.constant 0 : index
      %c0_23 = arith.constant 0 : index
      %c0_24 = arith.constant 0 : index
      %47 = vector.load %arg4[%c0_22, %c0_23, %c0_24] : memref<4x8x32xbf16, #tpu.memory_space<vmem>>, vector<4x8x32xbf16>
      "tpu.trace_start"() <{level = 10 : i32, message = "hsd,hed->hse"}> : () -> ()
      %cst_25 = arith.constant dense<0.000000e+00> : vector<4x8x8xf32>
      %48 = tpu.matmul %41, %47, %cst_25 {dimension_numbers = #tpu.dot_dimension_numbers<[2], [2], [1], [1], [0, 0, 0, 1, 1, 1], [0], [0]>} : vector<4x8x32xbf16>, vector<4x8x32xbf16>, vector<4x8x8xf32> -> vector<4x8x8xf32>
      "tpu.trace_stop"() : () -> ()
      %c0_26 = arith.constant 0 : index
      %c0_27 = arith.constant 0 : index
      %c0_28 = arith.constant 0 : index
      %49 = vector.load %arg7[%c0_26, %c0_27, %c0_28] : memref<4x1x8xf32, #tpu.memory_space<vmem>>, vector<4x1x8xf32>
      %50 = vector.broadcast %49 : vector<4x1x8xf32> to vector<4x8x8xf32>
      %51 = arith.addf %48, %50 : vector<4x8x8xf32>
      %c0_29 = arith.constant 0 : index
      %c0_30 = arith.constant 0 : index
      %c0_31 = arith.constant 0 : index
      %52 = vector.load %arg5[%c0_29, %c0_30, %c0_31] : memref<4x8x32xbf16, #tpu.memory_space<vmem>>, vector<4x8x32xbf16>
      "tpu.trace_start"() <{level = 10 : i32, message = "hsd,hed->hse"}> : () -> ()
      %cst_32 = arith.constant dense<0.000000e+00> : vector<4x8x8xf32>
      %53 = tpu.matmul %41, %52, %cst_32 {dimension_numbers = #tpu.dot_dimension_numbers<[2], [2], [1], [1], [0, 0, 0, 1, 1, 1], [0], [0]>} : vector<4x8x32xbf16>, vector<4x8x32xbf16>, vector<4x8x8xf32> -> vector<4x8x8xf32>
      "tpu.trace_stop"() : () -> ()
      %c0_33 = arith.constant 0 : index
      %c0_34 = arith.constant 0 : index
      %c0_35 = arith.constant 0 : index
      %54 = vector.load %arg8[%c0_33, %c0_34, %c0_35] : memref<4x1x8xf32, #tpu.memory_space<vmem>>, vector<4x1x8xf32>
      %55 = vector.broadcast %54 : vector<4x1x8xf32> to vector<4x8x8xf32>
      %56 = arith.addf %53, %55 : vector<4x8x8xf32>
      %57 = arith.truncf %46 : vector<4x8x8xf32> to vector<4x8x8xbf16>
      %58 = arith.truncf %51 : vector<4x8x8xf32> to vector<4x8x8xbf16>
      "tpu.trace_start"() <{level = 10 : i32, message = "hqe,hke->hqk"}> : () -> ()
      %cst_36 = arith.constant dense<0.000000e+00> : vector<4x8x8xf32>
      %59 = tpu.matmul %57, %58, %cst_36 {dimension_numbers = #tpu.dot_dimension_numbers<[2], [2], [1], [1], [0, 0, 0, 1, 1, 1], [0], [0]>} : vector<4x8x8xbf16>, vector<4x8x8xbf16>, vector<4x8x8xf32> -> vector<4x8x8xf32>
      "tpu.trace_stop"() : () -> ()
      %cst_37 = arith.constant 0.353553385 : f32
      %60 = vector.broadcast %cst_37 : f32 to vector<4x8x8xf32>
      %61 = arith.mulf %59, %60 : vector<4x8x8xf32>
      %62 = vector.shape_cast %7 : vector<8x8xf32> to vector<1x8x8xf32>
      %63 = vector.broadcast %62 : vector<1x8x8xf32> to vector<4x8x8xf32>
      %64 = arith.addf %61, %63 : vector<4x8x8xf32>
      %cst_38 = arith.constant dense<0xFF800000> : vector<4x8xf32>
      %65 = vector.multi_reduction <maximumf>, %64, %cst_38 [2] : vector<4x8x8xf32> to vector<4x8xf32>
      %66 = vector.shape_cast %65 : vector<4x8xf32> to vector<4x8x1xf32>
      %67 = vector.broadcast %66 : vector<4x8x1xf32> to vector<4x8x8xf32>
      %68 = arith.subf %64, %67 : vector<4x8x8xf32>
      %69 = math.exp %68 : vector<4x8x8xf32>
      %cst_39 = arith.constant dense<0.000000e+00> : vector<4x8xf32>
      %70 = vector.multi_reduction <add>, %69, %cst_39 [2] : vector<4x8x8xf32> to vector<4x8xf32>
      %71 = vector.shape_cast %70 : vector<4x8xf32> to vector<4x8x1xf32>
      %72 = vector.broadcast %71 : vector<4x8x1xf32> to vector<4x8x8xf32>
      %73 = arith.divf %69, %72 : vector<4x8x8xf32>
      %74 = arith.truncf %73 : vector<4x8x8xf32> to vector<4x8x8xbf16>
      %75 = arith.truncf %56 : vector<4x8x8xf32> to vector<4x8x8xbf16>
      "tpu.trace_start"() <{level = 10 : i32, message = "hqk,hke->hqe"}> : () -> ()
      %cst_40 = arith.constant dense<0.000000e+00> : vector<4x8x8xf32>
      %76 = tpu.matmul %74, %75, %cst_40 {dimension_numbers = #tpu.dot_dimension_numbers<[2], [1], [1], [2], [0, 0, 0, 1, 1, 2], [0], [0]>} : vector<4x8x8xbf16>, vector<4x8x8xbf16>, vector<4x8x8xf32> -> vector<4x8x8xf32>
      "tpu.trace_stop"() : () -> ()
      %77 = arith.truncf %76 : vector<4x8x8xf32> to vector<4x8x8xbf16>
      %c0_41 = arith.constant 0 : index
      %c0_42 = arith.constant 0 : index
      %c0_43 = arith.constant 0 : index
      %78 = vector.load %arg9[%c0_41, %c0_42, %c0_43] : memref<4x32x8xbf16, #tpu.memory_space<vmem>>, vector<4x32x8xbf16>
      "tpu.trace_start"() <{level = 10 : i32, message = "hse,hde->hsd"}> : () -> ()
      %cst_44 = arith.constant dense<0.000000e+00> : vector<4x8x32xf32>
      %79 = tpu.matmul %77, %78, %cst_44 {dimension_numbers = #tpu.dot_dimension_numbers<[2], [2], [1], [1], [0, 0, 0, 1, 1, 1], [0], [0]>} : vector<4x8x8xbf16>, vector<4x32x8xbf16>, vector<4x8x32xf32> -> vector<4x8x32xf32>
      "tpu.trace_stop"() : () -> ()
      %cst_45 = arith.constant dense<0.000000e+00> : vector<8x32xf32>
      %80 = vector.multi_reduction <add>, %79, %cst_45 [0] : vector<4x8x32xf32> to vector<8x32xf32>
      %c0_46 = arith.constant 0 : index
      %c0_47 = arith.constant 0 : index
      %81 = vector.load %arg10[%c0_46, %c0_47] : memref<1x32xf32, #tpu.memory_space<vmem>>, vector<1x32xf32>
      %82 = vector.broadcast %81 : vector<1x32xf32> to vector<8x32xf32>
      %83 = arith.addf %80, %82 : vector<8x32xf32>
      %84 = arith.addf %arg23, %83 : vector<8x32xf32>
      %cst_48 = arith.constant dense<0.000000e+00> : vector<8xf32>
      %85 = vector.multi_reduction <add>, %84, %cst_48 [1] : vector<8x32xf32> to vector<8xf32>
      %86 = vector.shape_cast %85 : vector<8xf32> to vector<8x1xf32>
      %cst_49 = arith.constant 3.200000e+01 : f32
      %87 = vector.broadcast %cst_49 : f32 to vector<8x1xf32>
      %88 = arith.divf %86, %87 : vector<8x1xf32>
      %89 = vector.broadcast %88 : vector<8x1xf32> to vector<8x32xf32>
      %90 = arith.subf %84, %89 : vector<8x32xf32>
      %91 = arith.mulf %90, %90 : vector<8x32xf32>
      %cst_50 = arith.constant dense<0.000000e+00> : vector<8xf32>
      %92 = vector.multi_reduction <add>, %91, %cst_50 [1] : vector<8x32xf32> to vector<8xf32>
      %93 = vector.shape_cast %92 : vector<8xf32> to vector<8x1xf32>
      %cst_51 = arith.constant 3.200000e+01 : f32
      %94 = vector.broadcast %cst_51 : f32 to vector<8x1xf32>
      %95 = arith.divf %93, %94 : vector<8x1xf32>
      %96 = vector.broadcast %88 : vector<8x1xf32> to vector<8x32xf32>
      %97 = arith.subf %84, %96 : vector<8x32xf32>
      %cst_52 = arith.constant 9.99999974E-6 : f32
      %98 = vector.broadcast %cst_52 : f32 to vector<8x1xf32>
      %99 = arith.addf %95, %98 : vector<8x1xf32>
      %100 = math.rsqrt %99 : vector<8x1xf32>
      %101 = vector.broadcast %100 : vector<8x1xf32> to vector<8x32xf32>
      %102 = arith.mulf %97, %101 : vector<8x32xf32>
      %c0_53 = arith.constant 0 : index
      %c0_54 = arith.constant 0 : index
      %103 = vector.load %arg15[%c0_53, %c0_54] : memref<1x32xf32, #tpu.memory_space<vmem>>, vector<1x32xf32>
      %104 = vector.broadcast %103 : vector<1x32xf32> to vector<8x32xf32>
      %105 = arith.mulf %102, %104 : vector<8x32xf32>
      %c0_55 = arith.constant 0 : index
      %c0_56 = arith.constant 0 : index
      %106 = vector.load %arg16[%c0_55, %c0_56] : memref<1x32xf32, #tpu.memory_space<vmem>>, vector<1x32xf32>
      %107 = vector.broadcast %106 : vector<1x32xf32> to vector<8x32xf32>
      %108 = arith.addf %105, %107 : vector<8x32xf32>
      %109 = arith.truncf %108 : vector<8x32xf32> to vector<8x32xbf16>
      %c0_57 = arith.constant 0 : index
      %c0_58 = arith.constant 0 : index
      %110 = vector.load %arg11[%c0_57, %c0_58] : memref<32x64xbf16, #tpu.memory_space<vmem>>, vector<32x64xbf16>
      %cst_59 = arith.constant dense<0.000000e+00> : vector<8x64xf32>
      %111 = tpu.matmul %109, %110, %cst_59 {dimension_numbers = #tpu.dot_dimension_numbers<[1], [0], [0], [1], [0, 0, 1, 1], [], []>} : vector<8x32xbf16>, vector<32x64xbf16>, vector<8x64xf32> -> vector<8x64xf32>
      %c0_60 = arith.constant 0 : index
      %c0_61 = arith.constant 0 : index
      %112 = vector.load %arg12[%c0_60, %c0_61] : memref<1x64xf32, #tpu.memory_space<vmem>>, vector<1x64xf32>
      %113 = vector.broadcast %112 : vector<1x64xf32> to vector<8x64xf32>
      %114 = arith.addf %111, %113 : vector<8x64xf32>
      %cst_62 = arith.constant 0.000000e+00 : f32
      %115 = vector.broadcast %cst_62 : f32 to vector<8x64xf32>
      %116 = arith.maximumf %114, %115 : vector<8x64xf32>
      %117 = arith.truncf %116 : vector<8x64xf32> to vector<8x64xbf16>
      %c0_63 = arith.constant 0 : index
      %c0_64 = arith.constant 0 : index
      %118 = vector.load %arg13[%c0_63, %c0_64] : memref<64x32xbf16, #tpu.memory_space<vmem>>, vector<64x32xbf16>
      %cst_65 = arith.constant dense<0.000000e+00> : vector<8x32xf32>
      %119 = tpu.matmul %117, %118, %cst_65 {dimension_numbers = #tpu.dot_dimension_numbers<[1], [0], [0], [1], [0, 0, 1, 1], [], []>} : vector<8x64xbf16>, vector<64x32xbf16>, vector<8x32xf32> -> vector<8x32xf32>
      %c0_66 = arith.constant 0 : index
      %c0_67 = arith.constant 0 : index
      %120 = vector.load %arg14[%c0_66, %c0_67] : memref<1x32xf32, #tpu.memory_space<vmem>>, vector<1x32xf32>
      %121 = vector.broadcast %120 : vector<1x32xf32> to vector<8x32xf32>
      %122 = arith.addf %119, %121 : vector<8x32xf32>
      %123 = arith.addf %108, %122 : vector<8x32xf32>
      %cst_68 = arith.constant dense<0.000000e+00> : vector<8xf32>
      %124 = vector.multi_reduction <add>, %123, %cst_68 [1] : vector<8x32xf32> to vector<8xf32>
      %125 = vector.shape_cast %124 : vector<8xf32> to vector<8x1xf32>
      %cst_69 = arith.constant 3.200000e+01 : f32
      %126 = vector.broadcast %cst_69 : f32 to vector<8x1xf32>
      %127 = arith.divf %125, %126 : vector<8x1xf32>
      %128 = vector.broadcast %127 : vector<8x1xf32> to vector<8x32xf32>
      %129 = arith.subf %123, %128 : vector<8x32xf32>
      %130 = arith.mulf %129, %129 : vector<8x32xf32>
      %cst_70 = arith.constant dense<0.000000e+00> : vector<8xf32>
      %131 = vector.multi_reduction <add>, %130, %cst_70 [1] : vector<8x32xf32> to vector<8xf32>
      %132 = vector.shape_cast %131 : vector<8xf32> to vector<8x1xf32>
      %cst_71 = arith.constant 3.200000e+01 : f32
      %133 = vector.broadcast %cst_71 : f32 to vector<8x1xf32>
      %134 = arith.divf %132, %133 : vector<8x1xf32>
      %135 = vector.broadcast %127 : vector<8x1xf32> to vector<8x32xf32>
      %136 = arith.subf %123, %135 : vector<8x32xf32>
      %cst_72 = arith.constant 9.99999974E-6 : f32
      %137 = vector.broadcast %cst_72 : f32 to vector<8x1xf32>
      %138 = arith.addf %134, %137 : vector<8x1xf32>
      %139 = math.rsqrt %138 : vector<8x1xf32>
      %140 = vector.broadcast %139 : vector<8x1xf32> to vector<8x32xf32>
      %141 = arith.mulf %136, %140 : vector<8x32xf32>
      %c0_73 = arith.constant 0 : index
      %c0_74 = arith.constant 0 : index
      %142 = vector.load %arg17[%c0_73, %c0_74] : memref<1x32xf32, #tpu.memory_space<vmem>>, vector<1x32xf32>
      %143 = vector.broadcast %142 : vector<1x32xf32> to vector<8x32xf32>
      %144 = arith.mulf %141, %143 : vector<8x32xf32>
      %c0_75 = arith.constant 0 : index
      %c0_76 = arith.constant 0 : index
      %145 = vector.load %arg18[%c0_75, %c0_76] : memref<1x32xf32, #tpu.memory_space<vmem>>, vector<1x32xf32>
      %146 = vector.broadcast %145 : vector<1x32xf32> to vector<8x32xf32>
      %147 = arith.addf %144, %146 : vector<8x32xf32>
      scf.yield %147 : vector<8x32xf32>
    }
    %cst_3 = arith.constant dense<0.000000e+00> : vector<8xf32>
    %12 = vector.multi_reduction <add>, %11, %cst_3 [1] : vector<8x32xf32> to vector<8xf32>
    %13 = vector.shape_cast %12 : vector<8xf32> to vector<8x1xf32>
    %cst_4 = arith.constant 3.200000e+01 : f32
    %14 = vector.broadcast %cst_4 : f32 to vector<8x1xf32>
    %15 = arith.divf %13, %14 : vector<8x1xf32>
    %16 = vector.broadcast %15 : vector<8x1xf32> to vector<8x32xf32>
    %17 = arith.subf %11, %16 : vector<8x32xf32>
    %18 = arith.mulf %17, %17 : vector<8x32xf32>
    %cst_5 = arith.constant dense<0.000000e+00> : vector<8xf32>
    %19 = vector.multi_reduction <add>, %18, %cst_5 [1] : vector<8x32xf32> to vector<8xf32>
    %20 = vector.shape_cast %19 : vector<8xf32> to vector<8x1xf32>
    %cst_6 = arith.constant 3.200000e+01 : f32
    %21 = vector.broadcast %cst_6 : f32 to vector<8x1xf32>
    %22 = arith.divf %20, %21 : vector<8x1xf32>
    %23 = vector.broadcast %15 : vector<8x1xf32> to vector<8x32xf32>
    %24 = arith.subf %11, %23 : vector<8x32xf32>
    %cst_7 = arith.constant 9.99999974E-6 : f32
    %25 = vector.broadcast %cst_7 : f32 to vector<8x1xf32>
    %26 = arith.addf %22, %25 : vector<8x1xf32>
    %27 = math.rsqrt %26 : vector<8x1xf32>
    %28 = vector.broadcast %27 : vector<8x1xf32> to vector<8x32xf32>
    %29 = arith.mulf %24, %28 : vector<8x32xf32>
    %c0_8 = arith.constant 0 : index
    %c0_9 = arith.constant 0 : index
    %30 = vector.load %arg19[%c0_8, %c0_9] : memref<1x32xf32, #tpu.memory_space<vmem>>, vector<1x32xf32>
    %31 = vector.broadcast %30 : vector<1x32xf32> to vector<8x32xf32>
    %32 = arith.mulf %29, %31 : vector<8x32xf32>
    %c0_10 = arith.constant 0 : index
    %c0_11 = arith.constant 0 : index
    %33 = vector.load %arg20[%c0_10, %c0_11] : memref<1x32xf32, #tpu.memory_space<vmem>>, vector<1x32xf32>
    %34 = vector.broadcast %33 : vector<1x32xf32> to vector<8x32xf32>
    %35 = arith.addf %32, %34 : vector<8x32xf32>
    %c0_12 = arith.constant 0 : index
    %c0_13 = arith.constant 0 : index
    %c0_14 = arith.constant 0 : index
    %36 = vector.load %arg21[%c0_12, %c0_13, %c0_14] : memref<1x8x32xf32, #tpu.memory_space<vmem>>, vector<1x8x32xf32>
    %37 = vector.shape_cast %36 : vector<1x8x32xf32> to vector<8x32xf32>
    %38 = vector.shape_cast %35 : vector<8x32xf32> to vector<1x8x32xf32>
    tpu.vector_store %arg21[%c0_12, %c0_13, %c0_14], %38 {strides = array<i32>} : memref<1x8x32xf32, #tpu.memory_space<vmem>>, vector<1x8x32xf32>,
    return
  }
  func.func @transform_0(%arg0: i32, %arg1: memref<2xi32, #tpu.memory_space<smem>>) -> (i32, i32, i32) {
    %c0_i32 = arith.constant 0 : i32
    %c0_i32_0 = arith.constant 0 : i32
    %c0_i32_1 = arith.constant 0 : i32
    return %arg0, %c0_i32, %c0_i32_0 : i32, i32, i32
  }
  func.func @transform_1(%arg0: i32, %arg1: memref<2xi32, #tpu.memory_space<smem>>) -> (i32, i32, i32) {
    %c0_i32 = arith.constant 0 : i32
    %c0_i32_0 = arith.constant 0 : i32
    %c0_i32_1 = arith.constant 0 : i32
    %c0_i32_2 = arith.constant 0 : i32
    return %c0_i32, %c0_i32_0, %c0_i32_1 : i32, i32, i32
  }
  func.func @transform_2(%arg0: i32, %arg1: memref<2xi32, #tpu.memory_space<smem>>) -> (i32, i32, i32) {
    %c0_i32 = arith.constant 0 : i32
    %c0_i32_0 = arith.constant 0 : i32
    %c0_i32_1 = arith.constant 0 : i32
    %c0_i32_2 = arith.constant 0 : i32
    return %c0_i32, %c0_i32_0, %c0_i32_1 : i32, i32, i32
  }
  func.func @transform_3(%arg0: i32, %arg1: memref<2xi32, #tpu.memory_space<smem>>) -> (i32, i32, i32) {
    %c0_i32 = arith.constant 0 : i32
    %c0_i32_0 = arith.constant 0 : i32
    %c0_i32_1 = arith.constant 0 : i32
    %c0_i32_2 = arith.constant 0 : i32
    return %c0_i32, %c0_i32_0, %c0_i32_1 : i32, i32, i32
  }
  func.func @transform_4(%arg0: i32, %arg1: memref<2xi32, #tpu.memory_space<smem>>) -> (i32, i32, i32) {
    %c0_i32 = arith.constant 0 : i32
    %c0_i32_0 = arith.constant 0 : i32
    %c0_i32_1 = arith.constant 0 : i32
    %c0_i32_2 = arith.constant 0 : i32
    return %c0_i32, %c0_i32_0, %c0_i32_1 : i32, i32, i32
  }
  func.func @transform_5(%arg0: i32, %arg1: memref<2xi32, #tpu.memory_space<smem>>) -> (i32, i32, i32) {
    %c0_i32 = arith.constant 0 : i32
    %c0_i32_0 = arith.constant 0 : i32
    %c0_i32_1 = arith.constant 0 : i32
    %c0_i32_2 = arith.constant 0 : i32
    return %c0_i32, %c0_i32_0, %c0_i32_1 : i32, i32, i32
  }
  func.func @transform_6(%arg0: i32, %arg1: memref<2xi32, #tpu.memory_space<smem>>) -> (i32, i32, i32) {
    %c0_i32 = arith.constant 0 : i32
    %c0_i32_0 = arith.constant 0 : i32
    %c0_i32_1 = arith.constant 0 : i32
    %c0_i32_2 = arith.constant 0 : i32
    return %c0_i32, %c0_i32_0, %c0_i32_1 : i32, i32, i32
  }
  func.func @transform_7(%arg0: i32, %arg1: memref<2xi32, #tpu.memory_space<smem>>) -> (i32, i32, i32) {
    %c0_i32 = arith.constant 0 : i32
    %c0_i32_0 = arith.constant 0 : i32
    %c0_i32_1 = arith.constant 0 : i32
    %c0_i32_2 = arith.constant 0 : i32
    return %c0_i32, %c0_i32_0, %c0_i32_1 : i32, i32, i32
  }
  func.func @transform_8(%arg0: i32, %arg1: memref<2xi32, #tpu.memory_space<smem>>) -> (i32, i32) {
    %c0_i32 = arith.constant 0 : i32
    %c0_i32_0 = arith.constant 0 : i32
    %c0_i32_1 = arith.constant 0 : i32
    return %c0_i32, %c0_i32_0 : i32, i32
  }
  func.func @transform_9(%arg0: i32, %arg1: memref<2xi32, #tpu.memory_space<smem>>) -> (i32, i32) {
    %c0_i32 = arith.constant 0 : i32
    %c0_i32_0 = arith.constant 0 : i32
    %c0_i32_1 = arith.constant 0 : i32
    return %c0_i32, %c0_i32_0 : i32, i32
  }
  func.func @transform_10(%arg0: i32, %arg1: memref<2xi32, #tpu.memory_space<smem>>) -> (i32, i32) {
    %c0_i32 = arith.constant 0 : i32
    %c0_i32_0 = arith.constant 0 : i32
    %c0_i32_1 = arith.constant 0 : i32
    return %c0_i32, %c0_i32_0 : i32, i32
  }
  func.func @transform_11(%arg0: i32, %arg1: memref<2xi32, #tpu.memory_space<smem>>) -> (i32, i32) {
    %c0_i32 = arith.constant 0 : i32
    %c0_i32_0 = arith.constant 0 : i32
    %c0_i32_1 = arith.constant 0 : i32
    return %c0_i32, %c0_i32_0 : i32, i32
  }
  func.func @transform_12(%arg0: i32, %arg1: memref<2xi32, #tpu.memory_space<smem>>) -> (i32, i32) {
    %c0_i32 = arith.constant 0 : i32
    %c0_i32_0 = arith.constant 0 : i32
    %c0_i32_1 = arith.constant 0 : i32
    return %c0_i32, %c0_i32_0 : i32, i32
  }
  func.func @transform_13(%arg0: i32, %arg1: memref<2xi32, #tpu.memory_space<smem>>) -> (i32, i32) {
    %c0_i32 = arith.constant 0 : i32
    %c0_i32_0 = arith.constant 0 : i32
    %c0_i32_1 = arith.constant 0 : i32
    return %c0_i32, %c0_i32_0 : i32, i32
  }
  func.func @transform_14(%arg0: i32, %arg1: memref<2xi32, #tpu.memory_space<smem>>) -> (i32, i32) {
    %c0_i32 = arith.constant 0 : i32
    %c0_i32_0 = arith.constant 0 : i32
    %c0_i32_1 = arith.constant 0 : i32
    return %c0_i32, %c0_i32_0 : i32, i32
  }
  func.func @transform_15(%arg0: i32, %arg1: memref<2xi32, #tpu.memory_space<smem>>) -> (i32, i32) {
    %c0_i32 = arith.constant 0 : i32
    %c0_i32_0 = arith.constant 0 : i32
    %c0_i32_1 = arith.constant 0 : i32
    return %c0_i32, %c0_i32_0 : i32, i32
  }
  func.func @transform_16(%arg0: i32, %arg1: memref<2xi32, #tpu.memory_space<smem>>) -> (i32, i32) {
    %c0_i32 = arith.constant 0 : i32
    %c0_i32_0 = arith.constant 0 : i32
    %c0_i32_1 = arith.constant 0 : i32
    return %c0_i32, %c0_i32_0 : i32, i32
  }
  func.func @transform_17(%arg0: i32, %arg1: memref<2xi32, #tpu.memory_space<smem>>) -> (i32, i32) {
    %c0_i32 = arith.constant 0 : i32
    %c0_i32_0 = arith.constant 0 : i32
    %c0_i32_1 = arith.constant 0 : i32
    return %c0_i32, %c0_i32_0 : i32, i32
  }
  func.func @transform_18(%arg0: i32, %arg1: memref<2xi32, #tpu.memory_space<smem>>) -> (i32, i32) {
    %c0_i32 = arith.constant 0 : i32
    %c0_i32_0 = arith.constant 0 : i32
    %c0_i32_1 = arith.constant 0 : i32
    return %c0_i32, %c0_i32_0 : i32, i32
  }
  func.func @transform_19(%arg0: i32, %arg1: memref<2xi32, #tpu.memory_space<smem>>) -> (i32, i32, i32) {
    %c0_i32 = arith.constant 0 : i32
    %c0_i32_0 = arith.constant 0 : i32
    %c0_i32_1 = arith.constant 0 : i32
    return %arg0, %c0_i32, %c0_i32_0 : i32, i32, i32
  }
}

</mosaic_0001>

<llo_original>
// kernel: encoder_forward.1
$region0: #{encoder_forward.1}
  #allocation0 [shape = 'u32[]', space=smem, size = 0x4, offset = 0x4, fixed_abs, tag = 'smem constant byte address 0x4 - core index']
  #allocation1 [shape = 'u32[144,128]{1,0:T(1,128)}', space=vmem, size = 0x12000, scoped, tag = 'internal scratch']
  #allocation2 [shape = 's32[1]{0}', space=sflag, size = 0x4, scoped, tag = 'scoped memory for encoder_forward.1']
  #allocation3 [shape = 'u8[512]{0}', space=smem, size = 0x200, scoped, tag = 'prefetched SMEM operand 0']
  %s0 = inlined_call_operand.vmem [shape: s32[2], index: 0, kind: input, shape index: {}]
  %s1 = inlined_call_operand.vmem [shape: f32[2,8,32], index: 1, kind: input, shape index: {}]
  %s2 = inlined_call_operand.vmem [shape: bf16[4,8,32], index: 2, kind: input, shape index: {}]
  %s3 = inlined_call_operand.vmem [shape: bf16[4,8,32], index: 3, kind: input, shape index: {}]
  %s4 = inlined_call_operand.vmem [shape: bf16[4,8,32], index: 4, kind: input, shape index: {}]
  %s5 = inlined_call_operand.vmem [shape: f32[4,1,8], index: 5, kind: input, shape index: {}]
  %s6 = inlined_call_operand.vmem [shape: f32[4,1,8], index: 6, kind: input, shape index: {}]
  %s7 = inlined_call_operand.vmem [shape: f32[4,1,8], index: 7, kind: input, shape index: {}]
  %s8 = inlined_call_operand.vmem [shape: bf16[4,32,8], index: 8, kind: input, shape index: {}]
  %s9 = inlined_call_operand.vmem [shape: f32[1,32], index: 9, kind: input, shape index: {}]
  %s10 = inlined_call_operand.vmem [shape: bf16[32,64], index: 10, kind: input, shape index: {}]
  %s11 = inlined_call_operand.vmem [shape: f32[1,64], index: 11, kind: input, shape index: {}]
  %s12 = inlined_call_operand.vmem [shape: bf16[64,32], index: 12, kind: input, shape index: {}]
  %s13 = inlined_call_operand.vmem [shape: f32[1,32], index: 13, kind: input, shape index: {}]
  %s14 = inlined_call_operand.vmem [shape: f32[1,32], index: 14, kind: input, shape index: {}]
  %s15 = inlined_call_operand.vmem [shape: f32[1,32], index: 15, kind: input, shape index: {}]
  %s16 = inlined_call_operand.vmem [shape: f32[1,32], index: 16, kind: input, shape index: {}]
  %s17 = inlined_call_operand.vmem [shape: f32[1,32], index: 17, kind: input, shape index: {}]
  %s18 = inlined_call_operand.vmem [shape: f32[1,32], index: 18, kind: input, shape index: {}]
  %s19 = inlined_call_operand.vmem [shape: f32[1,32], index: 19, kind: input, shape index: {}]
  %s20 = inlined_call_operand.hbm [shape: f32[2,8,32], index: 20, kind: output, shape index: {}]
  %s21 = sld [smem:[#allocation0]]
  $region116: #{encoder_forward.1} parent=0
    _
  %s23 = ssub.s32 1, %s21
  %s24 = scalar_select 0, %s23, %s21
  %s25 = sshll.u32 %s0, 4
  %s26 = int_to_ptr.vmem [resolvable:$true] %s25
  %28 = dma.vmem_to_smem %s26, 16, [#allocation3], [#allocation2]
  %29 = dma.done [#allocation2], 16
  %30 = sfence
  $region1: #{encoder_forward.1} parent=0
    #allocation4 [shape = 'u8[8192]{0}', space=vmem, size = 0x2000, scoped, tag = 'output window, operand 0']
    #allocation5 [shape = 's32[2]{0}', space=sflag, size = 0x8, scoped, tag = 'scoped memory for encoder_forward.1']
    %31 = vsyncpa [#allocation5], 0
    %s32 = scalar_lea.sflag [#allocation5], 1
    %33 = vsyncpa %s32, 0
    loop: start=0, step=1, limit=4
    $region2: #{encoder_forward.1} parent=1 // loop_pre_header
      _
    $region3: #{encoder_forward.1} parent=1 // loop_header
      %s35 = sphi 0, %s39
      %p36 = scmp.ge.s32.totalorder %s35, 4
      %s45 = sphi 0, %s47
      %s48 = sphi 0, %s45
      %s49 = sphi 0, %s48
      %s65 = sphi 0, %s49
      %s69 = sphi 0, %s69
      %s71 = sphi 0, %s69
      %s72 = sphi 0, %s71
      %s86 = sphi 0, %s72
      %s90 = sphi 0, %s90
      %s92 = sphi 0, %s90
      %s93 = sphi 0, %s92
      %s107 = sphi 0, %s93
      %s111 = sphi 0, %s111
      %s113 = sphi 0, %s111
      %s114 = sphi 0, %s113
      %s128 = sphi 0, %s114
      %s132 = sphi 0, %s132
      %s134 = sphi 0, %s132
      %s135 = sphi 0, %s134
      %s149 = sphi 0, %s135
      %s153 = sphi 0, %s153
      %s155 = sphi 0, %s153
      %s156 = sphi 0, %s155
      %s170 = sphi 0, %s156
      %s174 = sphi 0, %s174
      %s176 = sphi 0, %s174
      %s177 = sphi 0, %s176
      %s191 = sphi 0, %s177
      %s195 = sphi 0, %s195
      %s197 = sphi 0, %s195
      %s198 = sphi 0, %s197
      %s212 = sphi 0, %s198
      %s216 = sphi 0, %s216
      %s218 = sphi 0, %s216
      %s219 = sphi 0, %s218
      %s233 = sphi 0, %s219
      %s237 = sphi 0, %s237
      %s239 = sphi 0, %s237
      %s240 = sphi 0, %s239
      %s254 = sphi 0, %s240
      %s258 = sphi 0, %s258
      %s260 = sphi 0, %s258
      %s261 = sphi 0, %s260
      %s275 = sphi 0, %s261
      %s279 = sphi 0, %s279
      %s281 = sphi 0, %s279
      %s282 = sphi 0, %s281
      %s296 = sphi 0, %s282
      %s300 = sphi 0, %s300
      %s302 = sphi 0, %s300
      %s303 = sphi 0, %s302
      %s317 = sphi 0, %s303
      %s321 = sphi 0, %s321
      %s323 = sphi 0, %s321
      %s324 = sphi 0, %s323
      %s338 = sphi 0, %s324
      %s342 = sphi 0, %s342
      %s344 = sphi 0, %s342
      %s345 = sphi 0, %s344
      %s359 = sphi 0, %s345
      %s363 = sphi 0, %s363
      %s365 = sphi 0, %s363
      %s366 = sphi 0, %s365
      %s380 = sphi 0, %s366
      %s384 = sphi 0, %s384
      %s386 = sphi 0, %s384
      %s387 = sphi 0, %s386
      %s401 = sphi 0, %s387
      %s405 = sphi 0, %s405
      %s407 = sphi 0, %s405
      %s408 = sphi 0, %s407
      %s422 = sphi 0, %s408
      %s426 = sphi 0, %s426
      %s428 = sphi 0, %s426
      %s429 = sphi 0, %s428
      %s443 = sphi 0, %s429
      %s449 = sphi 0, %s451
      %s452 = sphi 0, %s449
      %s453 = sphi 0, %s452
      %s469 = sphi 0, %s453
    $region4: #{encoder_forward.1} parent=1 // loop_header_branch
      %38 = sbr.rel (%p36) target = $region8
    $region5: #{encoder_forward.1} parent=1 // loop_body
      %s40 = ssub.s32 %s35, 1
      %s41 = ssub.s32 %s35, 2
      %s42 = sadd.s32 %s35, 1
      %s43 = ssub.s32 %s35, %s42
      %p44 = scmp.eq.s32.totalorder %s43, 0
      %s46 = sadd.s32 %s45, 1
      %s47 = scalar_select %p44, %s45, %s46
      %p50 = pneg %p44
      %p51 = scmp.eq.s32.totalorder %s35, 1
      %p52 = por %p50, %p51
      %p53 = scmp.ne.s32.totalorder %s45, %s48
      %p54 = scmp.eq.s32.totalorder %s35, 0
      %p55 = por %p53, %p54
      %p56 = scmp.ne.s32.totalorder %s45, %s48
      %p57 = scmp.eq.s32.totalorder %s40, 1
      %p58 = por %p56, %p57
      %p59 = scmp.ne.s32.totalorder %s48, %s49
      %p60 = scmp.eq.s32.totalorder %s40, 0
      %p61 = por %p59, %p60
      %p62 = scmp.ne.s32.totalorder %s48, %s49
      %p63 = scmp.eq.s32.totalorder %s41, 1
      %p64 = por %p62, %p63
      %p66 = scmp.ne.s32.totalorder %s49, %s65
      %p67 = scmp.eq.s32.totalorder %s41, 0
      %p68 = por %p66, %p67
      %s70 = sadd.s32 %s69, 1
      %p73 = scmp.eq.s32.totalorder %s35, 1
      %p74 = scmp.ne.s32.totalorder %s69, %s71
      %p75 = scmp.eq.s32.totalorder %s35, 0
      %p76 = por %p74, %p75
      %p77 = scmp.ne.s32.totalorder %s69, %s71
      %p78 = scmp.eq.s32.totalorder %s40, 1
      %p79 = por %p77, %p78
      %p80 = scmp.ne.s32.totalorder %s71, %s72
      %p81 = scmp.eq.s32.totalorder %s40, 0
      %p82 = por %p80, %p81
      %p83 = scmp.ne.s32.totalorder %s71, %s72
      %p84 = scmp.eq.s32.totalorder %s41, 1
      %p85 = por %p83, %p84
      %p87 = scmp.ne.s32.totalorder %s72, %s86
      %p88 = scmp.eq.s32.totalorder %s41, 0
      %p89 = por %p87, %p88
      %s91 = sadd.s32 %s90, 1
      %p94 = scmp.eq.s32.totalorder %s35, 1
      %p95 = scmp.ne.s32.totalorder %s90, %s92
      %p96 = scmp.eq.s32.totalorder %s35, 0
      %p97 = por %p95, %p96
      %p98 = scmp.ne.s32.totalorder %s90, %s92
      %p99 = scmp.eq.s32.totalorder %s40, 1
      %p100 = por %p98, %p99
      %p101 = scmp.ne.s32.totalorder %s92, %s93
      %p102 = scmp.eq.s32.totalorder %s40, 0
      %p103 = por %p101, %p102
      %p104 = scmp.ne.s32.totalorder %s92, %s93
      %p105 = scmp.eq.s32.totalorder %s41, 1
      %p106 = por %p104, %p105
      %p108 = scmp.ne.s32.totalorder %s93, %s107
      %p109 = scmp.eq.s32.totalorder %s41, 0
      %p110 = por %p108, %p109
      %s112 = sadd.s32 %s111, 1
      %p115 = scmp.eq.s32.totalorder %s35, 1
      %p116 = scmp.ne.s32.totalorder %s111, %s113
      %p117 = scmp.eq.s32.totalorder %s35, 0
      %p118 = por %p116, %p117
      %p119 = scmp.ne.s32.totalorder %s111, %s113
      %p120 = scmp.eq.s32.totalorder %s40, 1
      %p121 = por %p119, %p120
      %p122 = scmp.ne.s32.totalorder %s113, %s114
      %p123 = scmp.eq.s32.totalorder %s40, 0
      %p124 = por %p122, %p123
      %p125 = scmp.ne.s32.totalorder %s113, %s114
      %p126 = scmp.eq.s32.totalorder %s41, 1
      %p127 = por %p125, %p126
      %p129 = scmp.ne.s32.totalorder %s114, %s128
      %p130 = scmp.eq.s32.totalorder %s41, 0
      %p131 = por %p129, %p130
      %s133 = sadd.s32 %s132, 1
      %p136 = scmp.eq.s32.totalorder %s35, 1
      %p137 = scmp.ne.s32.totalorder %s132, %s134
      %p138 = scmp.eq.s32.totalorder %s35, 0
      %p139 = por %p137, %p138
      %p140 = scmp.ne.s32.totalorder %s132, %s134
      %p141 = scmp.eq.s32.totalorder %s40, 1
      %p142 = por %p140, %p141
      %p143 = scmp.ne.s32.totalorder %s134, %s135
      %p144 = scmp.eq.s32.totalorder %s40, 0
      %p145 = por %p143, %p144
      %p146 = scmp.ne.s32.totalorder %s134, %s135
      %p147 = scmp.eq.s32.totalorder %s41, 1
      %p148 = por %p146, %p147
      %p150 = scmp.ne.s32.totalorder %s135, %s149
      %p151 = scmp.eq.s32.totalorder %s41, 0
      %p152 = por %p150, %p151
      %s154 = sadd.s32 %s153, 1
      %p157 = scmp.eq.s32.totalorder %s35, 1
      %p158 = scmp.ne.s32.totalorder %s153, %s155
      %p159 = scmp.eq.s32.totalorder %s35, 0
      %p160 = por %p158, %p159
      %p161 = scmp.ne.s32.totalorder %s153, %s155
      %p162 = scmp.eq.s32.totalorder %s40, 1
      %p163 = por %p161, %p162
      %p164 = scmp.ne.s32.totalorder %s155, %s156
      %p165 = scmp.eq.s32.totalorder %s40, 0
      %p166 = por %p164, %p165
      %p167 = scmp.ne.s32.totalorder %s155, %s156
      %p168 = scmp.eq.s32.totalorder %s41, 1
      %p169 = por %p167, %p168
      %p171 = scmp.ne.s32.totalorder %s156, %s170
      %p172 = scmp.eq.s32.totalorder %s41, 0
      %p173 = por %p171, %p172
      %s175 = sadd.s32 %s174, 1
      %p178 = scmp.eq.s32.totalorder %s35, 1
      %p179 = scmp.ne.s32.totalorder %s174, %s176
      %p180 = scmp.eq.s32.totalorder %s35, 0
      %p181 = por %p179, %p180
      %p182 = scmp.ne.s32.totalorder %s174, %s176
      %p183 = scmp.eq.s32.totalorder %s40, 1
      %p184 = por %p182, %p183
      %p185 = scmp.ne.s32.totalorder %s176, %s177
      %p186 = scmp.eq.s32.totalorder %s40, 0
      %p187 = por %p185, %p186
      %p188 = scmp.ne.s32.totalorder %s176, %s177
      %p189 = scmp.eq.s32.totalorder %s41, 1
      %p190 = por %p188, %p189
      %p192 = scmp.ne.s32.totalorder %s177, %s191
      %p193 = scmp.eq.s32.totalorder %s41, 0
      %p194 = por %p192, %p193
      %s196 = sadd.s32 %s195, 1
      %p199 = scmp.eq.s32.totalorder %s35, 1
      %p200 = scmp.ne.s32.totalorder %s195, %s197
      %p201 = scmp.eq.s32.totalorder %s35, 0
      %p202 = por %p200, %p201
      %p203 = scmp.ne.s32.totalorder %s195, %s197
      %p204 = scmp.eq.s32.totalorder %s40, 1
      %p205 = por %p203, %p204
      %p206 = scmp.ne.s32.totalorder %s197, %s198
      %p207 = scmp.eq.s32.totalorder %s40, 0
      %p208 = por %p206, %p207
      %p209 = scmp.ne.s32.totalorder %s197, %s198
      %p210 = scmp.eq.s32.totalorder %s41, 1
      %p211 = por %p209, %p210
      %p213 = scmp.ne.s32.totalorder %s198, %s212
      %p214 = scmp.eq.s32.totalorder %s41, 0
      %p215 = por %p213, %p214
      %s217 = sadd.s32 %s216, 1
      %p220 = scmp.eq.s32.totalorder %s35, 1
      %p221 = scmp.ne.s32.totalorder %s216, %s218
      %p222 = scmp.eq.s32.totalorder %s35, 0
      %p223 = por %p221, %p222
      %p224 = scmp.ne.s32.totalorder %s216, %s218
      %p225 = scmp.eq.s32.totalorder %s40, 1
      %p226 = por %p224, %p225
      %p227 = scmp.ne.s32.totalorder %s218, %s219
      %p228 = scmp.eq.s32.totalorder %s40, 0
      %p229 = por %p227, %p228
      %p230 = scmp.ne.s32.totalorder %s218, %s219
      %p231 = scmp.eq.s32.totalorder %s41, 1
      %p232 = por %p230, %p231
      %p234 = scmp.ne.s32.totalorder %s219, %s233
      %p235 = scmp.eq.s32.totalorder %s41, 0
      %p236 = por %p234, %p235
      %s238 = sadd.s32 %s237, 1
      %p241 = scmp.eq.s32.totalorder %s35, 1
      %p242 = scmp.ne.s32.totalorder %s237, %s239
      %p243 = scmp.eq.s32.totalorder %s35, 0
      %p244 = por %p242, %p243
      %p245 = scmp.ne.s32.totalorder %s237, %s239
      %p246 = scmp.eq.s32.totalorder %s40, 1
      %p247 = por %p245, %p246
      %p248 = scmp.ne.s32.totalorder %s239, %s240
      %p249 = scmp.eq.s32.totalorder %s40, 0
      %p250 = por %p248, %p249
      %p251 = scmp.ne.s32.totalorder %s239, %s240
      %p252 = scmp.eq.s32.totalorder %s41, 1
      %p253 = por %p251, %p252
      %p255 = scmp.ne.s32.totalorder %s240, %s254
      %p256 = scmp.eq.s32.totalorder %s41, 0
      %p257 = por %p255, %p256
      %s259 = sadd.s32 %s258, 1
      %p262 = scmp.eq.s32.totalorder %s35, 1
      %p263 = scmp.ne.s32.totalorder %s258, %s260
      %p264 = scmp.eq.s32.totalorder %s35, 0
      %p265 = por %p263, %p264
      %p266 = scmp.ne.s32.totalorder %s258, %s260
      %p267 = scmp.eq.s32.totalorder %s40, 1
      %p268 = por %p266, %p267
      %p269 = scmp.ne.s32.totalorder %s260, %s261
      %p270 = scmp.eq.s32.totalorder %s40, 0
      %p271 = por %p269, %p270
      %p272 = scmp.ne.s32.totalorder %s260, %s261
      %p273 = scmp.eq.s32.totalorder %s41, 1
      %p274 = por %p272, %p273
      %p276 = scmp.ne.s32.totalorder %s261, %s275
      %p277 = scmp.eq.s32.totalorder %s41, 0
      %p278 = por %p276, %p277
      %s280 = sadd.s32 %s279, 1
      %p283 = scmp.eq.s32.totalorder %s35, 1
      %p284 = scmp.ne.s32.totalorder %s279, %s281
      %p285 = scmp.eq.s32.totalorder %s35, 0
      %p286 = por %p284, %p285
      %p287 = scmp.ne.s32.totalorder %s279, %s281
      %p288 = scmp.eq.s32.totalorder %s40, 1
      %p289 = por %p287, %p288
      %p290 = scmp.ne.s32.totalorder %s281, %s282
      %p291 = scmp.eq.s32.totalorder %s40, 0
      %p292 = por %p290, %p291
      %p293 = scmp.ne.s32.totalorder %s281, %s282
      %p294 = scmp.eq.s32.totalorder %s41, 1
      %p295 = por %p293, %p294
      %p297 = scmp.ne.s32.totalorder %s282, %s296
      %p298 = scmp.eq.s32.totalorder %s41, 0
      %p299 = por %p297, %p298
      %s301 = sadd.s32 %s300, 1
      %p304 = scmp.eq.s32.totalorder %s35, 1
      %p305 = scmp.ne.s32.totalorder %s300, %s302
      %p306 = scmp.eq.s32.totalorder %s35, 0
      %p307 = por %p305, %p306
      %p308 = scmp.ne.s32.totalorder %s300, %s302
      %p309 = scmp.eq.s32.totalorder %s40, 1
      %p310 = por %p308, %p309
      %p311 = scmp.ne.s32.totalorder %s302, %s303
      %p312 = scmp.eq.s32.totalorder %s40, 0
      %p313 = por %p311, %p312
      %p314 = scmp.ne.s32.totalorder %s302, %s303
      %p315 = scmp.eq.s32.totalorder %s41, 1
      %p316 = por %p314, %p315
      %p318 = scmp.ne.s32.totalorder %s303, %s317
      %p319 = scmp.eq.s32.totalorder %s41, 0
      %p320 = por %p318, %p319
      %s322 = sadd.s32 %s321, 1
      %p325 = scmp.eq.s32.totalorder %s35, 1
      %p326 = scmp.ne.s32.totalorder %s321, %s323
      %p327 = scmp.eq.s32.totalorder %s35, 0
      %p328 = por %p326, %p327
      %p329 = scmp.ne.s32.totalorder %s321, %s323
      %p330 = scmp.eq.s32.totalorder %s40, 1
      %p331 = por %p329, %p330
      %p332 = scmp.ne.s32.totalorder %s323, %s324
      %p333 = scmp.eq.s32.totalorder %s40, 0
      %p334 = por %p332, %p333
      %p335 = scmp.ne.s32.totalorder %s323, %s324
      %p336 = scmp.eq.s32.totalorder %s41, 1
      %p337 = por %p335, %p336
      %p339 = scmp.ne.s32.totalorder %s324, %s338
      %p340 = scmp.eq.s32.totalorder %s41, 0
      %p341 = por %p339, %p340
      %s343 = sadd.s32 %s342, 1
      %p346 = scmp.eq.s32.totalorder %s35, 1
      %p347 = scmp.ne.s32.totalorder %s342, %s344
      %p348 = scmp.eq.s32.totalorder %s35, 0
      %p349 = por %p347, %p348
      %p350 = scmp.ne.s32.totalorder %s342, %s344
      %p351 = scmp.eq.s32.totalorder %s40, 1
      %p352 = por %p350, %p351
      %p353 = scmp.ne.s32.totalorder %s344, %s345
      %p354 = scmp.eq.s32.totalorder %s40, 0
      %p355 = por %p353, %p354
      %p356 = scmp.ne.s32.totalorder %s344, %s345
      %p357 = scmp.eq.s32.totalorder %s41, 1
      %p358 = por %p356, %p357
      %p360 = scmp.ne.s32.totalorder %s345, %s359
      %p361 = scmp.eq.s32.totalorder %s41, 0
      %p362 = por %p360, %p361
      %s364 = sadd.s32 %s363, 1
      %p367 = scmp.eq.s32.totalorder %s35, 1
      %p368 = scmp.ne.s32.totalorder %s363, %s365
      %p369 = scmp.eq.s32.totalorder %s35, 0
      %p370 = por %p368, %p369
      %p371 = scmp.ne.s32.totalorder %s363, %s365
      %p372 = scmp.eq.s32.totalorder %s40, 1
      %p373 = por %p371, %p372
      %p374 = scmp.ne.s32.totalorder %s365, %s366
      %p375 = scmp.eq.s32.totalorder %s40, 0
      %p376 = por %p374, %p375
      %p377 = scmp.ne.s32.totalorder %s365, %s366
      %p378 = scmp.eq.s32.totalorder %s41, 1
      %p379 = por %p377, %p378
      %p381 = scmp.ne.s32.totalorder %s366, %s380
      %p382 = scmp.eq.s32.totalorder %s41, 0
      %p383 = por %p381, %p382
      %s385 = sadd.s32 %s384, 1
      %p388 = scmp.eq.s32.totalorder %s35, 1
      %p389 = scmp.ne.s32.totalorder %s384, %s386
      %p390 = scmp.eq.s32.totalorder %s35, 0
      %p391 = por %p389, %p390
      %p392 = scmp.ne.s32.totalorder %s384, %s386
      %p393 = scmp.eq.s32.totalorder %s40, 1
      %p394 = por %p392, %p393
      %p395 = scmp.ne.s32.totalorder %s386, %s387
      %p396 = scmp.eq.s32.totalorder %s40, 0
      %p397 = por %p395, %p396
      %p398 = scmp.ne.s32.totalorder %s386, %s387
      %p399 = scmp.eq.s32.totalorder %s41, 1
      %p400 = por %p398, %p399
      %p402 = scmp.ne.s32.totalorder %s387, %s401
      %p403 = scmp.eq.s32.totalorder %s41, 0
      %p404 = por %p402, %p403
      %s406 = sadd.s32 %s405, 1
      %p409 = scmp.eq.s32.totalorder %s35, 1
      %p410 = scmp.ne.s32.totalorder %s405, %s407
      %p411 = scmp.eq.s32.totalorder %s35, 0
      %p412 = por %p410, %p411
      %p413 = scmp.ne.s32.totalorder %s405, %s407
      %p414 = scmp.eq.s32.totalorder %s40, 1
      %p415 = por %p413, %p414
      %p416 = scmp.ne.s32.totalorder %s407, %s408
      %p417 = scmp.eq.s32.totalorder %s40, 0
      %p418 = por %p416, %p417
      %p419 = scmp.ne.s32.totalorder %s407, %s408
      %p420 = scmp.eq.s32.totalorder %s41, 1
      %p421 = por %p419, %p420
      %p423 = scmp.ne.s32.totalorder %s408, %s422
      %p424 = scmp.eq.s32.totalorder %s41, 0
      %p425 = por %p423, %p424
      %s427 = sadd.s32 %s426, 1
      %p430 = scmp.eq.s32.totalorder %s35, 1
      %p431 = scmp.ne.s32.totalorder %s426, %s428
      %p432 = scmp.eq.s32.totalorder %s35, 0
      %p433 = por %p431, %p432
      %p434 = scmp.ne.s32.totalorder %s426, %s428
      %p435 = scmp.eq.s32.totalorder %s40, 1
      %p436 = por %p434, %p435
      %p437 = scmp.ne.s32.totalorder %s428, %s429
      %p438 = scmp.eq.s32.totalorder %s40, 0
      %p439 = por %p437, %p438
      %p440 = scmp.ne.s32.totalorder %s428, %s429
      %p441 = scmp.eq.s32.totalorder %s41, 1
      %p442 = por %p440, %p441
      %p444 = scmp.ne.s32.totalorder %s429, %s443
      %p445 = scmp.eq.s32.totalorder %s41, 0
      %p446 = por %p444, %p445
      %s447 = ssub.s32 %s35, %s42
      %p448 = scmp.eq.s32.totalorder %s447, 0
      %s450 = sadd.s32 %s449, 1
      %s451 = scalar_select %p448, %s449, %s450
      %p454 = pneg %p448
      %p455 = scmp.eq.s32.totalorder %s35, 1
      %p456 = por %p454, %p455
      %p457 = scmp.ne.s32.totalorder %s449, %s452
      %p458 = scmp.eq.s32.totalorder %s35, 0
      %p459 = por %p457, %p458
      %p460 = scmp.ne.s32.totalorder %s449, %s452
      %p461 = scmp.eq.s32.totalorder %s40, 1
      %p462 = por %p460, %p461
      %p463 = scmp.ne.s32.totalorder %s452, %s453
      %p464 = scmp.eq.s32.totalorder %s40, 0
      %p465 = por %p463, %p464
      %p466 = scmp.ne.s32.totalorder %s452, %s453
      %p467 = scmp.eq.s32.totalorder %s41, 1
      %p468 = por %p466, %p467
      %p470 = scmp.ne.s32.totalorder %s453, %s469
      %p471 = scmp.eq.s32.totalorder %s41, 0
      %p472 = por %p470, %p471
      %p473 = scmp.le.s32.totalorder 1, %s35
      %p474 = scmp.lt.s32.totalorder %s35, 3
      %p475 = pnand %p473, %p474
      %p476 = pneg %p475
      // Predicated region
      $region9: #{encoder_forward.1} parent=5 // pred_check
        _
      $region10: #{encoder_forward.1} parent=5 // pred_check_branch
        %478 = sbr.rel (%p475) target = $region12
      $region11: #{encoder_forward.1} parent=5 // pred_region
        %s479 = ssub.s32 %s35, 1
        // Predicated region
        $region13: #{encoder_forward.1} parent=11 // pred_check
          %p480 = pneg %p82
        $region14: #{encoder_forward.1} parent=11 // pred_check_branch
          %482 = sbr.rel (%p480) target = $region16
        $region15: #{encoder_forward.1} parent=11 // pred_region
          _
        $region16: #{encoder_forward.1} parent=11 // pred_fallthru
          _
        // Predicated region
        $region17: #{encoder_forward.1} parent=11 // pred_check
          %p483 = pneg %p103
        $region18: #{encoder_forward.1} parent=11 // pred_check_branch
          %485 = sbr.rel (%p483) target = $region20
        $region19: #{encoder_forward.1} parent=11 // pred_region
          _
        $region20: #{encoder_forward.1} parent=11 // pred_fallthru
          _
        // Predicated region
        $region21: #{encoder_forward.1} parent=11 // pred_check
          %p486 = pneg %p124
        $region22: #{encoder_forward.1} parent=11 // pred_check_branch
          %488 = sbr.rel (%p486) target = $region24
        $region23: #{encoder_forward.1} parent=11 // pred_region
          _
        $region24: #{encoder_forward.1} parent=11 // pred_fallthru
          _
        // Predicated region
        $region25: #{encoder_forward.1} parent=11 // pred_check
          %p489 = pneg %p145
        $region26: #{encoder_forward.1} parent=11 // pred_check_branch
          %491 = sbr.rel (%p489) target = $region28
        $region27: #{encoder_forward.1} parent=11 // pred_region
          _
        $region28: #{encoder_forward.1} parent=11 // pred_fallthru
          _
        // Predicated region
        $region29: #{encoder_forward.1} parent=11 // pred_check
          %p492 = pneg %p166
        $region30: #{encoder_forward.1} parent=11 // pred_check_branch
          %494 = sbr.rel (%p492) target = $region32
        $region31: #{encoder_forward.1} parent=11 // pred_region
          _
        $region32: #{encoder_forward.1} parent=11 // pred_fallthru
          _
        // Predicated region
        $region33: #{encoder_forward.1} parent=11 // pred_check
          %p495 = pneg %p187
        $region34: #{encoder_forward.1} parent=11 // pred_check_branch
          %497 = sbr.rel (%p495) target = $region36
        $region35: #{encoder_forward.1} parent=11 // pred_region
          _
        $region36: #{encoder_forward.1} parent=11 // pred_fallthru
          _
        // Predicated region
        $region37: #{encoder_forward.1} parent=11 // pred_check
          %p498 = pneg %p208
        $region38: #{encoder_forward.1} parent=11 // pred_check_branch
          %500 = sbr.rel (%p498) target = $region40
        $region39: #{encoder_forward.1} parent=11 // pred_region
          _
        $region40: #{encoder_forward.1} parent=11 // pred_fallthru
          _
        // Predicated region
        $region41: #{encoder_forward.1} parent=11 // pred_check
          %p501 = pneg %p229
        $region42: #{encoder_forward.1} parent=11 // pred_check_branch
          %503 = sbr.rel (%p501) target = $region44
        $region43: #{encoder_forward.1} parent=11 // pred_region
          _
        $region44: #{encoder_forward.1} parent=11 // pred_fallthru
          _
        // Predicated region
        $region45: #{encoder_forward.1} parent=11 // pred_check
          %p504 = pneg %p250
        $region46: #{encoder_forward.1} parent=11 // pred_check_branch
          %506 = sbr.rel (%p504) target = $region48
        $region47: #{encoder_forward.1} parent=11 // pred_region
          _
        $region48: #{encoder_forward.1} parent=11 // pred_fallthru
          _
        // Predicated region
        $region49: #{encoder_forward.1} parent=11 // pred_check
          %p507 = pneg %p271
        $region50: #{encoder_forward.1} parent=11 // pred_check_branch
          %509 = sbr.rel (%p507) target = $region52
        $region51: #{encoder_forward.1} parent=11 // pred_region
          _
        $region52: #{encoder_forward.1} parent=11 // pred_fallthru
          _
        // Predicated region
        $region53: #{encoder_forward.1} parent=11 // pred_check
          %p510 = pneg %p292
        $region54: #{encoder_forward.1} parent=11 // pred_check_branch
          %512 = sbr.rel (%p510) target = $region56
        $region55: #{encoder_forward.1} parent=11 // pred_region
          _
        $region56: #{encoder_forward.1} parent=11 // pred_fallthru
          _
        // Predicated region
        $region57: #{encoder_forward.1} parent=11 // pred_check
          %p513 = pneg %p313
        $region58: #{encoder_forward.1} parent=11 // pred_check_branch
          %515 = sbr.rel (%p513) target = $region60
        $region59: #{encoder_forward.1} parent=11 // pred_region
          _
        $region60: #{encoder_forward.1} parent=11 // pred_fallthru
          _
        // Predicated region
        $region61: #{encoder_forward.1} parent=11 // pred_check
          %p516 = pneg %p334
        $region62: #{encoder_forward.1} parent=11 // pred_check_branch
          %518 = sbr.rel (%p516) target = $region64
        $region63: #{encoder_forward.1} parent=11 // pred_region
          _
        $region64: #{encoder_forward.1} parent=11 // pred_fallthru
          _
        // Predicated region
        $region65: #{encoder_forward.1} parent=11 // pred_check
          %p519 = pneg %p355
        $region66: #{encoder_forward.1} parent=11 // pred_check_branch
          %521 = sbr.rel (%p519) target = $region68
        $region67: #{encoder_forward.1} parent=11 // pred_region
          _
        $region68: #{encoder_forward.1} parent=11 // pred_fallthru
          _
        // Predicated region
        $region69: #{encoder_forward.1} parent=11 // pred_check
          %p522 = pneg %p376
        $region70: #{encoder_forward.1} parent=11 // pred_check_branch
          %524 = sbr.rel (%p522) target = $region72
        $region71: #{encoder_forward.1} parent=11 // pred_region
          _
        $region72: #{encoder_forward.1} parent=11 // pred_fallthru
          _
        // Predicated region
        $region73: #{encoder_forward.1} parent=11 // pred_check
          %p525 = pneg %p397
        $region74: #{encoder_forward.1} parent=11 // pred_check_branch
          %527 = sbr.rel (%p525) target = $region76
        $region75: #{encoder_forward.1} parent=11 // pred_region
          _
        $region76: #{encoder_forward.1} parent=11 // pred_fallthru
          _
        // Predicated region
        $region77: #{encoder_forward.1} parent=11 // pred_check
          %p528 = pneg %p418
        $region78: #{encoder_forward.1} parent=11 // pred_check_branch
          %530 = sbr.rel (%p528) target = $region80
        $region79: #{encoder_forward.1} parent=11 // pred_region
          _
        $region80: #{encoder_forward.1} parent=11 // pred_fallthru
          _
        // Predicated region
        $region81: #{encoder_forward.1} parent=11 // pred_check
          %p531 = pneg %p439
        $region82: #{encoder_forward.1} parent=11 // pred_check_branch
          %533 = sbr.rel (%p531) target = $region84
        $region83: #{encoder_forward.1} parent=11 // pred_region
          _
        $region84: #{encoder_forward.1} parent=11 // pred_fallthru
          _
      $region12: #{encoder_forward.1} parent=5 // pred_fallthru
        _
      %p534 = scmp.lt.s32.totalorder %s35, 2
      // Predicated region
      $region85: #{encoder_forward.1} parent=5 // pred_check
        %p535 = pneg %p534
      $region86: #{encoder_forward.1} parent=5 // pred_check_branch
        %537 = sbr.rel (%p535) target = $region88
      $region87: #{encoder_forward.1} parent=5 // pred_region
        // Predicated region
        $region89: #{encoder_forward.1} parent=87 // pred_check
          %p538 = pneg %p55
        $region90: #{encoder_forward.1} parent=87 // pred_check_branch
          %540 = sbr.rel (%p538) target = $region92
        $region91: #{encoder_forward.1} parent=87 // pred_region
          %p541 = scmp.lt.s32.totalorder %s35, 1
          %s542 = scalar_select %p541, %s35, 1
          %s543 = smul.addr %s542, 8
          %s544 = scalar_lea.vmem %s1, %s543
        $region92: #{encoder_forward.1} parent=87 // pred_fallthru
          _
      $region88: #{encoder_forward.1} parent=5 // pred_fallthru
        _
      %p545 = scmp.le.s32.totalorder 1, %s35
      %p546 = scmp.lt.s32.totalorder %s35, 3
      %p547 = pnand %p545, %p546
      %p548 = pneg %p547
      // Predicated region
      $region93: #{encoder_forward.1} parent=5 // pred_check
        _
      $region94: #{encoder_forward.1} parent=5 // pred_check_branch
        %550 = sbr.rel (%p547) target = $region96
      $region95: #{encoder_forward.1} parent=5 // pred_region
        %s551 = ssub.s32 %s35, 1
        %p552 = scmp.lt.s32.totalorder %s40, 1
        %s553 = scalar_select %p552, %s40, 1
        %s554 = smul.addr %s553, 8
        %s555 = scalar_lea.vmem %s1, %s554
        %p556 = pneg %p61
        %p557 = pneg %p58
        %p558 = pneg %p82
        %p559 = pneg %p79
        %p560 = pneg %p103
        %p561 = pneg %p100
        %p562 = pneg %p124
        %p563 = pneg %p121
        %p564 = pneg %p145
        %p565 = pneg %p142
        %p566 = pneg %p166
        %p567 = pneg %p163
        %p568 = pneg %p187
        %p569 = pneg %p184
        %p570 = pneg %p208
        %p571 = pneg %p205
        %p572 = pneg %p229
        %p573 = pneg %p226
        %p574 = pneg %p250
        %p575 = pneg %p247
        %p576 = pneg %p271
        %p577 = pneg %p268
        %p578 = pneg %p292
        %p579 = pneg %p289
        %p580 = pneg %p313
        %p581 = pneg %p310
        %p582 = pneg %p334
        %p583 = pneg %p331
        %p584 = pneg %p355
        %p585 = pneg %p352
        %p586 = pneg %p376
        %p587 = pneg %p373
        %p588 = pneg %p397
        %p589 = pneg %p394
        %p590 = pneg %p418
        %p591 = pneg %p415
        %p592 = pneg %p439
        %p593 = pneg %p436
        %p594 = pneg %p465
        %p595 = pneg %p462
        %s596 = sand.u32 %s452, 1
        %s597 = scalar_lea.sflag [#allocation5], %s596
        %s598 = sand.u32 %s452, 1
        %s599 = smul.addr %s598, 8
        %s600 = scalar_lea.vmem [#allocation4], %s599
        %p601 = scmp.lt.s32.totalorder %s40, 1
        %s602 = scalar_select %p601, %s40, 1
        %s603 = smul.addr %s602, 8
        %s604 = scalar_lea.vmem %s1, %s603
        %s606 = sld [smem:[#allocation3 + %s40]]
        %v607 = vlaneseq
        %v608 = vand.u32 %v607, 127
        %v609 = vstv %s606
        %vm610 = vcmp.lt.s32.totalorder %v608, %v609
        %v611 = vsel %vm610, 0.0, -1e+09
        %v612 = vld [vmem:[%s604] sm:$0xff]
        loop: start=0, step=1, limit=2
        $region97: #{encoder_forward.1} parent=95 // loop_pre_header
          _
        $region98: #{encoder_forward.1} parent=95 // loop_header
          %s614 = sphi 0, %s618
          %p615 = scmp.ge.s32.totalorder %s614, 2
          %v619 = vphi %v612, %v2158
        $region99: #{encoder_forward.1} parent=95 // loop_header_branch
          %617 = sbr.rel (%p615) target = $region103
        $region100: #{encoder_forward.1} parent=95 // loop_body
          %v620 = vpack.c.bf16 %v619, %v619
          %v621 = vld [vmem:[%s2] sm:$0xf]
          %v622 = vld [vmem:[%s2 + $0x4] sm:$0xf]
          %v623 = vld [vmem:[%s2 + $0x8] sm:$0xf]
          %v624 = vld [vmem:[%s2 + $0xc] sm:$0xf]
          %v625 = vld [vmem:[%s5] sm:$0x1]
          %v626 = vld [vmem:[%s5 + $0x1] sm:$0x1]
          %v627 = vld [vmem:[%s5 + $0x2] sm:$0x1]
          %v628 = vld [vmem:[%s5 + $0x3] sm:$0x1]
          %v633 = vlaneseq
          %v634 = vshrl.u32 %v633, 7
          %v635 = vsub.s32 0, %v634
          %v636 = vrot.slane %v625, %v635
          %v637 = vlaneseq
          %v638 = vshrl.u32 %v637, 7
          %v639 = vsub.s32 0, %v638
          %v640 = vrot.slane %v626, %v639
          %v641 = vlaneseq
          %v642 = vshrl.u32 %v641, 7
          %v643 = vsub.s32 0, %v642
          %v644 = vrot.slane %v627, %v643
          %v645 = vlaneseq
          %v646 = vshrl.u32 %v645, 7
          %v647 = vsub.s32 0, %v646
          %v648 = vrot.slane %v628, %v647
          %vm653 = vcmask 261120
          %v655 = vsel %vm653, %v620, 0
          %v658 = vsel %vm653, %v621, 0
          %660 = vmatprep.subr.bf16.mxu0 0
          %661 = vmatpush1.bf16.xpose.msra.mxu0 0
          %662 = vmatprep.subr.bf16.mxu0 0
          %663 = vmatpush1.bf16.xpose.msra.mxu0 0
          %664 = vmatprep.subr.bf16.mxu0 0
          %665 = vmatpush1.bf16.xpose.msra.mxu0 0
          %666 = vmatprep.subr.bf16.mxu0 0
          %667 = vmatpush1.bf16.xpose.msra.mxu0 0
          %668 = vmatprep.subr.bf16.mxu0 0
          %669 = vmatpush1.bf16.xpose.msra.mxu0 0
          %670 = vmatprep.subr.bf16.mxu0 0
          %671 = vmatpush1.bf16.xpose.msra.mxu0 0
          %672 = vmatprep.subr.bf16.mxu0 0
          %673 = vmatpush1.bf16.xpose.msra.mxu0 0
          %674 = vmatprep.subr.bf16.mxu0 0
          %675 = vmatpush1.bf16.xpose.msra.mxu0 %v658
          %676 = vmatprep.subr.bf16.mxu0 0
          %677 = vmatpush2.bf16.xpose.msra.mxu0 0
          %678 = vmatprep.subr.bf16.mxu0 0
          %679 = vmatpush2.bf16.xpose.msra.mxu0 0
          %680 = vmatprep.subr.bf16.mxu0 0
          %681 = vmatpush2.bf16.xpose.msra.mxu0 0
          %682 = vmatprep.subr.bf16.mxu0 0
          %683 = vmatpush2.bf16.xpose.msra.mxu0 0
          %684 = vmatprep.subr.bf16.mxu0 0
          %685 = vmatpush2.bf16.xpose.msra.mxu0 0
          %686 = vmatprep.subr.bf16.mxu0 0
          %687 = vmatpush2.bf16.xpose.msra.mxu0 0
          %688 = vmatprep.subr.bf16.mxu0 0
          %689 = vmatpush2.bf16.xpose.msra.mxu0 0
          %690 = vmatprep.subr.bf16.mxu0 0
          %691 = vmatpush2.bf16.xpose.msra.mxu0 0
          %692 = vmatprep.mubr.bf16.mxu0 0
          %693 = vmatmul.mubr.bf16.gmra.mxu0 %v655
          %v694 = vpop.f32.mrf.mxu0
          %v695 = vadd.f32 %v636, %v694
          %v696 = vpop.f32.mrf.mxu0
          %v697 = vpop.f32.mrf.mxu0
          %v698 = vpop.f32.mrf.mxu0
          %699 = vdwg.mxu0
          %v701 = vsel %vm653, %v622, 0
          %703 = vmatprep.subr.bf16.mxu0 0
          %704 = vmatpush1.bf16.xpose.msra.mxu0 0
          %705 = vmatprep.subr.bf16.mxu0 0
          %706 = vmatpush1.bf16.xpose.msra.mxu0 0
          %707 = vmatprep.subr.bf16.mxu0 0
          %708 = vmatpush1.bf16.xpose.msra.mxu0 0
          %709 = vmatprep.subr.bf16.mxu0 0
          %710 = vmatpush1.bf16.xpose.msra.mxu0 0
          %711 = vmatprep.subr.bf16.mxu0 0
          %712 = vmatpush1.bf16.xpose.msra.mxu0 0
          %713 = vmatprep.subr.bf16.mxu0 0
          %714 = vmatpush1.bf16.xpose.msra.mxu0 0
          %715 = vmatprep.subr.bf16.mxu0 0
          %716 = vmatpush1.bf16.xpose.msra.mxu0 0
          %717 = vmatprep.subr.bf16.mxu0 0
          %718 = vmatpush1.bf16.xpose.msra.mxu0 %v701
          %719 = vmatprep.subr.bf16.mxu0 0
          %720 = vmatpush2.bf16.xpose.msra.mxu0 0
          %721 = vmatprep.subr.bf16.mxu0 0
          %722 = vmatpush2.bf16.xpose.msra.mxu0 0
          %723 = vmatprep.subr.bf16.mxu0 0
          %724 = vmatpush2.bf16.xpose.msra.mxu0 0
          %725 = vmatprep.subr.bf16.mxu0 0
          %726 = vmatpush2.bf16.xpose.msra.mxu0 0
          %727 = vmatprep.subr.bf16.mxu0 0
          %728 = vmatpush2.bf16.xpose.msra.mxu0 0
          %729 = vmatprep.subr.bf16.mxu0 0
          %730 = vmatpush2.bf16.xpose.msra.mxu0 0
          %731 = vmatprep.subr.bf16.mxu0 0
          %732 = vmatpush2.bf16.xpose.msra.mxu0 0
          %733 = vmatprep.subr.bf16.mxu0 0
          %734 = vmatpush2.bf16.xpose.msra.mxu0 0
          %735 = vmatprep.mubr.bf16.mxu0 0
          %736 = vmatmul.mubr.bf16.gmra.mxu0 %v655
          %v737 = vpop.f32.mrf.mxu0
          %v738 = vadd.f32 %v640, %v737
          %v739 = vpop.f32.mrf.mxu0
          %v740 = vpop.f32.mrf.mxu0
          %v741 = vpop.f32.mrf.mxu0
          %742 = vdwg.mxu0
          %v744 = vsel %vm653, %v623, 0
          %746 = vmatprep.subr.bf16.mxu0 0
          %747 = vmatpush1.bf16.xpose.msra.mxu0 0
          %748 = vmatprep.subr.bf16.mxu0 0
          %749 = vmatpush1.bf16.xpose.msra.mxu0 0
          %750 = vmatprep.subr.bf16.mxu0 0
          %751 = vmatpush1.bf16.xpose.msra.mxu0 0
          %752 = vmatprep.subr.bf16.mxu0 0
          %753 = vmatpush1.bf16.xpose.msra.mxu0 0
          %754 = vmatprep.subr.bf16.mxu0 0
          %755 = vmatpush1.bf16.xpose.msra.mxu0 0
          %756 = vmatprep.subr.bf16.mxu0 0
          %757 = vmatpush1.bf16.xpose.msra.mxu0 0
          %758 = vmatprep.subr.bf16.mxu0 0
          %759 = vmatpush1.bf16.xpose.msra.mxu0 0
          %760 = vmatprep.subr.bf16.mxu0 0
          %761 = vmatpush1.bf16.xpose.msra.mxu0 %v744
          %762 = vmatprep.subr.bf16.mxu0 0
          %763 = vmatpush2.bf16.xpose.msra.mxu0 0
          %764 = vmatprep.subr.bf16.mxu0 0
          %765 = vmatpush2.bf16.xpose.msra.mxu0 0
          %766 = vmatprep.subr.bf16.mxu0 0
          %767 = vmatpush2.bf16.xpose.msra.mxu0 0
          %768 = vmatprep.subr.bf16.mxu0 0
          %769 = vmatpush2.bf16.xpose.msra.mxu0 0
          %770 = vmatprep.subr.bf16.mxu0 0
          %771 = vmatpush2.bf16.xpose.msra.mxu0 0
          %772 = vmatprep.subr.bf16.mxu0 0
          %773 = vmatpush2.bf16.xpose.msra.mxu0 0
          %774 = vmatprep.subr.bf16.mxu0 0
          %775 = vmatpush2.bf16.xpose.msra.mxu0 0
          %776 = vmatprep.subr.bf16.mxu0 0
          %777 = vmatpush2.bf16.xpose.msra.mxu0 0
          %778 = vmatprep.mubr.bf16.mxu0 0
          %779 = vmatmul.mubr.bf16.gmra.mxu0 %v655
          %v780 = vpop.f32.mrf.mxu0
          %v781 = vadd.f32 %v644, %v780
          %v782 = vpop.f32.mrf.mxu0
          %v783 = vpop.f32.mrf.mxu0
          %v784 = vpop.f32.mrf.mxu0
          %785 = vdwg.mxu0
          %v787 = vsel %vm653, %v624, 0
          %789 = vmatprep.subr.bf16.mxu0 0
          %790 = vmatpush1.bf16.xpose.msra.mxu0 0
          %791 = vmatprep.subr.bf16.mxu0 0
          %792 = vmatpush1.bf16.xpose.msra.mxu0 0
          %793 = vmatprep.subr.bf16.mxu0 0
          %794 = vmatpush1.bf16.xpose.msra.mxu0 0
          %795 = vmatprep.subr.bf16.mxu0 0
          %796 = vmatpush1.bf16.xpose.msra.mxu0 0
          %797 = vmatprep.subr.bf16.mxu0 0
          %798 = vmatpush1.bf16.xpose.msra.mxu0 0
          %799 = vmatprep.subr.bf16.mxu0 0
          %800 = vmatpush1.bf16.xpose.msra.mxu0 0
          %801 = vmatprep.subr.bf16.mxu0 0
          %802 = vmatpush1.bf16.xpose.msra.mxu0 0
          %803 = vmatprep.subr.bf16.mxu0 0
          %804 = vmatpush1.bf16.xpose.msra.mxu0 %v787
          %805 = vmatprep.subr.bf16.mxu0 0
          %806 = vmatpush2.bf16.xpose.msra.mxu0 0
          %807 = vmatprep.subr.bf16.mxu0 0
          %808 = vmatpush2.bf16.xpose.msra.mxu0 0
          %809 = vmatprep.subr.bf16.mxu0 0
          %810 = vmatpush2.bf16.xpose.msra.mxu0 0
          %811 = vmatprep.subr.bf16.mxu0 0
          %812 = vmatpush2.bf16.xpose.msra.mxu0 0
          %813 = vmatprep.subr.bf16.mxu0 0
          %814 = vmatpush2.bf16.xpose.msra.mxu0 0
          %815 = vmatprep.subr.bf16.mxu0 0
          %816 = vmatpush2.bf16.xpose.msra.mxu0 0
          %817 = vmatprep.subr.bf16.mxu0 0
          %818 = vmatpush2.bf16.xpose.msra.mxu0 0
          %819 = vmatprep.subr.bf16.mxu0 0
          %820 = vmatpush2.bf16.xpose.msra.mxu0 0
          %821 = vmatprep.mubr.bf16.mxu0 0
          %822 = vmatmul.mubr.bf16.gmra.mxu0 %v655
          %v823 = vpop.f32.mrf.mxu0
          %v824 = vadd.f32 %v648, %v823
          %v825 = vpop.f32.mrf.mxu0
          %v826 = vpop.f32.mrf.mxu0
          %v827 = vpop.f32.mrf.mxu0
          %828 = vdwg.mxu0
          %v829 = vld [vmem:[%s3] sm:$0xf]
          %v830 = vld [vmem:[%s3 + $0x4] sm:$0xf]
          %v831 = vld [vmem:[%s3 + $0x8] sm:$0xf]
          %v832 = vld [vmem:[%s3 + $0xc] sm:$0xf]
          %v833 = vld [vmem:[%s6] sm:$0x1]
          %v834 = vld [vmem:[%s6 + $0x1] sm:$0x1]
          %v835 = vld [vmem:[%s6 + $0x2] sm:$0x1]
          %v836 = vld [vmem:[%s6 + $0x3] sm:$0x1]
          %v841 = vlaneseq
          %v842 = vshrl.u32 %v841, 7
          %v843 = vsub.s32 0, %v842
          %v844 = vrot.slane %v833, %v843
          %v845 = vlaneseq
          %v846 = vshrl.u32 %v845, 7
          %v847 = vsub.s32 0, %v846
          %v848 = vrot.slane %v834, %v847
          %v849 = vlaneseq
          %v850 = vshrl.u32 %v849, 7
          %v851 = vsub.s32 0, %v850
          %v852 = vrot.slane %v835, %v851
          %v853 = vlaneseq
          %v854 = vshrl.u32 %v853, 7
          %v855 = vsub.s32 0, %v854
          %v856 = vrot.slane %v836, %v855
          %v862 = vsel %vm653, %v829, 0
          %864 = vmatprep.subr.bf16.mxu0 0
          %865 = vmatpush1.bf16.xpose.msra.mxu0 0
          %866 = vmatprep.subr.bf16.mxu0 0
          %867 = vmatpush1.bf16.xpose.msra.mxu0 0
          %868 = vmatprep.subr.bf16.mxu0 0
          %869 = vmatpush1.bf16.xpose.msra.mxu0 0
          %870 = vmatprep.subr.bf16.mxu0 0
          %871 = vmatpush1.bf16.xpose.msra.mxu0 0
          %872 = vmatprep.subr.bf16.mxu0 0
          %873 = vmatpush1.bf16.xpose.msra.mxu0 0
          %874 = vmatprep.subr.bf16.mxu0 0
          %875 = vmatpush1.bf16.xpose.msra.mxu0 0
          %876 = vmatprep.subr.bf16.mxu0 0
          %877 = vmatpush1.bf16.xpose.msra.mxu0 0
          %878 = vmatprep.subr.bf16.mxu0 0
          %879 = vmatpush1.bf16.xpose.msra.mxu0 %v862
          %880 = vmatprep.subr.bf16.mxu0 0
          %881 = vmatpush2.bf16.xpose.msra.mxu0 0
          %882 = vmatprep.subr.bf16.mxu0 0
          %883 = vmatpush2.bf16.xpose.msra.mxu0 0
          %884 = vmatprep.subr.bf16.mxu0 0
          %885 = vmatpush2.bf16.xpose.msra.mxu0 0
          %886 = vmatprep.subr.bf16.mxu0 0
          %887 = vmatpush2.bf16.xpose.msra.mxu0 0
          %888 = vmatprep.subr.bf16.mxu0 0
          %889 = vmatpush2.bf16.xpose.msra.mxu0 0
          %890 = vmatprep.subr.bf16.mxu0 0
          %891 = vmatpush2.bf16.xpose.msra.mxu0 0
          %892 = vmatprep.subr.bf16.mxu0 0
          %893 = vmatpush2.bf16.xpose.msra.mxu0 0
          %894 = vmatprep.subr.bf16.mxu0 0
          %895 = vmatpush2.bf16.xpose.msra.mxu0 0
          %896 = vmatprep.mubr.bf16.mxu0 0
          %897 = vmatmul.mubr.bf16.gmra.mxu0 %v655
          %v898 = vpop.f32.mrf.mxu0
          %v899 = vadd.f32 %v844, %v898
          %v900 = vpop.f32.mrf.mxu0
          %v901 = vpop.f32.mrf.mxu0
          %v902 = vpop.f32.mrf.mxu0
          %903 = vdwg.mxu0
          %v905 = vsel %vm653, %v830, 0
          %907 = vmatprep.subr.bf16.mxu0 0
          %908 = vmatpush1.bf16.xpose.msra.mxu0 0
          %909 = vmatprep.subr.bf16.mxu0 0
          %910 = vmatpush1.bf16.xpose.msra.mxu0 0
          %911 = vmatprep.subr.bf16.mxu0 0
          %912 = vmatpush1.bf16.xpose.msra.mxu0 0
          %913 = vmatprep.subr.bf16.mxu0 0
          %914 = vmatpush1.bf16.xpose.msra.mxu0 0
          %915 = vmatprep.subr.bf16.mxu0 0
          %916 = vmatpush1.bf16.xpose.msra.mxu0 0
          %917 = vmatprep.subr.bf16.mxu0 0
          %918 = vmatpush1.bf16.xpose.msra.mxu0 0
          %919 = vmatprep.subr.bf16.mxu0 0
          %920 = vmatpush1.bf16.xpose.msra.mxu0 0
          %921 = vmatprep.subr.bf16.mxu0 0
          %922 = vmatpush1.bf16.xpose.msra.mxu0 %v905
          %923 = vmatprep.subr.bf16.mxu0 0
          %924 = vmatpush2.bf16.xpose.msra.mxu0 0
          %925 = vmatprep.subr.bf16.mxu0 0
          %926 = vmatpush2.bf16.xpose.msra.mxu0 0
          %927 = vmatprep.subr.bf16.mxu0 0
          %928 = vmatpush2.bf16.xpose.msra.mxu0 0
          %929 = vmatprep.subr.bf16.mxu0 0
          %930 = vmatpush2.bf16.xpose.msra.mxu0 0
          %931 = vmatprep.subr.bf16.mxu0 0
          %932 = vmatpush2.bf16.xpose.msra.mxu0 0
          %933 = vmatprep.subr.bf16.mxu0 0
          %934 = vmatpush2.bf16.xpose.msra.mxu0 0
          %935 = vmatprep.subr.bf16.mxu0 0
          %936 = vmatpush2.bf16.xpose.msra.mxu0 0
          %937 = vmatprep.subr.bf16.mxu0 0
          %938 = vmatpush2.bf16.xpose.msra.mxu0 0
          %939 = vmatprep.mubr.bf16.mxu0 0
          %940 = vmatmul.mubr.bf16.gmra.mxu0 %v655
          %v941 = vpop.f32.mrf.mxu0
          %v942 = vadd.f32 %v848, %v941
          %v943 = vpop.f32.mrf.mxu0
          %v944 = vpop.f32.mrf.mxu0
          %v945 = vpop.f32.mrf.mxu0
          %946 = vdwg.mxu0
          %v948 = vsel %vm653, %v831, 0
          %950 = vmatprep.subr.bf16.mxu0 0
          %951 = vmatpush1.bf16.xpose.msra.mxu0 0
          %952 = vmatprep.subr.bf16.mxu0 0
          %953 = vmatpush1.bf16.xpose.msra.mxu0 0
          %954 = vmatprep.subr.bf16.mxu0 0
          %955 = vmatpush1.bf16.xpose.msra.mxu0 0
          %956 = vmatprep.subr.bf16.mxu0 0
          %957 = vmatpush1.bf16.xpose.msra.mxu0 0
          %958 = vmatprep.subr.bf16.mxu0 0
          %959 = vmatpush1.bf16.xpose.msra.mxu0 0
          %960 = vmatprep.subr.bf16.mxu0 0
          %961 = vmatpush1.bf16.xpose.msra.mxu0 0
          %962 = vmatprep.subr.bf16.mxu0 0
          %963 = vmatpush1.bf16.xpose.msra.mxu0 0
          %964 = vmatprep.subr.bf16.mxu0 0
          %965 = vmatpush1.bf16.xpose.msra.mxu0 %v948
          %966 = vmatprep.subr.bf16.mxu0 0
          %967 = vmatpush2.bf16.xpose.msra.mxu0 0
          %968 = vmatprep.subr.bf16.mxu0 0
          %969 = vmatpush2.bf16.xpose.msra.mxu0 0
          %970 = vmatprep.subr.bf16.mxu0 0
          %971 = vmatpush2.bf16.xpose.msra.mxu0 0
          %972 = vmatprep.subr.bf16.mxu0 0
          %973 = vmatpush2.bf16.xpose.msra.mxu0 0
          %974 = vmatprep.subr.bf16.mxu0 0
          %975 = vmatpush2.bf16.xpose.msra.mxu0 0
          %976 = vmatprep.subr.bf16.mxu0 0
          %977 = vmatpush2.bf16.xpose.msra.mxu0 0
          %978 = vmatprep.subr.bf16.mxu0 0
          %979 = vmatpush2.bf16.xpose.msra.mxu0 0
          %980 = vmatprep.subr.bf16.mxu0 0
          %981 = vmatpush2.bf16.xpose.msra.mxu0 0
          %982 = vmatprep.mubr.bf16.mxu0 0
          %983 = vmatmul.mubr.bf16.gmra.mxu0 %v655
          %v984 = vpop.f32.mrf.mxu0
          %v985 = vadd.f32 %v852, %v984
          %v986 = vpop.f32.mrf.mxu0
          %v987 = vpop.f32.mrf.mxu0
          %v988 = vpop.f32.mrf.mxu0
          %989 = vdwg.mxu0
          %v991 = vsel %vm653, %v832, 0
          %993 = vmatprep.subr.bf16.mxu0 0
          %994 = vmatpush1.bf16.xpose.msra.mxu0 0
          %995 = vmatprep.subr.bf16.mxu0 0
          %996 = vmatpush1.bf16.xpose.msra.mxu0 0
          %997 = vmatprep.subr.bf16.mxu0 0
          %998 = vmatpush1.bf16.xpose.msra.mxu0 0
          %999 = vmatprep.subr.bf16.mxu0 0
          %1000 = vmatpush1.bf16.xpose.msra.mxu0 0
          %1001 = vmatprep.subr.bf16.mxu0 0
          %1002 = vmatpush1.bf16.xpose.msra.mxu0 0
          %1003 = vmatprep.subr.bf16.mxu0 0
          %1004 = vmatpush1.bf16.xpose.msra.mxu0 0
          %1005 = vmatprep.subr.bf16.mxu0 0
          %1006 = vmatpush1.bf16.xpose.msra.mxu0 0
          %1007 = vmatprep.subr.bf16.mxu0 0
          %1008 = vmatpush1.bf16.xpose.msra.mxu0 %v991
          %1009 = vmatprep.subr.bf16.mxu0 0
          %1010 = vmatpush2.bf16.xpose.msra.mxu0 0
          %1011 = vmatprep.subr.bf16.mxu0 0
          %1012 = vmatpush2.bf16.xpose.msra.mxu0 0
          %1013 = vmatprep.subr.bf16.mxu0 0
          %1014 = vmatpush2.bf16.xpose.msra.mxu0 0
          %1015 = vmatprep.subr.bf16.mxu0 0
          %1016 = vmatpush2.bf16.xpose.msra.mxu0 0
          %1017 = vmatprep.subr.bf16.mxu0 0
          %1018 = vmatpush2.bf16.xpose.msra.mxu0 0
          %1019 = vmatprep.subr.bf16.mxu0 0
          %1020 = vmatpush2.bf16.xpose.msra.mxu0 0
          %1021 = vmatprep.subr.bf16.mxu0 0
          %1022 = vmatpush2.bf16.xpose.msra.mxu0 0
          %1023 = vmatprep.subr.bf16.mxu0 0
          %1024 = vmatpush2.bf16.xpose.msra.mxu0 0
          %1025 = vmatprep.mubr.bf16.mxu0 0
          %1026 = vmatmul.mubr.bf16.gmra.mxu0 %v655
          %v1027 = vpop.f32.mrf.mxu0
          %v1028 = vadd.f32 %v856, %v1027
          %v1029 = vpop.f32.mrf.mxu0
          %v1030 = vpop.f32.mrf.mxu0
          %v1031 = vpop.f32.mrf.mxu0
          %1032 = vdwg.mxu0
          %v1033 = vld [vmem:[%s4] sm:$0xf]
          %v1034 = vld [vmem:[%s4 + $0x4] sm:$0xf]
          %v1035 = vld [vmem:[%s4 + $0x8] sm:$0xf]
          %v1036 = vld [vmem:[%s4 + $0xc] sm:$0xf]
          %v1037 = vld [vmem:[%s7] sm:$0x1]
          %v1038 = vld [vmem:[%s7 + $0x1] sm:$0x1]
          %v1039 = vld [vmem:[%s7 + $0x2] sm:$0x1]
          %v1040 = vld [vmem:[%s7 + $0x3] sm:$0x1]
          %v1045 = vlaneseq
          %v1046 = vshrl.u32 %v1045, 7
          %v1047 = vsub.s32 0, %v1046
          %v1048 = vrot.slane %v1037, %v1047
          %v1049 = vlaneseq
          %v1050 = vshrl.u32 %v1049, 7
          %v1051 = vsub.s32 0, %v1050
          %v1052 = vrot.slane %v1038, %v1051
          %v1053 = vlaneseq
          %v1054 = vshrl.u32 %v1053, 7
          %v1055 = vsub.s32 0, %v1054
          %v1056 = vrot.slane %v1039, %v1055
          %v1057 = vlaneseq
          %v1058 = vshrl.u32 %v1057, 7
          %v1059 = vsub.s32 0, %v1058
          %v1060 = vrot.slane %v1040, %v1059
          %v1066 = vsel %vm653, %v1033, 0
          %1068 = vmatprep.subr.bf16.mxu0 0
          %1069 = vmatpush1.bf16.xpose.msra.mxu0 0
          %1070 = vmatprep.subr.bf16.mxu0 0
          %1071 = vmatpush1.bf16.xpose.msra.mxu0 0
          %1072 = vmatprep.subr.bf16.mxu0 0
          %1073 = vmatpush1.bf16.xpose.msra.mxu0 0
          %1074 = vmatprep.subr.bf16.mxu0 0
          %1075 = vmatpush1.bf16.xpose.msra.mxu0 0
          %1076 = vmatprep.subr.bf16.mxu0 0
          %1077 = vmatpush1.bf16.xpose.msra.mxu0 0
          %1078 = vmatprep.subr.bf16.mxu0 0
          %1079 = vmatpush1.bf16.xpose.msra.mxu0 0
          %1080 = vmatprep.subr.bf16.mxu0 0
          %1081 = vmatpush1.bf16.xpose.msra.mxu0 0
          %1082 = vmatprep.subr.bf16.mxu0 0
          %1083 = vmatpush1.bf16.xpose.msra.mxu0 %v1066
          %1084 = vmatprep.subr.bf16.mxu0 0
          %1085 = vmatpush2.bf16.xpose.msra.mxu0 0
          %1086 = vmatprep.subr.bf16.mxu0 0
          %1087 = vmatpush2.bf16.xpose.msra.mxu0 0
          %1088 = vmatprep.subr.bf16.mxu0 0
          %1089 = vmatpush2.bf16.xpose.msra.mxu0 0
          %1090 = vmatprep.subr.bf16.mxu0 0
          %1091 = vmatpush2.bf16.xpose.msra.mxu0 0
          %1092 = vmatprep.subr.bf16.mxu0 0
          %1093 = vmatpush2.bf16.xpose.msra.mxu0 0
          %1094 = vmatprep.subr.bf16.mxu0 0
          %1095 = vmatpush2.bf16.xpose.msra.mxu0 0
          %1096 = vmatprep.subr.bf16.mxu0 0
          %1097 = vmatpush2.bf16.xpose.msra.mxu0 0
          %1098 = vmatprep.subr.bf16.mxu0 0
          %1099 = vmatpush2.bf16.xpose.msra.mxu0 0
          %1100 = vmatprep.mubr.bf16.mxu0 0
          %1101 = vmatmul.mubr.bf16.gmra.mxu0 %v655
          %v1102 = vpop.f32.mrf.mxu0
          %v1103 = vadd.f32 %v1048, %v1102
          %v1104 = vpop.f32.mrf.mxu0
          %v1105 = vpop.f32.mrf.mxu0
          %v1106 = vpop.f32.mrf.mxu0
          %1107 = vdwg.mxu0
          %v1109 = vsel %vm653, %v1034, 0
          %1111 = vmatprep.subr.bf16.mxu0 0
          %1112 = vmatpush1.bf16.xpose.msra.mxu0 0
          %1113 = vmatprep.subr.bf16.mxu0 0
          %1114 = vmatpush1.bf16.xpose.msra.mxu0 0
          %1115 = vmatprep.subr.bf16.mxu0 0
          %1116 = vmatpush1.bf16.xpose.msra.mxu0 0
          %1117 = vmatprep.subr.bf16.mxu0 0
          %1118 = vmatpush1.bf16.xpose.msra.mxu0 0
          %1119 = vmatprep.subr.bf16.mxu0 0
          %1120 = vmatpush1.bf16.xpose.msra.mxu0 0
          %1121 = vmatprep.subr.bf16.mxu0 0
          %1122 = vmatpush1.bf16.xpose.msra.mxu0 0
          %1123 = vmatprep.subr.bf16.mxu0 0
          %1124 = vmatpush1.bf16.xpose.msra.mxu0 0
          %1125 = vmatprep.subr.bf16.mxu0 0
          %1126 = vmatpush1.bf16.xpose.msra.mxu0 %v1109
          %1127 = vmatprep.subr.bf16.mxu0 0
          %1128 = vmatpush2.bf16.xpose.msra.mxu0 0
          %1129 = vmatprep.subr.bf16.mxu0 0
          %1130 = vmatpush2.bf16.xpose.msra.mxu0 0
          %1131 = vmatprep.subr.bf16.mxu0 0
          %1132 = vmatpush2.bf16.xpose.msra.mxu0 0
          %1133 = vmatprep.subr.bf16.mxu0 0
          %1134 = vmatpush2.bf16.xpose.msra.mxu0 0
          %1135 = vmatprep.subr.bf16.mxu0 0
          %1136 = vmatpush2.bf16.xpose.msra.mxu0 0
          %1137 = vmatprep.subr.bf16.mxu0 0
          %1138 = vmatpush2.bf16.xpose.msra.mxu0 0
          %1139 = vmatprep.subr.bf16.mxu0 0
          %1140 = vmatpush2.bf16.xpose.msra.mxu0 0
          %1141 = vmatprep.subr.bf16.mxu0 0
          %1142 = vmatpush2.bf16.xpose.msra.mxu0 0
          %1143 = vmatprep.mubr.bf16.mxu0 0
          %1144 = vmatmul.mubr.bf16.gmra.mxu0 %v655
          %v1145 = vpop.f32.mrf.mxu0
          %v1146 = vadd.f32 %v1052, %v1145
          %v1147 = vpop.f32.mrf.mxu0
          %v1148 = vpop.f32.mrf.mxu0
          %v1149 = vpop.f32.mrf.mxu0
          %1150 = vdwg.mxu0
          %v1152 = vsel %vm653, %v1035, 0
          %1154 = vmatprep.subr.bf16.mxu0 0
          %1155 = vmatpush1.bf16.xpose.msra.mxu0 0
          %1156 = vmatprep.subr.bf16.mxu0 0
          %1157 = vmatpush1.bf16.xpose.msra.mxu0 0
          %1158 = vmatprep.subr.bf16.mxu0 0
          %1159 = vmatpush1.bf16.xpose.msra.mxu0 0
          %1160 = vmatprep.subr.bf16.mxu0 0
          %1161 = vmatpush1.bf16.xpose.msra.mxu0 0
          %1162 = vmatprep.subr.bf16.mxu0 0
          %1163 = vmatpush1.bf16.xpose.msra.mxu0 0
          %1164 = vmatprep.subr.bf16.mxu0 0
          %1165 = vmatpush1.bf16.xpose.msra.mxu0 0
          %1166 = vmatprep.subr.bf16.mxu0 0
          %1167 = vmatpush1.bf16.xpose.msra.mxu0 0
          %1168 = vmatprep.subr.bf16.mxu0 0
          %1169 = vmatpush1.bf16.xpose.msra.mxu0 %v1152
          %1170 = vmatprep.subr.bf16.mxu0 0
          %1171 = vmatpush2.bf16.xpose.msra.mxu0 0
          %1172 = vmatprep.subr.bf16.mxu0 0
          %1173 = vmatpush2.bf16.xpose.msra.mxu0 0
          %1174 = vmatprep.subr.bf16.mxu0 0
          %1175 = vmatpush2.bf16.xpose.msra.mxu0 0
          %1176 = vmatprep.subr.bf16.mxu0 0
          %1177 = vmatpush2.bf16.xpose.msra.mxu0 0
          %1178 = vmatprep.subr.bf16.mxu0 0
          %1179 = vmatpush2.bf16.xpose.msra.mxu0 0
          %1180 = vmatprep.subr.bf16.mxu0 0
          %1181 = vmatpush2.bf16.xpose.msra.mxu0 0
          %1182 = vmatprep.subr.bf16.mxu0 0
          %1183 = vmatpush2.bf16.xpose.msra.mxu0 0
          %1184 = vmatprep.subr.bf16.mxu0 0
          %1185 = vmatpush2.bf16.xpose.msra.mxu0 0
          %1186 = vmatprep.mubr.bf16.mxu0 0
          %1187 = vmatmul.mubr.bf16.gmra.mxu0 %v655
          %v1188 = vpop.f32.mrf.mxu0
          %v1189 = vadd.f32 %v1056, %v1188
          %v1190 = vpop.f32.mrf.mxu0
          %v1191 = vpop.f32.mrf.mxu0
          %v1192 = vpop.f32.mrf.mxu0
          %1193 = vdwg.mxu0
          %v1195 = vsel %vm653, %v1036, 0
          %1197 = vmatprep.subr.bf16.mxu0 0
          %1198 = vmatpush1.bf16.xpose.msra.mxu0 0
          %1199 = vmatprep.subr.bf16.mxu0 0
          %1200 = vmatpush1.bf16.xpose.msra.mxu0 0
          %1201 = vmatprep.subr.bf16.mxu0 0
          %1202 = vmatpush1.bf16.xpose.msra.mxu0 0
          %1203 = vmatprep.subr.bf16.mxu0 0
          %1204 = vmatpush1.bf16.xpose.msra.mxu0 0
          %1205 = vmatprep.subr.bf16.mxu0 0
          %1206 = vmatpush1.bf16.xpose.msra.mxu0 0
          %1207 = vmatprep.subr.bf16.mxu0 0
          %1208 = vmatpush1.bf16.xpose.msra.mxu0 0
          %1209 = vmatprep.subr.bf16.mxu0 0
          %1210 = vmatpush1.bf16.xpose.msra.mxu0 0
          %1211 = vmatprep.subr.bf16.mxu0 0
          %1212 = vmatpush1.bf16.xpose.msra.mxu0 %v1195
          %1213 = vmatprep.subr.bf16.mxu0 0
          %1214 = vmatpush2.bf16.xpose.msra.mxu0 0
          %1215 = vmatprep.subr.bf16.mxu0 0
          %1216 = vmatpush2.bf16.xpose.msra.mxu0 0
          %1217 = vmatprep.subr.bf16.mxu0 0
          %1218 = vmatpush2.bf16.xpose.msra.mxu0 0
          %1219 = vmatprep.subr.bf16.mxu0 0
          %1220 = vmatpush2.bf16.xpose.msra.mxu0 0
          %1221 = vmatprep.subr.bf16.mxu0 0
          %1222 = vmatpush2.bf16.xpose.msra.mxu0 0
          %1223 = vmatprep.subr.bf16.mxu0 0
          %1224 = vmatpush2.bf16.xpose.msra.mxu0 0
          %1225 = vmatprep.subr.bf16.mxu0 0
          %1226 = vmatpush2.bf16.xpose.msra.mxu0 0
          %1227 = vmatprep.subr.bf16.mxu0 0
          %1228 = vmatpush2.bf16.xpose.msra.mxu0 0
          %1229 = vmatprep.mubr.bf16.mxu0 0
          %1230 = vmatmul.mubr.bf16.gmra.mxu0 %v655
          %v1231 = vpop.f32.mrf.mxu0
          %v1232 = vadd.f32 %v1060, %v1231
          %v1233 = vpop.f32.mrf.mxu0
          %v1234 = vpop.f32.mrf.mxu0
          %v1235 = vpop.f32.mrf.mxu0
          %1236 = vdwg.mxu0
          %v1237 = vpack.c.bf16 %v695, %v695
          %v1238 = vpack.c.bf16 %v738, %v738
          %v1239 = vpack.c.bf16 %v781, %v781
          %v1240 = vpack.c.bf16 %v824, %v824
          %v1241 = vpack.c.bf16 %v899, %v899
          %v1242 = vpack.c.bf16 %v942, %v942
          %v1243 = vpack.c.bf16 %v985, %v985
          %v1244 = vpack.c.bf16 %v1028, %v1028
          %vm1245 = vcmask 64512
          %v1247 = vsel %vm1245, %v1237, 0
          %v1250 = vsel %vm1245, %v1241, 0
          %1252 = vmatprep.subr.bf16.mxu0 0
          %1253 = vmatpush1.bf16.xpose.msra.mxu0 0
          %1254 = vmatprep.subr.bf16.mxu0 0
          %1255 = vmatpush1.bf16.xpose.msra.mxu0 0
          %1256 = vmatprep.subr.bf16.mxu0 0
          %1257 = vmatpush1.bf16.xpose.msra.mxu0 0
          %1258 = vmatprep.subr.bf16.mxu0 0
          %1259 = vmatpush1.bf16.xpose.msra.mxu0 0
          %1260 = vmatprep.subr.bf16.mxu0 0
          %1261 = vmatpush1.bf16.xpose.msra.mxu0 0
          %1262 = vmatprep.subr.bf16.mxu0 0
          %1263 = vmatpush1.bf16.xpose.msra.mxu0 0
          %1264 = vmatprep.subr.bf16.mxu0 0
          %1265 = vmatpush1.bf16.xpose.msra.mxu0 0
          %1266 = vmatprep.subr.bf16.mxu0 0
          %1267 = vmatpush1.bf16.xpose.msra.mxu0 %v1250
          %1268 = vmatprep.subr.bf16.mxu0 0
          %1269 = vmatpush2.bf16.xpose.msra.mxu0 0
          %1270 = vmatprep.subr.bf16.mxu0 0
          %1271 = vmatpush2.bf16.xpose.msra.mxu0 0
          %1272 = vmatprep.subr.bf16.mxu0 0
          %1273 = vmatpush2.bf16.xpose.msra.mxu0 0
          %1274 = vmatprep.subr.bf16.mxu0 0
          %1275 = vmatpush2.bf16.xpose.msra.mxu0 0
          %1276 = vmatprep.subr.bf16.mxu0 0
          %1277 = vmatpush2.bf16.xpose.msra.mxu0 0
          %1278 = vmatprep.subr.bf16.mxu0 0
          %1279 = vmatpush2.bf16.xpose.msra.mxu0 0
          %1280 = vmatprep.subr.bf16.mxu0 0
          %1281 = vmatpush2.bf16.xpose.msra.mxu0 0
          %1282 = vmatprep.subr.bf16.mxu0 0
          %1283 = vmatpush2.bf16.xpose.msra.mxu0 0
          %1284 = vmatprep.mubr.bf16.mxu0 0
          %1285 = vmatmul.mubr.bf16.gmra.mxu0 %v1247
          %v1286 = vpop.f32.mrf.mxu0
          %v1287 = vadd.f32 0.0, %v1286
          %v1288 = vpop.f32.mrf.mxu0
          %v1289 = vpop.f32.mrf.mxu0
          %v1290 = vpop.f32.mrf.mxu0
          %1291 = vdwg.mxu0
          %v1293 = vsel %vm1245, %v1238, 0
          %v1296 = vsel %vm1245, %v1242, 0
          %1298 = vmatprep.subr.bf16.mxu0 0
          %1299 = vmatpush1.bf16.xpose.msra.mxu0 0
          %1300 = vmatprep.subr.bf16.mxu0 0
          %1301 = vmatpush1.bf16.xpose.msra.mxu0 0
          %1302 = vmatprep.subr.bf16.mxu0 0
          %1303 = vmatpush1.bf16.xpose.msra.mxu0 0
          %1304 = vmatprep.subr.bf16.mxu0 0
          %1305 = vmatpush1.bf16.xpose.msra.mxu0 0
          %1306 = vmatprep.subr.bf16.mxu0 0
          %1307 = vmatpush1.bf16.xpose.msra.mxu0 0
          %1308 = vmatprep.subr.bf16.mxu0 0
          %1309 = vmatpush1.bf16.xpose.msra.mxu0 0
          %1310 = vmatprep.subr.bf16.mxu0 0
          %1311 = vmatpush1.bf16.xpose.msra.mxu0 0
          %1312 = vmatprep.subr.bf16.mxu0 0
          %1313 = vmatpush1.bf16.xpose.msra.mxu0 %v1296
          %1314 = vmatprep.subr.bf16.mxu0 0
          %1315 = vmatpush2.bf16.xpose.msra.mxu0 0
          %1316 = vmatprep.subr.bf16.mxu0 0
          %1317 = vmatpush2.bf16.xpose.msra.mxu0 0
          %1318 = vmatprep.subr.bf16.mxu0 0
          %1319 = vmatpush2.bf16.xpose.msra.mxu0 0
          %1320 = vmatprep.subr.bf16.mxu0 0
          %1321 = vmatpush2.bf16.xpose.msra.mxu0 0
          %1322 = vmatprep.subr.bf16.mxu0 0
          %1323 = vmatpush2.bf16.xpose.msra.mxu0 0
          %1324 = vmatprep.subr.bf16.mxu0 0
          %1325 = vmatpush2.bf16.xpose.msra.mxu0 0
          %1326 = vmatprep.subr.bf16.mxu0 0
          %1327 = vmatpush2.bf16.xpose.msra.mxu0 0
          %1328 = vmatprep.subr.bf16.mxu0 0
          %1329 = vmatpush2.bf16.xpose.msra.mxu0 0
          %1330 = vmatprep.mubr.bf16.mxu0 0
          %1331 = vmatmul.mubr.bf16.gmra.mxu0 %v1293
          %v1332 = vpop.f32.mrf.mxu0
          %v1333 = vadd.f32 0.0, %v1332
          %v1334 = vpop.f32.mrf.mxu0
          %v1335 = vpop.f32.mrf.mxu0
          %v1336 = vpop.f32.mrf.mxu0
          %1337 = vdwg.mxu0
          %v1339 = vsel %vm1245, %v1239, 0
          %v1342 = vsel %vm1245, %v1243, 0
          %1344 = vmatprep.subr.bf16.mxu0 0
          %1345 = vmatpush1.bf16.xpose.msra.mxu0 0
          %1346 = vmatprep.subr.bf16.mxu0 0
          %1347 = vmatpush1.bf16.xpose.msra.mxu0 0
          %1348 = vmatprep.subr.bf16.mxu0 0
          %1349 = vmatpush1.bf16.xpose.msra.mxu0 0
          %1350 = vmatprep.subr.bf16.mxu0 0
          %1351 = vmatpush1.bf16.xpose.msra.mxu0 0
          %1352 = vmatprep.subr.bf16.mxu0 0
          %1353 = vmatpush1.bf16.xpose.msra.mxu0 0
          %1354 = vmatprep.subr.bf16.mxu0 0
          %1355 = vmatpush1.bf16.xpose.msra.mxu0 0
          %1356 = vmatprep.subr.bf16.mxu0 0
          %1357 = vmatpush1.bf16.xpose.msra.mxu0 0
          %1358 = vmatprep.subr.bf16.mxu0 0
          %1359 = vmatpush1.bf16.xpose.msra.mxu0 %v1342
          %1360 = vmatprep.subr.bf16.mxu0 0
          %1361 = vmatpush2.bf16.xpose.msra.mxu0 0
          %1362 = vmatprep.subr.bf16.mxu0 0
          %1363 = vmatpush2.bf16.xpose.msra.mxu0 0
          %1364 = vmatprep.subr.bf16.mxu0 0
          %1365 = vmatpush2.bf16.xpose.msra.mxu0 0
          %1366 = vmatprep.subr.bf16.mxu0 0
          %1367 = vmatpush2.bf16.xpose.msra.mxu0 0
          %1368 = vmatprep.subr.bf16.mxu0 0
          %1369 = vmatpush2.bf16.xpose.msra.mxu0 0
          %1370 = vmatprep.subr.bf16.mxu0 0
          %1371 = vmatpush2.bf16.xpose.msra.mxu0 0
          %1372 = vmatprep.subr.bf16.mxu0 0
          %1373 = vmatpush2.bf16.xpose.msra.mxu0 0
          %1374 = vmatprep.subr.bf16.mxu0 0
          %1375 = vmatpush2.bf16.xpose.msra.mxu0 0
          %1376 = vmatprep.mubr.bf16.mxu0 0
          %1377 = vmatmul.mubr.bf16.gmra.mxu0 %v1339
          %v1378 = vpop.f32.mrf.mxu0
          %v1379 = vadd.f32 0.0, %v1378
          %v1380 = vpop.f32.mrf.mxu0
          %v1381 = vpop.f32.mrf.mxu0
          %v1382 = vpop.f32.mrf.mxu0
          %1383 = vdwg.mxu0
          %v1385 = vsel %vm1245, %v1240, 0
          %v1388 = vsel %vm1245, %v1244, 0
          %1390 = vmatprep.subr.bf16.mxu0 0
          %1391 = vmatpush1.bf16.xpose.msra.mxu0 0
          %1392 = vmatprep.subr.bf16.mxu0 0
          %1393 = vmatpush1.bf16.xpose.msra.mxu0 0
          %1394 = vmatprep.subr.bf16.mxu0 0
          %1395 = vmatpush1.bf16.xpose.msra.mxu0 0
          %1396 = vmatprep.subr.bf16.mxu0 0
          %1397 = vmatpush1.bf16.xpose.msra.mxu0 0
          %1398 = vmatprep.subr.bf16.mxu0 0
          %1399 = vmatpush1.bf16.xpose.msra.mxu0 0
          %1400 = vmatprep.subr.bf16.mxu0 0
          %1401 = vmatpush1.bf16.xpose.msra.mxu0 0
          %1402 = vmatprep.subr.bf16.mxu0 0
          %1403 = vmatpush1.bf16.xpose.msra.mxu0 0
          %1404 = vmatprep.subr.bf16.mxu0 0
          %1405 = vmatpush1.bf16.xpose.msra.mxu0 %v1388
          %1406 = vmatprep.subr.bf16.mxu0 0
          %1407 = vmatpush2.bf16.xpose.msra.mxu0 0
          %1408 = vmatprep.subr.bf16.mxu0 0
          %1409 = vmatpush2.bf16.xpose.msra.mxu0 0
          %1410 = vmatprep.subr.bf16.mxu0 0
          %1411 = vmatpush2.bf16.xpose.msra.mxu0 0
          %1412 = vmatprep.subr.bf16.mxu0 0
          %1413 = vmatpush2.bf16.xpose.msra.mxu0 0
          %1414 = vmatprep.subr.bf16.mxu0 0
          %1415 = vmatpush2.bf16.xpose.msra.mxu0 0
          %1416 = vmatprep.subr.bf16.mxu0 0
          %1417 = vmatpush2.bf16.xpose.msra.mxu0 0
          %1418 = vmatprep.subr.bf16.mxu0 0
          %1419 = vmatpush2.bf16.xpose.msra.mxu0 0
          %1420 = vmatprep.subr.bf16.mxu0 0
          %1421 = vmatpush2.bf16.xpose.msra.mxu0 0
          %1422 = vmatprep.mubr.bf16.mxu0 0
          %1423 = vmatmul.mubr.bf16.gmra.mxu0 %v1385
          %v1424 = vpop.f32.mrf.mxu0
          %v1425 = vadd.f32 0.0, %v1424
          %v1426 = vpop.f32.mrf.mxu0
          %v1427 = vpop.f32.mrf.mxu0
          %v1428 = vpop.f32.mrf.mxu0
          %1429 = vdwg.mxu0
          %v1430 = vmul.f32 %v1287, 0.35355338
          %v1431 = vmul.f32 %v1333, 0.35355338
          %v1432 = vmul.f32 %v1379, 0.35355338
          %v1433 = vmul.f32 %v1425, 0.35355338
          %v1434 = vadd.f32 %v1430, %v611
          %v1435 = vadd.f32 %v1431, %v611
          %v1436 = vadd.f32 %v1432, %v611
          %v1437 = vadd.f32 %v1433, %v611
          %v1438 = vsel %vm1245, %v1434, -inf
          %1439 = vmax.xlane.f32.xlu0 %v1438
          %v1440 = vpop.xlane.xlu0 %1439
          %v1441 = vsel %vm1245, %v1435, -inf
          %1442 = vmax.xlane.f32.xlu0 %v1441
          %v1443 = vpop.xlane.xlu0 %1442
          %v1444 = vsel %vm1245, %v1436, -inf
          %1445 = vmax.xlane.f32.xlu0 %v1444
          %v1446 = vpop.xlane.xlu0 %1445
          %v1447 = vsel %vm1245, %v1437, -inf
          %1448 = vmax.xlane.f32.xlu0 %v1447
          %v1449 = vpop.xlane.xlu0 %1448
          %v1450 = vsub.f32 %v1434, %v1440
          %v1451 = vsub.f32 %v1435, %v1443
          %v1452 = vsub.f32 %v1436, %v1446
          %v1453 = vsub.f32 %v1437, %v1449
          %v1454 = vmul.f32 %v1450, 1.442695
          %v1455 = vpow.pop %v1454
          %v1456 = vmul.f32 %v1451, 1.442695
          %v1457 = vpow.pop %v1456
          %v1458 = vmul.f32 %v1452, 1.442695
          %v1459 = vpow.pop %v1458
          %v1460 = vmul.f32 %v1453, 1.442695
          %v1461 = vpow.pop %v1460
          %v1462 = vsel %vm1245, %v1455, 0.0
          %1463 = vadd.xlane.f32.xlu0 %v1462
          %v1464 = vpop.xlane.xlu0 %1463
          %v1465 = vsel %vm1245, %v1457, 0.0
          %1466 = vadd.xlane.f32.xlu0 %v1465
          %v1467 = vpop.xlane.xlu0 %1466
          %v1468 = vsel %vm1245, %v1459, 0.0
          %1469 = vadd.xlane.f32.xlu0 %v1468
          %v1470 = vpop.xlane.xlu0 %1469
          %v1471 = vsel %vm1245, %v1461, 0.0
          %1472 = vadd.xlane.f32.xlu0 %v1471
          %v1473 = vpop.xlane.xlu0 %1472
          %v1474 = vrcp.pop %v1464
          %v1475 = vmul.f32 %v1455, %v1474
          %v1476 = vrcp.pop %v1467
          %v1477 = vmul.f32 %v1457, %v1476
          %v1478 = vrcp.pop %v1470
          %v1479 = vmul.f32 %v1459, %v1478
          %v1480 = vrcp.pop %v1473
          %v1481 = vmul.f32 %v1461, %v1480
          %v1482 = vpack.c.bf16 %v1475, %v1475
          %v1483 = vpack.c.bf16 %v1477, %v1477
          %v1484 = vpack.c.bf16 %v1479, %v1479
          %v1485 = vpack.c.bf16 %v1481, %v1481
          %v1486 = vpack.c.bf16 %v1103, %v1103
          %v1487 = vpack.c.bf16 %v1146, %v1146
          %v1488 = vpack.c.bf16 %v1189, %v1189
          %v1489 = vpack.c.bf16 %v1232, %v1232
          %v1491 = vsel %vm1245, %v1482, 0
          %vm1493 = vcmask 1043456
          %v1495 = vsel %vm1493, %v1486, 0
          %1497 = vmatprep.subr.bf16.mxu0 0
          %1498 = vmatpush1.bf16.msra.mxu0 0
          %1499 = vmatprep.subr.bf16.mxu0 0
          %1500 = vmatpush1.bf16.msra.mxu0 0
          %1501 = vmatprep.subr.bf16.mxu0 0
          %1502 = vmatpush1.bf16.msra.mxu0 0
          %1503 = vmatprep.subr.bf16.mxu0 0
          %1504 = vmatpush1.bf16.msra.mxu0 0
          %1505 = vmatprep.subr.bf16.mxu0 0
          %1506 = vmatpush1.bf16.msra.mxu0 0
          %1507 = vmatprep.subr.bf16.mxu0 0
          %1508 = vmatpush1.bf16.msra.mxu0 0
          %1509 = vmatprep.subr.bf16.mxu0 0
          %1510 = vmatpush1.bf16.msra.mxu0 0
          %1511 = vmatprep.subr.bf16.mxu0 0
          %1512 = vmatpush1.bf16.msra.mxu0 %v1495
          %1513 = vmatprep.subr.bf16.mxu0 0
          %1514 = vmatpush2.bf16.msra.mxu0 0
          %1515 = vmatprep.subr.bf16.mxu0 0
          %1516 = vmatpush2.bf16.msra.mxu0 0
          %1517 = vmatprep.subr.bf16.mxu0 0
          %1518 = vmatpush2.bf16.msra.mxu0 0
          %1519 = vmatprep.subr.bf16.mxu0 0
          %1520 = vmatpush2.bf16.msra.mxu0 0
          %1521 = vmatprep.subr.bf16.mxu0 0
          %1522 = vmatpush2.bf16.msra.mxu0 0
          %1523 = vmatprep.subr.bf16.mxu0 0
          %1524 = vmatpush2.bf16.msra.mxu0 0
          %1525 = vmatprep.subr.bf16.mxu0 0
          %1526 = vmatpush2.bf16.msra.mxu0 0
          %1527 = vmatprep.subr.bf16.mxu0 0
          %1528 = vmatpush2.bf16.msra.mxu0 0
          %1529 = vmatprep.mubr.bf16.mxu0 0
          %1530 = vmatmul.mubr.bf16.gmra.mxu0 %v1491
          %v1531 = vpop.f32.mrf.mxu0
          %v1532 = vadd.f32 0.0, %v1531
          %v1533 = vpop.f32.mrf.mxu0
          %v1534 = vpop.f32.mrf.mxu0
          %v1535 = vpop.f32.mrf.mxu0
          %1536 = vdwg.mxu0
          %v1538 = vsel %vm1245, %v1483, 0
          %v1541 = vsel %vm1493, %v1487, 0
          %1543 = vmatprep.subr.bf16.mxu0 0
          %1544 = vmatpush1.bf16.msra.mxu0 0
          %1545 = vmatprep.subr.bf16.mxu0 0
          %1546 = vmatpush1.bf16.msra.mxu0 0
          %1547 = vmatprep.subr.bf16.mxu0 0
          %1548 = vmatpush1.bf16.msra.mxu0 0
          %1549 = vmatprep.subr.bf16.mxu0 0
          %1550 = vmatpush1.bf16.msra.mxu0 0
          %1551 = vmatprep.subr.bf16.mxu0 0
          %1552 = vmatpush1.bf16.msra.mxu0 0
          %1553 = vmatprep.subr.bf16.mxu0 0
          %1554 = vmatpush1.bf16.msra.mxu0 0
          %1555 = vmatprep.subr.bf16.mxu0 0
          %1556 = vmatpush1.bf16.msra.mxu0 0
          %1557 = vmatprep.subr.bf16.mxu0 0
          %1558 = vmatpush1.bf16.msra.mxu0 %v1541
          %1559 = vmatprep.subr.bf16.mxu0 0
          %1560 = vmatpush2.bf16.msra.mxu0 0
          %1561 = vmatprep.subr.bf16.mxu0 0
          %1562 = vmatpush2.bf16.msra.mxu0 0
          %1563 = vmatprep.subr.bf16.mxu0 0
          %1564 = vmatpush2.bf16.msra.mxu0 0
          %1565 = vmatprep.subr.bf16.mxu0 0
          %1566 = vmatpush2.bf16.msra.mxu0 0
          %1567 = vmatprep.subr.bf16.mxu0 0
          %1568 = vmatpush2.bf16.msra.mxu0 0
          %1569 = vmatprep.subr.bf16.mxu0 0
          %1570 = vmatpush2.bf16.msra.mxu0 0
          %1571 = vmatprep.subr.bf16.mxu0 0
          %1572 = vmatpush2.bf16.msra.mxu0 0
          %1573 = vmatprep.subr.bf16.mxu0 0
          %1574 = vmatpush2.bf16.msra.mxu0 0
          %1575 = vmatprep.mubr.bf16.mxu0 0
          %1576 = vmatmul.mubr.bf16.gmra.mxu0 %v1538
          %v1577 = vpop.f32.mrf.mxu0
          %v1578 = vadd.f32 0.0, %v1577
          %v1579 = vpop.f32.mrf.mxu0
          %v1580 = vpop.f32.mrf.mxu0
          %v1581 = vpop.f32.mrf.mxu0
          %1582 = vdwg.mxu0
          %v1584 = vsel %vm1245, %v1484, 0
          %v1587 = vsel %vm1493, %v1488, 0
          %1589 = vmatprep.subr.bf16.mxu0 0
          %1590 = vmatpush1.bf16.msra.mxu0 0
          %1591 = vmatprep.subr.bf16.mxu0 0
          %1592 = vmatpush1.bf16.msra.mxu0 0
          %1593 = vmatprep.subr.bf16.mxu0 0
          %1594 = vmatpush1.bf16.msra.mxu0 0
          %1595 = vmatprep.subr.bf16.mxu0 0
          %1596 = vmatpush1.bf16.msra.mxu0 0
          %1597 = vmatprep.subr.bf16.mxu0 0
          %1598 = vmatpush1.bf16.msra.mxu0 0
          %1599 = vmatprep.subr.bf16.mxu0 0
          %1600 = vmatpush1.bf16.msra.mxu0 0
          %1601 = vmatprep.subr.bf16.mxu0 0
          %1602 = vmatpush1.bf16.msra.mxu0 0
          %1603 = vmatprep.subr.bf16.mxu0 0
          %1604 = vmatpush1.bf16.msra.mxu0 %v1587
          %1605 = vmatprep.subr.bf16.mxu0 0
          %1606 = vmatpush2.bf16.msra.mxu0 0
          %1607 = vmatprep.subr.bf16.mxu0 0
          %1608 = vmatpush2.bf16.msra.mxu0 0
          %1609 = vmatprep.subr.bf16.mxu0 0
          %1610 = vmatpush2.bf16.msra.mxu0 0
          %1611 = vmatprep.subr.bf16.mxu0 0
          %1612 = vmatpush2.bf16.msra.mxu0 0
          %1613 = vmatprep.subr.bf16.mxu0 0
          %1614 = vmatpush2.bf16.msra.mxu0 0
          %1615 = vmatprep.subr.bf16.mxu0 0
          %1616 = vmatpush2.bf16.msra.mxu0 0
          %1617 = vmatprep.subr.bf16.mxu0 0
          %1618 = vmatpush2.bf16.msra.mxu0 0
          %1619 = vmatprep.subr.bf16.mxu0 0
          %1620 = vmatpush2.bf16.msra.mxu0 0
          %1621 = vmatprep.mubr.bf16.mxu0 0
          %1622 = vmatmul.mubr.bf16.gmra.mxu0 %v1584
          %v1623 = vpop.f32.mrf.mxu0
          %v1624 = vadd.f32 0.0, %v1623
          %v1625 = vpop.f32.mrf.mxu0
          %v1626 = vpop.f32.mrf.mxu0
          %v1627 = vpop.f32.mrf.mxu0
          %1628 = vdwg.mxu0
          %v1630 = vsel %vm1245, %v1485, 0
          %v1633 = vsel %vm1493, %v1489, 0
          %1635 = vmatprep.subr.bf16.mxu0 0
          %1636 = vmatpush1.bf16.msra.mxu0 0
          %1637 = vmatprep.subr.bf16.mxu0 0
          %1638 = vmatpush1.bf16.msra.mxu0 0
          %1639 = vmatprep.subr.bf16.mxu0 0
          %1640 = vmatpush1.bf16.msra.mxu0 0
          %1641 = vmatprep.subr.bf16.mxu0 0
          %1642 = vmatpush1.bf16.msra.mxu0 0
          %1643 = vmatprep.subr.bf16.mxu0 0
          %1644 = vmatpush1.bf16.msra.mxu0 0
          %1645 = vmatprep.subr.bf16.mxu0 0
          %1646 = vmatpush1.bf16.msra.mxu0 0
          %1647 = vmatprep.subr.bf16.mxu0 0
          %1648 = vmatpush1.bf16.msra.mxu0 0
          %1649 = vmatprep.subr.bf16.mxu0 0
          %1650 = vmatpush1.bf16.msra.mxu0 %v1633
          %1651 = vmatprep.subr.bf16.mxu0 0
          %1652 = vmatpush2.bf16.msra.mxu0 0
          %1653 = vmatprep.subr.bf16.mxu0 0
          %1654 = vmatpush2.bf16.msra.mxu0 0
          %1655 = vmatprep.subr.bf16.mxu0 0
          %1656 = vmatpush2.bf16.msra.mxu0 0
          %1657 = vmatprep.subr.bf16.mxu0 0
          %1658 = vmatpush2.bf16.msra.mxu0 0
          %1659 = vmatprep.subr.bf16.mxu0 0
          %1660 = vmatpush2.bf16.msra.mxu0 0
          %1661 = vmatprep.subr.bf16.mxu0 0
          %1662 = vmatpush2.bf16.msra.mxu0 0
          %1663 = vmatprep.subr.bf16.mxu0 0
          %1664 = vmatpush2.bf16.msra.mxu0 0
          %1665 = vmatprep.subr.bf16.mxu0 0
          %1666 = vmatpush2.bf16.msra.mxu0 0
          %1667 = vmatprep.mubr.bf16.mxu0 0
          %1668 = vmatmul.mubr.bf16.gmra.mxu0 %v1630
          %v1669 = vpop.f32.mrf.mxu0
          %v1670 = vadd.f32 0.0, %v1669
          %v1671 = vpop.f32.mrf.mxu0
          %v1672 = vpop.f32.mrf.mxu0
          %v1673 = vpop.f32.mrf.mxu0
          %1674 = vdwg.mxu0
          %v1675 = vpack.c.bf16 %v1532, %v1532
          %v1676 = vpack.c.bf16 %v1578, %v1578
          %v1677 = vpack.c.bf16 %v1624, %v1624
          %v1678 = vpack.c.bf16 %v1670, %v1670
          %v1679 = vld [vmem:[%s8] sm:$0xf]
          %v1680 = vld [vmem:[%s8 + $0x4] sm:$0xf]
          %v1681 = vld [vmem:[%s8 + $0x8] sm:$0xf]
          %v1682 = vld [vmem:[%s8 + $0xc] sm:$0xf]
          %v1683 = vld [vmem:[%s8 + $0x10] sm:$0xf]
          %v1684 = vld [vmem:[%s8 + $0x14] sm:$0xf]
          %v1685 = vld [vmem:[%s8 + $0x18] sm:$0xf]
          %v1686 = vld [vmem:[%s8 + $0x1c] sm:$0xf]
          %v1687 = vld [vmem:[%s8 + $0x20] sm:$0xf]
          %v1688 = vld [vmem:[%s8 + $0x24] sm:$0xf]
          %v1689 = vld [vmem:[%s8 + $0x28] sm:$0xf]
          %v1690 = vld [vmem:[%s8 + $0x2c] sm:$0xf]
          %v1691 = vld [vmem:[%s8 + $0x30] sm:$0xf]
          %v1692 = vld [vmem:[%s8 + $0x34] sm:$0xf]
          %v1693 = vld [vmem:[%s8 + $0x38] sm:$0xf]
          %v1694 = vld [vmem:[%s8 + $0x3c] sm:$0xf]
          %v1699 = vunpack.c.l.b16 %v1679
          %v1700 = vunpack.c.l.b16 %v1680
          %v1701 = vunpack.c.l.b16 %v1681
          %v1702 = vunpack.c.l.b16 %v1682
          %v1703 = vpack.c.b16 %v1700, %v1699
          %v1704 = vpack.c.b16 %v1702, %v1701
          %v1706 = vsel %vm1245, %v1675, 0
          %v1709 = vsel %vm1245, %v1703, 0
          %v1712 = vsel %vm1245, %v1704, 0
          %1714 = vmatprep.subr.bf16.mxu0 0
          %1715 = vmatpush1.bf16.xpose.msra.mxu0 0
          %1716 = vmatprep.subr.bf16.mxu0 0
          %1717 = vmatpush1.bf16.xpose.msra.mxu0 0
          %1718 = vmatprep.subr.bf16.mxu0 0
          %1719 = vmatpush1.bf16.xpose.msra.mxu0 0
          %1720 = vmatprep.subr.bf16.mxu0 0
          %1721 = vmatpush1.bf16.xpose.msra.mxu0 0
          %1722 = vmatprep.subr.bf16.mxu0 0
          %1723 = vmatpush1.bf16.xpose.msra.mxu0 0
          %1724 = vmatprep.subr.bf16.mxu0 0
          %1725 = vmatpush1.bf16.xpose.msra.mxu0 0
          %1726 = vmatprep.subr.bf16.mxu0 0
          %1727 = vmatpush1.bf16.xpose.msra.mxu0 %v1712
          %1728 = vmatprep.subr.bf16.mxu0 0
          %1729 = vmatpush1.bf16.xpose.msra.mxu0 %v1709
          %1730 = vmatprep.subr.bf16.mxu0 0
          %1731 = vmatpush2.bf16.xpose.msra.mxu0 0
          %1732 = vmatprep.subr.bf16.mxu0 0
          %1733 = vmatpush2.bf16.xpose.msra.mxu0 0
          %1734 = vmatprep.subr.bf16.mxu0 0
          %1735 = vmatpush2.bf16.xpose.msra.mxu0 0
          %1736 = vmatprep.subr.bf16.mxu0 0
          %1737 = vmatpush2.bf16.xpose.msra.mxu0 0
          %1738 = vmatprep.subr.bf16.mxu0 0
          %1739 = vmatpush2.bf16.xpose.msra.mxu0 0
          %1740 = vmatprep.subr.bf16.mxu0 0
          %1741 = vmatpush2.bf16.xpose.msra.mxu0 0
          %1742 = vmatprep.subr.bf16.mxu0 0
          %1743 = vmatpush2.bf16.xpose.msra.mxu0 0
          %1744 = vmatprep.subr.bf16.mxu0 0
          %1745 = vmatpush2.bf16.xpose.msra.mxu0 0
          %1746 = vmatprep.mubr.bf16.mxu0 0
          %1747 = vmatmul.mubr.bf16.gmra.mxu0 %v1706
          %v1748 = vpop.f32.mrf.mxu0
          %v1749 = vadd.f32 0.0, %v1748
          %v1750 = vpop.f32.mrf.mxu0
          %v1751 = vpop.f32.mrf.mxu0
          %v1752 = vpop.f32.mrf.mxu0
          %1753 = vdwg.mxu0
          %v1758 = vunpack.c.l.b16 %v1683
          %v1759 = vunpack.c.l.b16 %v1684
          %v1760 = vunpack.c.l.b16 %v1685
          %v1761 = vunpack.c.l.b16 %v1686
          %v1762 = vpack.c.b16 %v1759, %v1758
          %v1763 = vpack.c.b16 %v1761, %v1760
          %v1765 = vsel %vm1245, %v1676, 0
          %v1768 = vsel %vm1245, %v1762, 0
          %v1771 = vsel %vm1245, %v1763, 0
          %1773 = vmatprep.subr.bf16.mxu0 0
          %1774 = vmatpush1.bf16.xpose.msra.mxu0 0
          %1775 = vmatprep.subr.bf16.mxu0 0
          %1776 = vmatpush1.bf16.xpose.msra.mxu0 0
          %1777 = vmatprep.subr.bf16.mxu0 0
          %1778 = vmatpush1.bf16.xpose.msra.mxu0 0
          %1779 = vmatprep.subr.bf16.mxu0 0
          %1780 = vmatpush1.bf16.xpose.msra.mxu0 0
          %1781 = vmatprep.subr.bf16.mxu0 0
          %1782 = vmatpush1.bf16.xpose.msra.mxu0 0
          %1783 = vmatprep.subr.bf16.mxu0 0
          %1784 = vmatpush1.bf16.xpose.msra.mxu0 0
          %1785 = vmatprep.subr.bf16.mxu0 0
          %1786 = vmatpush1.bf16.xpose.msra.mxu0 %v1771
          %1787 = vmatprep.subr.bf16.mxu0 0
          %1788 = vmatpush1.bf16.xpose.msra.mxu0 %v1768
          %1789 = vmatprep.subr.bf16.mxu0 0
          %1790 = vmatpush2.bf16.xpose.msra.mxu0 0
          %1791 = vmatprep.subr.bf16.mxu0 0
          %1792 = vmatpush2.bf16.xpose.msra.mxu0 0
          %1793 = vmatprep.subr.bf16.mxu0 0
          %1794 = vmatpush2.bf16.xpose.msra.mxu0 0
          %1795 = vmatprep.subr.bf16.mxu0 0
          %1796 = vmatpush2.bf16.xpose.msra.mxu0 0
          %1797 = vmatprep.subr.bf16.mxu0 0
          %1798 = vmatpush2.bf16.xpose.msra.mxu0 0
          %1799 = vmatprep.subr.bf16.mxu0 0
          %1800 = vmatpush2.bf16.xpose.msra.mxu0 0
          %1801 = vmatprep.subr.bf16.mxu0 0
          %1802 = vmatpush2.bf16.xpose.msra.mxu0 0
          %1803 = vmatprep.subr.bf16.mxu0 0
          %1804 = vmatpush2.bf16.xpose.msra.mxu0 0
          %1805 = vmatprep.mubr.bf16.mxu0 0
          %1806 = vmatmul.mubr.bf16.gmra.mxu0 %v1765
          %v1807 = vpop.f32.mrf.mxu0
          %v1808 = vadd.f32 0.0, %v1807
          %v1809 = vpop.f32.mrf.mxu0
          %v1810 = vpop.f32.mrf.mxu0
          %v1811 = vpop.f32.mrf.mxu0
          %1812 = vdwg.mxu0
          %v1817 = vunpack.c.l.b16 %v1687
          %v1818 = vunpack.c.l.b16 %v1688
          %v1819 = vunpack.c.l.b16 %v1689
          %v1820 = vunpack.c.l.b16 %v1690
          %v1821 = vpack.c.b16 %v1818, %v1817
          %v1822 = vpack.c.b16 %v1820, %v1819
          %v1824 = vsel %vm1245, %v1677, 0
          %v1827 = vsel %vm1245, %v1821, 0
          %v1830 = vsel %vm1245, %v1822, 0
          %1832 = vmatprep.subr.bf16.mxu0 0
          %1833 = vmatpush1.bf16.xpose.msra.mxu0 0
          %1834 = vmatprep.subr.bf16.mxu0 0
          %1835 = vmatpush1.bf16.xpose.msra.mxu0 0
          %1836 = vmatprep.subr.bf16.mxu0 0
          %1837 = vmatpush1.bf16.xpose.msra.mxu0 0
          %1838 = vmatprep.subr.bf16.mxu0 0
          %1839 = vmatpush1.bf16.xpose.msra.mxu0 0
          %1840 = vmatprep.subr.bf16.mxu0 0
          %1841 = vmatpush1.bf16.xpose.msra.mxu0 0
          %1842 = vmatprep.subr.bf16.mxu0 0
          %1843 = vmatpush1.bf16.xpose.msra.mxu0 0
          %1844 = vmatprep.subr.bf16.mxu0 0
          %1845 = vmatpush1.bf16.xpose.msra.mxu0 %v1830
          %1846 = vmatprep.subr.bf16.mxu0 0
          %1847 = vmatpush1.bf16.xpose.msra.mxu0 %v1827
          %1848 = vmatprep.subr.bf16.mxu0 0
          %1849 = vmatpush2.bf16.xpose.msra.mxu0 0
          %1850 = vmatprep.subr.bf16.mxu0 0
          %1851 = vmatpush2.bf16.xpose.msra.mxu0 0
          %1852 = vmatprep.subr.bf16.mxu0 0
          %1853 = vmatpush2.bf16.xpose.msra.mxu0 0
          %1854 = vmatprep.subr.bf16.mxu0 0
          %1855 = vmatpush2.bf16.xpose.msra.mxu0 0
          %1856 = vmatprep.subr.bf16.mxu0 0
          %1857 = vmatpush2.bf16.xpose.msra.mxu0 0
          %1858 = vmatprep.subr.bf16.mxu0 0
          %1859 = vmatpush2.bf16.xpose.msra.mxu0 0
          %1860 = vmatprep.subr.bf16.mxu0 0
          %1861 = vmatpush2.bf16.xpose.msra.mxu0 0
          %1862 = vmatprep.subr.bf16.mxu0 0
          %1863 = vmatpush2.bf16.xpose.msra.mxu0 0
          %1864 = vmatprep.mubr.bf16.mxu0 0
          %1865 = vmatmul.mubr.bf16.gmra.mxu0 %v1824
          %v1866 = vpop.f32.mrf.mxu0
          %v1867 = vadd.f32 0.0, %v1866
          %v1868 = vpop.f32.mrf.mxu0
          %v1869 = vpop.f32.mrf.mxu0
          %v1870 = vpop.f32.mrf.mxu0
          %1871 = vdwg.mxu0
          %v1876 = vunpack.c.l.b16 %v1691
          %v1877 = vunpack.c.l.b16 %v1692
          %v1878 = vunpack.c.l.b16 %v1693
          %v1879 = vunpack.c.l.b16 %v1694
          %v1880 = vpack.c.b16 %v1877, %v1876
          %v1881 = vpack.c.b16 %v1879, %v1878
          %v1883 = vsel %vm1245, %v1678, 0
          %v1886 = vsel %vm1245, %v1880, 0
          %v1889 = vsel %vm1245, %v1881, 0
          %1891 = vmatprep.subr.bf16.mxu0 0
          %1892 = vmatpush1.bf16.xpose.msra.mxu0 0
          %1893 = vmatprep.subr.bf16.mxu0 0
          %1894 = vmatpush1.bf16.xpose.msra.mxu0 0
          %1895 = vmatprep.subr.bf16.mxu0 0
          %1896 = vmatpush1.bf16.xpose.msra.mxu0 0
          %1897 = vmatprep.subr.bf16.mxu0 0
          %1898 = vmatpush1.bf16.xpose.msra.mxu0 0
          %1899 = vmatprep.subr.bf16.mxu0 0
          %1900 = vmatpush1.bf16.xpose.msra.mxu0 0
          %1901 = vmatprep.subr.bf16.mxu0 0
          %1902 = vmatpush1.bf16.xpose.msra.mxu0 0
          %1903 = vmatprep.subr.bf16.mxu0 0
          %1904 = vmatpush1.bf16.xpose.msra.mxu0 %v1889
          %1905 = vmatprep.subr.bf16.mxu0 0
          %1906 = vmatpush1.bf16.xpose.msra.mxu0 %v1886
          %1907 = vmatprep.subr.bf16.mxu0 0
          %1908 = vmatpush2.bf16.xpose.msra.mxu0 0
          %1909 = vmatprep.subr.bf16.mxu0 0
          %1910 = vmatpush2.bf16.xpose.msra.mxu0 0
          %1911 = vmatprep.subr.bf16.mxu0 0
          %1912 = vmatpush2.bf16.xpose.msra.mxu0 0
          %1913 = vmatprep.subr.bf16.mxu0 0
          %1914 = vmatpush2.bf16.xpose.msra.mxu0 0
          %1915 = vmatprep.subr.bf16.mxu0 0
          %1916 = vmatpush2.bf16.xpose.msra.mxu0 0
          %1917 = vmatprep.subr.bf16.mxu0 0
          %1918 = vmatpush2.bf16.xpose.msra.mxu0 0
          %1919 = vmatprep.subr.bf16.mxu0 0
          %1920 = vmatpush2.bf16.xpose.msra.mxu0 0
          %1921 = vmatprep.subr.bf16.mxu0 0
          %1922 = vmatpush2.bf16.xpose.msra.mxu0 0
          %1923 = vmatprep.mubr.bf16.mxu0 0
          %1924 = vmatmul.mubr.bf16.gmra.mxu0 %v1883
          %v1925 = vpop.f32.mrf.mxu0
          %v1926 = vadd.f32 0.0, %v1925
          %v1927 = vpop.f32.mrf.mxu0
          %v1928 = vpop.f32.mrf.mxu0
          %v1929 = vpop.f32.mrf.mxu0
          %1930 = vdwg.mxu0
          %v1931 = vsel %vm653, %v1749, 0.0
          %v1932 = vsel %vm653, %v1808, 0.0
          %v1933 = vadd.f32 %v1931, %v1932
          %v1934 = vsel %vm653, %v1867, 0.0
          %v1935 = vadd.f32 %v1933, %v1934
          %v1936 = vsel %vm653, %v1926, 0.0
          %v1937 = vadd.f32 %v1935, %v1936
          %v1938 = vld [vmem:[%s9] sm:$0x1]
          %v1940 = vlaneseq
          %v1941 = vshrl.u32 %v1940, 7
          %v1942 = vsub.s32 0, %v1941
          %v1943 = vrot.slane %v1938, %v1942
          %v1945 = vadd.f32 %v1937, %v1943
          %v1946 = vadd.f32 %v619, %v1945
          %v1947 = vsel %vm653, %v1946, 0.0
          %1948 = vadd.xlane.f32.xlu0 %v1947
          %v1949 = vpop.xlane.xlu0 %1948
          %v1950 = vrcp.pop 32.0
          %v1951 = vmul.f32 %v1949, %v1950
          %v1952 = vsub.f32 %v1946, %v1951
          %v1953 = vmul.f32 %v1952, %v1952
          %v1954 = vsel %vm653, %v1953, 0.0
          %1955 = vadd.xlane.f32.xlu0 %v1954
          %v1956 = vpop.xlane.xlu0 %1955
          %v1957 = vmul.f32 %v1956, %v1950
          %v1958 = vadd.f32 %v1957, 1e-05
          %v1959 = vrsqrt.pop %v1958
          %v1960 = vmul.f32 %v1952, %v1959
          %v1961 = vld [vmem:[%s14] sm:$0x1]
          %v1963 = vlaneseq
          %v1964 = vshrl.u32 %v1963, 7
          %v1965 = vsub.s32 0, %v1964
          %v1966 = vrot.slane %v1961, %v1965
          %v1968 = vmul.f32 %v1960, %v1966
          %v1969 = vld [vmem:[%s15] sm:$0x1]
          %v1971 = vlaneseq
          %v1972 = vshrl.u32 %v1971, 7
          %v1973 = vsub.s32 0, %v1972
          %v1974 = vrot.slane %v1969, %v1973
          %v1976 = vadd.f32 %v1968, %v1974
          %v1977 = vpack.c.bf16 %v1976, %v1976
          %v1978 = vld [vmem:[%s10] sm:$0xf]
          %v1979 = vld [vmem:[%s10 + $0x4] sm:$0xf]
          %v1980 = vld [vmem:[%s10 + $0x8] sm:$0xf]
          %v1981 = vld [vmem:[%s10 + $0xc] sm:$0xf]
          %v1982 = vld [vmem:[%s11] sm:$0x1]
          %v1984 = vlaneseq
          %v1985 = vshrl.u32 %v1984, 7
          %v1986 = vsub.s32 0, %v1985
          %v1987 = vrot.slane %v1982, %v1986
          %v1993 = vunpack.c.l.b16 %v1978
          %v1994 = vunpack.c.l.b16 %v1979
          %v1995 = vunpack.c.l.b16 %v1980
          %v1996 = vunpack.c.l.b16 %v1981
          %v1997 = vpack.c.b16 %v1994, %v1993
          %v1998 = vpack.c.b16 %v1996, %v1995
          %v2002 = vsel %vm653, %v1977, 0
          %2004 = vmatprep.subr.bf16.mxu0 0
          %2005 = vmatpush1.bf16.msra.mxu0 0
          %2006 = vmatprep.subr.bf16.mxu0 0
          %2007 = vmatpush1.bf16.msra.mxu0 0
          %2008 = vmatprep.subr.bf16.mxu0 0
          %2009 = vmatpush1.bf16.msra.mxu0 0
          %2010 = vmatprep.subr.bf16.mxu0 0
          %2011 = vmatpush1.bf16.msra.mxu0 0
          %2012 = vmatprep.subr.bf16.mxu0 0
          %2013 = vmatpush1.bf16.msra.mxu0 0
          %2014 = vmatprep.subr.bf16.mxu0 0
          %2015 = vmatpush1.bf16.msra.mxu0 0
          %2016 = vmatprep.subr.bf16.mxu0 0
          %2017 = vmatpush1.bf16.msra.mxu0 %v1998
          %2018 = vmatprep.subr.bf16.mxu0 0
          %2019 = vmatpush1.bf16.msra.mxu0 %v1997
          %2020 = vmatprep.subr.bf16.mxu0 0
          %2021 = vmatpush2.bf16.msra.mxu0 0
          %2022 = vmatprep.subr.bf16.mxu0 0
          %2023 = vmatpush2.bf16.msra.mxu0 0
          %2024 = vmatprep.subr.bf16.mxu0 0
          %2025 = vmatpush2.bf16.msra.mxu0 0
          %2026 = vmatprep.subr.bf16.mxu0 0
          %2027 = vmatpush2.bf16.msra.mxu0 0
          %2028 = vmatprep.subr.bf16.mxu0 0
          %2029 = vmatpush2.bf16.msra.mxu0 0
          %2030 = vmatprep.subr.bf16.mxu0 0
          %2031 = vmatpush2.bf16.msra.mxu0 0
          %2032 = vmatprep.subr.bf16.mxu0 0
          %2033 = vmatpush2.bf16.msra.mxu0 0
          %2034 = vmatprep.subr.bf16.mxu0 0
          %2035 = vmatpush2.bf16.msra.mxu0 0
          %2036 = vmatprep.mubr.bf16.mxu0 0
          %2037 = vmatmul.mubr.bf16.gmra.mxu0 %v2002
          %v2038 = vpop.f32.mrf.mxu0
          %v2039 = vadd.f32 %v1987, %v2038
          %v2040 = vpop.f32.mrf.mxu0
          %v2041 = vpop.f32.mrf.mxu0
          %v2042 = vpop.f32.mrf.mxu0
          %2043 = vdwg.mxu0
          %v2044 = vmax.f32 %v2039, 0.0
          %v2045 = vpack.c.bf16 %v2044, %v2044
          %v2046 = vld [vmem:[%s12] sm:$0xf]
          %v2047 = vld [vmem:[%s12 + $0x4] sm:$0xf]
          %v2048 = vld [vmem:[%s12 + $0x8] sm:$0xf]
          %v2049 = vld [vmem:[%s12 + $0xc] sm:$0xf]
          %v2050 = vld [vmem:[%s12 + $0x10] sm:$0xf]
          %v2051 = vld [vmem:[%s12 + $0x14] sm:$0xf]
          %v2052 = vld [vmem:[%s12 + $0x18] sm:$0xf]
          %v2053 = vld [vmem:[%s12 + $0x1c] sm:$0xf]
          %v2054 = vld [vmem:[%s13] sm:$0x1]
          %v2056 = vlaneseq
          %v2057 = vshrl.u32 %v2056, 7
          %v2058 = vsub.s32 0, %v2057
          %v2059 = vrot.slane %v2054, %v2058
          %v2069 = vunpack.c.l.b16 %v2046
          %v2070 = vunpack.c.l.b16 %v2047
          %v2071 = vunpack.c.l.b16 %v2048
          %v2072 = vunpack.c.l.b16 %v2049
          %v2073 = vunpack.c.l.b16 %v2050
          %v2074 = vunpack.c.l.b16 %v2051
          %v2075 = vunpack.c.l.b16 %v2052
          %v2076 = vunpack.c.l.b16 %v2053
          %v2077 = vpack.c.b16 %v2070, %v2069
          %v2078 = vpack.c.b16 %v2072, %v2071
          %v2079 = vpack.c.b16 %v2074, %v2073
          %v2080 = vpack.c.b16 %v2076, %v2075
          %vm2085 = vcmask 523264
          %v2087 = vsel %vm2085, %v2045, 0
          %2089 = vmatprep.subr.bf16.mxu0 0
          %2090 = vmatpush1.bf16.msra.mxu0 0
          %2091 = vmatprep.subr.bf16.mxu0 0
          %2092 = vmatpush1.bf16.msra.mxu0 0
          %2093 = vmatprep.subr.bf16.mxu0 0
          %2094 = vmatpush1.bf16.msra.mxu0 0
          %2095 = vmatprep.subr.bf16.mxu0 0
          %2096 = vmatpush1.bf16.msra.mxu0 0
          %2097 = vmatprep.subr.bf16.mxu0 0
          %2098 = vmatpush1.bf16.msra.mxu0 %v2080
          %2099 = vmatprep.subr.bf16.mxu0 0
          %2100 = vmatpush1.bf16.msra.mxu0 %v2079
          %2101 = vmatprep.subr.bf16.mxu0 0
          %2102 = vmatpush1.bf16.msra.mxu0 %v2078
          %2103 = vmatprep.subr.bf16.mxu0 0
          %2104 = vmatpush1.bf16.msra.mxu0 %v2077
          %2105 = vmatprep.subr.bf16.mxu0 0
          %2106 = vmatpush2.bf16.msra.mxu0 0
          %2107 = vmatprep.subr.bf16.mxu0 0
          %2108 = vmatpush2.bf16.msra.mxu0 0
          %2109 = vmatprep.subr.bf16.mxu0 0
          %2110 = vmatpush2.bf16.msra.mxu0 0
          %2111 = vmatprep.subr.bf16.mxu0 0
          %2112 = vmatpush2.bf16.msra.mxu0 0
          %2113 = vmatprep.subr.bf16.mxu0 0
          %2114 = vmatpush2.bf16.msra.mxu0 0
          %2115 = vmatprep.subr.bf16.mxu0 0
          %2116 = vmatpush2.bf16.msra.mxu0 0
          %2117 = vmatprep.subr.bf16.mxu0 0
          %2118 = vmatpush2.bf16.msra.mxu0 0
          %2119 = vmatprep.subr.bf16.mxu0 0
          %2120 = vmatpush2.bf16.msra.mxu0 0
          %2121 = vmatprep.mubr.bf16.mxu0 0
          %2122 = vmatmul.mubr.bf16.gmra.mxu0 %v2087
          %v2123 = vpop.f32.mrf.mxu0
          %v2124 = vadd.f32 %v2059, %v2123
          %v2125 = vpop.f32.mrf.mxu0
          %v2126 = vpop.f32.mrf.mxu0
          %v2127 = vpop.f32.mrf.mxu0
          %2128 = vdwg.mxu0
          %v2129 = vadd.f32 %v1976, %v2124
          %v2130 = vsel %vm653, %v2129, 0.0
          %2131 = vadd.xlane.f32.xlu0 %v2130
          %v2132 = vpop.xlane.xlu0 %2131
          %v2133 = vmul.f32 %v2132, %v1950
          %v2134 = vsub.f32 %v2129, %v2133
          %v2135 = vmul.f32 %v2134, %v2134
          %v2136 = vsel %vm653, %v2135, 0.0
          %2137 = vadd.xlane.f32.xlu0 %v2136
          %v2138 = vpop.xlane.xlu0 %2137
          %v2139 = vmul.f32 %v2138, %v1950
          %v2140 = vadd.f32 %v2139, 1e-05
          %v2141 = vrsqrt.pop %v2140
          %v2142 = vmul.f32 %v2134, %v2141
          %v2143 = vld [vmem:[%s16] sm:$0x1]
          %v2145 = vlaneseq
          %v2146 = vshrl.u32 %v2145, 7
          %v2147 = vsub.s32 0, %v2146
          %v2148 = vrot.slane %v2143, %v2147
          %v2150 = vmul.f32 %v2142, %v2148
          %v2151 = vld [vmem:[%s17] sm:$0x1]
          %v2153 = vlaneseq
          %v2154 = vshrl.u32 %v2153, 7
          %v2155 = vsub.s32 0, %v2154
          %v2156 = vrot.slane %v2151, %v2155
          %v2158 = vadd.f32 %v2150, %v2156
        $region101: #{encoder_forward.1} parent=95 // loop_footer
          %s618 = sadd.s32 1, %s614
        $region102: #{encoder_forward.1} parent=95 // loop_footer_branch
          %613 = sbr.rel target = $region98
        $region103: #{encoder_forward.1} parent=95 // loop_exit
          _
        %vm2159 = vcmask 261120
        %v2160 = vsel %vm2159, %v619, 0.0
        %2161 = vadd.xlane.f32.xlu0 %v2160
        %v2162 = vpop.xlane.xlu0 %2161
        %v2163 = vrcp.pop 32.0
        %v2164 = vmul.f32 %v2162, %v2163
        %v2165 = vsub.f32 %v619, %v2164
        %v2166 = vmul.f32 %v2165, %v2165
        %v2167 = vsel %vm2159, %v2166, 0.0
        %2168 = vadd.xlane.f32.xlu0 %v2167
        %v2169 = vpop.xlane.xlu0 %2168
        %v2170 = vmul.f32 %v2169, %v2163
        %v2171 = vadd.f32 %v2170, 1e-05
        %v2172 = vrsqrt.pop %v2171
        %v2173 = vmul.f32 %v2165, %v2172
        %v2174 = vld [vmem:[%s18] sm:$0x1]
        %v2176 = vlaneseq
        %v2177 = vshrl.u32 %v2176, 7
        %v2178 = vsub.s32 0, %v2177
        %v2179 = vrot.slane %v2174, %v2178
        %v2181 = vmul.f32 %v2173, %v2179
        %v2182 = vld [vmem:[%s19] sm:$0x1]
        %v2184 = vlaneseq
        %v2185 = vshrl.u32 %v2184, 7
        %v2186 = vsub.s32 0, %v2185
        %v2187 = vrot.slane %v2182, %v2186
        %v2189 = vadd.f32 %v2181, %v2187
        %2190 = vst.msk [vmem:[%s600] sm:$0xff] %vm2159, %v2189
        %s2191 = sand.u32 %s452, 1
        %s2192 = scalar_lea.sflag [#allocation5], %s2191
        %s2193 = sand.u32 %s452, 1
        %s2194 = smul.addr %s2193, 8
        %s2195 = scalar_lea.vmem [#allocation4], %s2194
        // Predicated region
        $region104: #{encoder_forward.1} parent=95 // pred_check
          %p2196 = pneg %p462
        $region105: #{encoder_forward.1} parent=95 // pred_check_branch
          %2198 = sbr.rel (%p2196) target = $region107
        $region106: #{encoder_forward.1} parent=95 // pred_region
          %s2200 = ssub.s32 128, 128
          %2201 = vsyncadd %s2192, %s2200
          %s2202 = smul.addr %s40, 128
          %s2203 = scalar_lea.hbm %s20, %s2202
          %s2205 = sshll.u32 %s2195, 4
          %s2206 = int_to_ptr.vmem [resolvable:$true] %s2205
          %2208 = dma.vmem_to_hbm [thread:$0]  %s2206, 128, %s2203, %s2192
        $region107: #{encoder_forward.1} parent=95 // pred_fallthru
          _
      $region96: #{encoder_forward.1} parent=5 // pred_fallthru
        _
      %p2209 = scmp.le.s32.totalorder 2, %s35
      // Predicated region
      $region108: #{encoder_forward.1} parent=5 // pred_check
        %p2210 = pneg %p2209
      $region109: #{encoder_forward.1} parent=5 // pred_check_branch
        %2212 = sbr.rel (%p2210) target = $region111
      $region110: #{encoder_forward.1} parent=5 // pred_region
        %s2213 = ssub.s32 %s35, 2
        // Predicated region
        $region112: #{encoder_forward.1} parent=110 // pred_check
          %p2214 = pneg %p468
        $region113: #{encoder_forward.1} parent=110 // pred_check_branch
          %2216 = sbr.rel (%p2214) target = $region115
        $region114: #{encoder_forward.1} parent=110 // pred_region
          %s2217 = sand.u32 %s453, 1
          %s2218 = scalar_lea.sflag [#allocation5], %s2217
          %s2219 = sand.u32 %s453, 1
          %s2220 = smul.addr %s2219, 8
          %s2221 = scalar_lea.vmem [#allocation4], %s2220
          %2222 = dma.done %s2218, 128
        $region115: #{encoder_forward.1} parent=110 // pred_fallthru
          _
      $region111: #{encoder_forward.1} parent=5 // pred_fallthru
        _
    $region6: #{encoder_forward.1} parent=1 // loop_footer
      %s39 = sadd.s32 1, %s35
    $region7: #{encoder_forward.1} parent=1 // loop_footer_branch
      %34 = sbr.rel target = $region3
    $region8: #{encoder_forward.1} parent=1 // loop_exit
      _
    %2223 = vsyncpa [#allocation5], 1
    %s2224 = scalar_lea.sflag [#allocation5], 1
    %2225 = vsyncpa %s2224, 1

// kernel: encoder_forward.1
$region0: #{encoder_forward.1}
  #allocation0 [shape = 'u32[]', space=smem, size = 0x4, offset = 0x4, fixed_abs, tag = 'smem constant byte address 0x4 - core index']
  #allocation1 [shape = 'u32[144,128]{1,0:T(1,128)}', space=vmem, size = 0x12000, scoped, tag = 'internal scratch']
  #allocation2 [shape = 's32[1]{0}', space=sflag, size = 0x4, scoped, tag = 'scoped memory for encoder_forward.1']
  #allocation3 [shape = 'u8[512]{0}', space=smem, size = 0x200, scoped, tag = 'prefetched SMEM operand 0']
  %s0 = inlined_call_operand.vmem [shape: s32[2], index: 0, kind: input, shape index: {}]
  %s1 = inlined_call_operand.vmem [shape: f32[2,8,32], index: 1, kind: input, shape index: {}]
  %s2 = inlined_call_operand.vmem [shape: bf16[4,8,32], index: 2, kind: input, shape index: {}]
  %s3 = inlined_call_operand.vmem [shape: bf16[4,8,32], index: 3, kind: input, shape index: {}]
  %s4 = inlined_call_operand.vmem [shape: bf16[4,8,32], index: 4, kind: input, shape index: {}]
  %s5 = inlined_call_operand.vmem [shape: f32[4,1,8], index: 5, kind: input, shape index: {}]
  %s6 = inlined_call_operand.vmem [shape: f32[4,1,8], index: 6, kind: input, shape index: {}]
  %s7 = inlined_call_operand.vmem [shape: f32[4,1,8], index: 7, kind: input, shape index: {}]
  %s8 = inlined_call_operand.vmem [shape: bf16[4,32,8], index: 8, kind: input, shape index: {}]
  %s9 = inlined_call_operand.vmem [shape: f32[1,32], index: 9, kind: input, shape index: {}]
  %s10 = inlined_call_operand.vmem [shape: bf16[32,64], index: 10, kind: input, shape index: {}]
  %s11 = inlined_call_operand.vmem [shape: f32[1,64], index: 11, kind: input, shape index: {}]
  %s12 = inlined_call_operand.vmem [shape: bf16[64,32], index: 12, kind: input, shape index: {}]
  %s13 = inlined_call_operand.vmem [shape: f32[1,32], index: 13, kind: input, shape index: {}]
  %s14 = inlined_call_operand.vmem [shape: f32[1,32], index: 14, kind: input, shape index: {}]
  %s15 = inlined_call_operand.vmem [shape: f32[1,32], index: 15, kind: input, shape index: {}]
  %s16 = inlined_call_operand.vmem [shape: f32[1,32], index: 16, kind: input, shape index: {}]
  %s17 = inlined_call_operand.vmem [shape: f32[1,32], index: 17, kind: input, shape index: {}]
  %s18 = inlined_call_operand.vmem [shape: f32[1,32], index: 18, kind: input, shape index: {}]
  %s19 = inlined_call_operand.vmem [shape: f32[1,32], index: 19, kind: input, shape index: {}]
  %s20 = inlined_call_operand.hbm [shape: f32[2,8,32], index: 20, kind: output, shape index: {}]
  %s21 = sld [smem:[#allocation0]]
  $region116: #{encoder_forward.1} parent=0
    _
  %s23 = ssub.s32 1, %s21
  %s24 = scalar_select 0, %s23, %s21
  %s25 = sshll.u32 %s0, 4
  %s26 = int_to_ptr.vmem [resolvable:$true] %s25
  %28 = dma.vmem_to_smem %s26, 16, [#allocation3], [#allocation2]
  %29 = dma.done [#allocation2], 16
  %30 = sfence
  $region1: #{encoder_forward.1} parent=0
    #allocation4 [shape = 'u8[8192]{0}', space=vmem, size = 0x2000, scoped, tag = 'output window, operand 0']
    #allocation5 [shape = 's32[2]{0}', space=sflag, size = 0x8, scoped, tag = 'scoped memory for encoder_forward.1']
    %31 = vsyncpa [#allocation5], 0
    %s32 = scalar_lea.sflag [#allocation5], 1
    %33 = vsyncpa %s32, 0
    loop: start=0, step=1, limit=4
    $region2: #{encoder_forward.1} parent=1 // loop_pre_header
      _
    $region3: #{encoder_forward.1} parent=1 // loop_header
      %s35 = sphi 0, %s39
      %p36 = scmp.ge.s32.totalorder %s35, 4
      %s45 = sphi 0, %s47
      %s48 = sphi 0, %s45
      %s49 = sphi 0, %s48
      %s65 = sphi 0, %s49
      %s69 = sphi 0, %s69
      %s71 = sphi 0, %s69
      %s72 = sphi 0, %s71
      %s86 = sphi 0, %s72
      %s90 = sphi 0, %s90
      %s92 = sphi 0, %s90
      %s93 = sphi 0, %s92
      %s107 = sphi 0, %s93
      %s111 = sphi 0, %s111
      %s113 = sphi 0, %s111
      %s114 = sphi 0, %s113
      %s128 = sphi 0, %s114
      %s132 = sphi 0, %s132
      %s134 = sphi 0, %s132
      %s135 = sphi 0, %s134
      %s149 = sphi 0, %s135
      %s153 = sphi 0, %s153
      %s155 = sphi 0, %s153
      %s156 = sphi 0, %s155
      %s170 = sphi 0, %s156
      %s174 = sphi 0, %s174
      %s176 = sphi 0, %s174
      %s177 = sphi 0, %s176
      %s191 = sphi 0, %s177
      %s195 = sphi 0, %s195
      %s197 = sphi 0, %s195
      %s198 = sphi 0, %s197
      %s212 = sphi 0, %s198
      %s216 = sphi 0, %s216
      %s218 = sphi 0, %s216
      %s219 = sphi 0, %s218
      %s233 = sphi 0, %s219
      %s237 = sphi 0, %s237
      %s239 = sphi 0, %s237
      %s240 = sphi 0, %s239
      %s254 = sphi 0, %s240
      %s258 = sphi 0, %s258
      %s260 = sphi 0, %s258
      %s261 = sphi 0, %s260
      %s275 = sphi 0, %s261
      %s279 = sphi 0, %s279
      %s281 = sphi 0, %s279
      %s282 = sphi 0, %s281
      %s296 = sphi 0, %s282
      %s300 = sphi 0, %s300
      %s302 = sphi 0, %s300
      %s303 = sphi 0, %s302
      %s317 = sphi 0, %s303
      %s321 = sphi 0, %s321
      %s323 = sphi 0, %s321
      %s324 = sphi 0, %s323
      %s338 = sphi 0, %s324
      %s342 = sphi 0, %s342
      %s344 = sphi 0, %s342
      %s345 = sphi 0, %s344
      %s359 = sphi 0, %s345
      %s363 = sphi 0, %s363
      %s365 = sphi 0, %s363
      %s366 = sphi 0, %s365
      %s380 = sphi 0, %s366
      %s384 = sphi 0, %s384
      %s386 = sphi 0, %s384
      %s387 = sphi 0, %s386
      %s401 = sphi 0, %s387
      %s405 = sphi 0, %s405
      %s407 = sphi 0, %s405
      %s408 = sphi 0, %s407
      %s422 = sphi 0, %s408
      %s426 = sphi 0, %s426
      %s428 = sphi 0, %s426
      %s429 = sphi 0, %s428
      %s443 = sphi 0, %s429
      %s449 = sphi 0, %s451
      %s452 = sphi 0, %s449
      %s453 = sphi 0, %s452
      %s469 = sphi 0, %s453
    $region4: #{encoder_forward.1} parent=1 // loop_header_branch
      %38 = sbr.rel (%p36) target = $region8
    $region5: #{encoder_forward.1} parent=1 // loop_body
      %s40 = ssub.s32 %s35, 1
      %s41 = ssub.s32 %s35, 2
      %s42 = sadd.s32 %s35, 1
      %s43 = ssub.s32 %s35, %s42
      %p44 = scmp.eq.s32.totalorder %s43, 0
      %s46 = sadd.s32 %s45, 1
      %s47 = scalar_select %p44, %s45, %s46
      %p50 = pneg %p44
      %p51 = scmp.eq.s32.totalorder %s35, 1
      %p52 = por %p50, %p51
      %p53 = scmp.ne.s32.totalorder %s45, %s48
      %p54 = scmp.eq.s32.totalorder %s35, 0
      %p55 = por %p53, %p54
      %p56 = scmp.ne.s32.totalorder %s45, %s48
      %p57 = scmp.eq.s32.totalorder %s40, 1
      %p58 = por %p56, %p57
      %p59 = scmp.ne.s32.totalorder %s48, %s49
      %p60 = scmp.eq.s32.totalorder %s40, 0
      %p61 = por %p59, %p60
      %p62 = scmp.ne.s32.totalorder %s48, %s49
      %p63 = scmp.eq.s32.totalorder %s41, 1
      %p64 = por %p62, %p63
      %p66 = scmp.ne.s32.totalorder %s49, %s65
      %p67 = scmp.eq.s32.totalorder %s41, 0
      %p68 = por %p66, %p67
      %s70 = sadd.s32 %s69, 1
      %p73 = scmp.eq.s32.totalorder %s35, 1
      %p74 = scmp.ne.s32.totalorder %s69, %s71
      %p75 = scmp.eq.s32.totalorder %s35, 0
      %p76 = por %p74, %p75
      %p77 = scmp.ne.s32.totalorder %s69, %s71
      %p78 = scmp.eq.s32.totalorder %s40, 1
      %p79 = por %p77, %p78
      %p80 = scmp.ne.s32.totalorder %s71, %s72
      %p81 = scmp.eq.s32.totalorder %s40, 0
      %p82 = por %p80, %p81
      %p83 = scmp.ne.s32.totalorder %s71, %s72
      %p84 = scmp.eq.s32.totalorder %s41, 1
      %p85 = por %p83, %p84
      %p87 = scmp.ne.s32.totalorder %s72, %s86
      %p88 = scmp.eq.s32.totalorder %s41, 0
      %p89 = por %p87, %p88
      %s91 = sadd.s32 %s90, 1
      %p94 = scmp.eq.s32.totalorder %s35, 1
      %p95 = scmp.ne.s32.totalorder %s90, %s92
      %p96 = scmp.eq.s32.totalorder %s35, 0
      %p97 = por %p95, %p96
      %p98 = scmp.ne.s32.totalorder %s90, %s92
      %p99 = scmp.eq.s32.totalorder %s40, 1
      %p100 = por %p98, %p99
      %p101 = scmp.ne.s32.totalorder %s92, %s93
      %p102 = scmp.eq.s32.totalorder %s40, 0
      %p103 = por %p101, %p102
      %p104 = scmp.ne.s32.totalorder %s92, %s93
      %p105 = scmp.eq.s32.totalorder %s41, 1
      %p106 = por %p104, %p105
      %p108 = scmp.ne.s32.totalorder %s93, %s107
      %p109 = scmp.eq.s32.totalorder %s41, 0
      %p110 = por %p108, %p109
      %s112 = sadd.s32 %s111, 1
      %p115 = scmp.eq.s32.totalorder %s35, 1
      %p116 = scmp.ne.s32.totalorder %s111, %s113
      %p117 = scmp.eq.s32.totalorder %s35, 0
      %p118 = por %p116, %p117
      %p119 = scmp.ne.s32.totalorder %s111, %s113
      %p120 = scmp.eq.s32.totalorder %s40, 1
      %p121 = por %p119, %p120
      %p122 = scmp.ne.s32.totalorder %s113, %s114
      %p123 = scmp.eq.s32.totalorder %s40, 0
      %p124 = por %p122, %p123
      %p125 = scmp.ne.s32.totalorder %s113, %s114
      %p126 = scmp.eq.s32.totalorder %s41, 1
      %p127 = por %p125, %p126
      %p129 = scmp.ne.s32.totalorder %s114, %s128
      %p130 = scmp.eq.s32.totalorder %s41, 0
      %p131 = por %p129, %p130
      %s133 = sadd.s32 %s132, 1
      %p136 = scmp.eq.s32.totalorder %s35, 1
      %p137 = scmp.ne.s32.totalorder %s132, %s134
      %p138 = scmp.eq.s32.totalorder %s35, 0
      %p139 = por %p137, %p138
      %p140 = scmp.ne.s32.totalorder %s132, %s134
      %p141 = scmp.eq.s32.totalorder %s40, 1
      %p142 = por %p140, %p141
      %p143 = scmp.ne.s32.totalorder %s134, %s135
      %p144 = scmp.eq.s32.totalorder %s40, 0
      %p145 = por %p143, %p144
      %p146 = scmp.ne.s32.totalorder %s134, %s135
      %p147 = scmp.eq.s32.totalorder %s41, 1
      %p148 = por %p146, %p147
      %p150 = scmp.ne.s32.totalorder %s135, %s149
      %p151 = scmp.eq.s32.totalorder %s41, 0
      %p152 = por %p150, %p151
      %s154 = sadd.s32 %s153, 1
      %p157 = scmp.eq.s32.totalorder %s35, 1
      %p158 = scmp.ne.s32.totalorder %s153, %s155
      %p159 = scmp.eq.s32.totalorder %s35, 0
      %p160 = por %p158, %p159
      %p161 = scmp.ne.s32.totalorder %s153, %s155
      %p162 = scmp.eq.s32.totalorder %s40, 1
      %p163 = por %p161, %p162
      %p164 = scmp.ne.s32.totalorder %s155, %s156
      %p165 = scmp.eq.s32.totalorder %s40, 0
      %p166 = por %p164, %p165
      %p167 = scmp.ne.s32.totalorder %s155, %s156
      %p168 = scmp.eq.s32.totalorder %s41, 1
      %p169 = por %p167, %p168
      %p171 = scmp.ne.s32.totalorder %s156, %s170
      %p172 = scmp.eq.s32.totalorder %s41, 0
      %p173 = por %p171, %p172
      %s175 = sadd.s32 %s174, 1
      %p178 = scmp.eq.s32.totalorder %s35, 1
      %p179 = scmp.ne.s32.totalorder %s174, %s176
      %p180 = scmp.eq.s32.totalorder %s35, 0
      %p181 = por %p179, %p180
      %p182 = scmp.ne.s32.totalorder %s174, %s176
      %p183 = scmp.eq.s32.totalorder %s40, 1
      %p184 = por %p182, %p183
      %p185 = scmp.ne.s32.totalorder %s176, %s177
      %p186 = scmp.eq.s32.totalorder %s40, 0
      %p187 = por %p185, %p186
      %p188 = scmp.ne.s32.totalorder %s176, %s177
      %p189 = scmp.eq.s32.totalorder %s41, 1
      %p190 = por %p188, %p189
      %p192 = scmp.ne.s32.totalorder %s177, %s191
      %p193 = scmp.eq.s32.totalorder %s41, 0
      %p194 = por %p192, %p193
      %s196 = sadd.s32 %s195, 1
      %p199 = scmp.eq.s32.totalorder %s35, 1
      %p200 = scmp.ne.s32.totalorder %s195, %s197
      %p201 = scmp.eq.s32.totalorder %s35, 0
      %p202 = por %p200, %p201
      %p203 = scmp.ne.s32.totalorder %s195, %s197
      %p204 = scmp.eq.s32.totalorder %s40, 1
      %p205 = por %p203, %p204
      %p206 = scmp.ne.s32.totalorder %s197, %s198
      %p207 = scmp.eq.s32.totalorder %s40, 0
      %p208 = por %p206, %p207
      %p209 = scmp.ne.s32.totalorder %s197, %s198
      %p210 = scmp.eq.s32.totalorder %s41, 1
      %p211 = por %p209, %p210
      %p213 = scmp.ne.s32.totalorder %s198, %s212
      %p214 = scmp.eq.s32.totalorder %s41, 0
      %p215 = por %p213, %p214
      %s217 = sadd.s32 %s216, 1
      %p220 = scmp.eq.s32.totalorder %s35, 1
      %p221 = scmp.ne.s32.totalorder %s216, %s218
      %p222 = scmp.eq.s32.totalorder %s35, 0
      %p223 = por %p221, %p222
      %p224 = scmp.ne.s32.totalorder %s216, %s218
      %p225 = scmp.eq.s32.totalorder %s40, 1
      %p226 = por %p224, %p225
      %p227 = scmp.ne.s32.totalorder %s218, %s219
      %p228 = scmp.eq.s32.totalorder %s40, 0
      %p229 = por %p227, %p228
      %p230 = scmp.ne.s32.totalorder %s218, %s219
      %p231 = scmp.eq.s32.totalorder %s41, 1
      %p232 = por %p230, %p231
      %p234 = scmp.ne.s32.totalorder %s219, %s233
      %p235 = scmp.eq.s32.totalorder %s41, 0
      %p236 = por %p234, %p235
      %s238 = sadd.s32 %s237, 1
      %p241 = scmp.eq.s32.totalorder %s35, 1
      %p242 = scmp.ne.s32.totalorder %s237, %s239
      %p243 = scmp.eq.s32.totalorder %s35, 0
      %p244 = por %p242, %p243
      %p245 = scmp.ne.s32.totalorder %s237, %s239
      %p246 = scmp.eq.s32.totalorder %s40, 1
      %p247 = por %p245, %p246
      %p248 = scmp.ne.s32.totalorder %s239, %s240
      %p249 = scmp.eq.s32.totalorder %s40, 0
      %p250 = por %p248, %p249
      %p251 = scmp.ne.s32.totalorder %s239, %s240
      %p252 = scmp.eq.s32.totalorder %s41, 1
      %p253 = por %p251, %p252
      %p255 = scmp.ne.s32.totalorder %s240, %s254
      %p256 = scmp.eq.s32.totalorder %s41, 0
      %p257 = por %p255, %p256
      %s259 = sadd.s32 %s258, 1
      %p262 = scmp.eq.s32.totalorder %s35, 1
      %p263 = scmp.ne.s32.totalorder %s258, %s260
      %p264 = scmp.eq.s32.totalorder %s35, 0
      %p265 = por %p263, %p264
      %p266 = scmp.ne.s32.totalorder %s258, %s260
      %p267 = scmp.eq.s32.totalorder %s40, 1
      %p268 = por %p266, %p267
      %p269 = scmp.ne.s32.totalorder %s260, %s261
      %p270 = scmp.eq.s32.totalorder %s40, 0
      %p271 = por %p269, %p270
      %p272 = scmp.ne.s32.totalorder %s260, %s261
      %p273 = scmp.eq.s32.totalorder %s41, 1
      %p274 = por %p272, %p273
      %p276 = scmp.ne.s32.totalorder %s261, %s275
      %p277 = scmp.eq.s32.totalorder %s41, 0
      %p278 = por %p276, %p277
      %s280 = sadd.s32 %s279, 1
      %p283 = scmp.eq.s32.totalorder %s35, 1
      %p284 = scmp.ne.s32.totalorder %s279, %s281
      %p285 = scmp.eq.s32.totalorder %s35, 0
      %p286 = por %p284, %p285
      %p287 = scmp.ne.s32.totalorder %s279, %s281
      %p288 = scmp.eq.s32.totalorder %s40, 1
      %p289 = por %p287, %p288
      %p290 = scmp.ne.s32.totalorder %s281, %s282
      %p291 = scmp.eq.s32.totalorder %s40, 0
      %p292 = por %p290, %p291
      %p293 = scmp.ne.s32.totalorder %s281, %s282
      %p294 = scmp.eq.s32.totalorder %s41, 1
      %p295 = por %p293, %p294
      %p297 = scmp.ne.s32.totalorder %s282, %s296
      %p298 = scmp.eq.s32.totalorder %s41, 0
      %p299 = por %p297, %p298
      %s301 = sadd.s32 %s300, 1
      %p304 = scmp.eq.s32.totalorder %s35, 1
      %p305 = scmp.ne.s32.totalorder %s300, %s302
      %p306 = scmp.eq.s32.totalorder %s35, 0
      %p307 = por %p305, %p306
      %p308 = scmp.ne.s32.totalorder %s300, %s302
      %p309 = scmp.eq.s32.totalorder %s40, 1
      %p310 = por %p308, %p309
      %p311 = scmp.ne.s32.totalorder %s302, %s303
      %p312 = scmp.eq.s32.totalorder %s40, 0
      %p313 = por %p311, %p312
      %p314 = scmp.ne.s32.totalorder %s302, %s303
      %p315 = scmp.eq.s32.totalorder %s41, 1
      %p316 = por %p314, %p315
      %p318 = scmp.ne.s32.totalorder %s303, %s317
      %p319 = scmp.eq.s32.totalorder %s41, 0
      %p320 = por %p318, %p319
      %s322 = sadd.s32 %s321, 1
      %p325 = scmp.eq.s32.totalorder %s35, 1
      %p326 = scmp.ne.s32.totalorder %s321, %s323
      %p327 = scmp.eq.s32.totalorder %s35, 0
      %p328 = por %p326, %p327
      %p329 = scmp.ne.s32.totalorder %s321, %s323
      %p330 = scmp.eq.s32.totalorder %s40, 1
      %p331 = por %p329, %p330
      %p332 = scmp.ne.s32.totalorder %s323, %s324
      %p333 = scmp.eq.s32.totalorder %s40, 0
      %p334 = por %p332, %p333
      %p335 = scmp.ne.s32.totalorder %s323, %s324
      %p336 = scmp.eq.s32.totalorder %s41, 1
      %p337 = por %p335, %p336
      %p339 = scmp.ne.s32.totalorder %s324, %s338
      %p340 = scmp.eq.s32.totalorder %s41, 0
      %p341 = por %p339, %p340
      %s343 = sadd.s32 %s342, 1
      %p346 = scmp.eq.s32.totalorder %s35, 1
      %p347 = scmp.ne.s32.totalorder %s342, %s344
      %p348 = scmp.eq.s32.totalorder %s35, 0
      %p349 = por %p347, %p348
      %p350 = scmp.ne.s32.totalorder %s342, %s344
      %p351 = scmp.eq.s32.totalorder %s40, 1
      %p352 = por %p350, %p351
      %p353 = scmp.ne.s32.totalorder %s344, %s345
      %p354 = scmp.eq.s32.totalorder %s40, 0
      %p355 = por %p353, %p354
      %p356 = scmp.ne.s32.totalorder %s344, %s345
      %p357 = scmp.eq.s32.totalorder %s41, 1
      %p358 = por %p356, %p357
      %p360 = scmp.ne.s32.totalorder %s345, %s359
      %p361 = scmp.eq.s32.totalorder %s41, 0
      %p362 = por %p360, %p361
      %s364 = sadd.s32 %s363, 1
      %p367 = scmp.eq.s32.totalorder %s35, 1
      %p368 = scmp.ne.s32.totalorder %s363, %s365
      %p369 = scmp.eq.s32.totalorder %s35, 0
      %p370 = por %p368, %p369
      %p371 = scmp.ne.s32.totalorder %s363, %s365
      %p372 = scmp.eq.s32.totalorder %s40, 1
      %p373 = por %p371, %p372
      %p374 = scmp.ne.s32.totalorder %s365, %s366
      %p375 = scmp.eq.s32.totalorder %s40, 0
      %p376 = por %p374, %p375
      %p377 = scmp.ne.s32.totalorder %s365, %s366
      %p378 = scmp.eq.s32.totalorder %s41, 1
      %p379 = por %p377, %p378
      %p381 = scmp.ne.s32.totalorder %s366, %s380
      %p382 = scmp.eq.s32.totalorder %s41, 0
      %p383 = por %p381, %p382
      %s385 = sadd.s32 %s384, 1
      %p388 = scmp.eq.s32.totalorder %s35, 1
      %p389 = scmp.ne.s32.totalorder %s384, %s386
      %p390 = scmp.eq.s32.totalorder %s35, 0
      %p391 = por %p389, %p390
      %p392 = scmp.ne.s32.totalorder %s384, %s386
      %p393 = scmp.eq.s32.totalorder %s40, 1
      %p394 = por %p392, %p393
      %p395 = scmp.ne.s32.totalorder %s386, %s387
      %p396 = scmp.eq.s32.totalorder %s40, 0
      %p397 = por %p395, %p396
      %p398 = scmp.ne.s32.totalorder %s386, %s387
      %p399 = scmp.eq.s32.totalorder %s41, 1
      %p400 = por %p398, %p399
      %p402 = scmp.ne.s32.totalorder %s387, %s401
      %p403 = scmp.eq.s32.totalorder %s41, 0
      %p404 = por %p402, %p403
      %s406 = sadd.s32 %s405, 1
      %p409 = scmp.eq.s32.totalorder %s35, 1
      %p410 = scmp.ne.s32.totalorder %s405, %s407
      %p411 = scmp.eq.s32.totalorder %s35, 0
      %p412 = por %p410, %p411
      %p413 = scmp.ne.s32.totalorder %s405, %s407
      %p414 = scmp.eq.s32.totalorder %s40, 1
      %p415 = por %p413, %p414
      %p416 = scmp.ne.s32.totalorder %s407, %s408
      %p417 = scmp.eq.s32.totalorder %s40, 0
      %p418 = por %p416, %p417
      %p419 = scmp.ne.s32.totalorder %s407, %s408
      %p420 = scmp.eq.s32.totalorder %s41, 1
      %p421 = por %p419, %p420
      %p423 = scmp.ne.s32.totalorder %s408, %s422
      %p424 = scmp.eq.s32.totalorder %s41, 0
      %p425 = por %p423, %p424
      %s427 = sadd.s32 %s426, 1
      %p430 = scmp.eq.s32.totalorder %s35, 1
      %p431 = scmp.ne.s32.totalorder %s426, %s428
      %p432 = scmp.eq.s32.totalorder %s35, 0
      %p433 = por %p431, %p432
      %p434 = scmp.ne.s32.totalorder %s426, %s428
      %p435 = scmp.eq.s32.totalorder %s40, 1
      %p436 = por %p434, %p435
      %p437 = scmp.ne.s32.totalorder %s428, %s429
      %p438 = scmp.eq.s32.totalorder %s40, 0
      %p439 = por %p437, %p438
      %p440 = scmp.ne.s32.totalorder %s428, %s429
      %p441 = scmp.eq.s32.totalorder %s41, 1
      %p442 = por %p440, %p441
      %p444 = scmp.ne.s32.totalorder %s429, %s443
      %p445 = scmp.eq.s32.totalorder %s41, 0
      %p446 = por %p444, %p445
      %s447 = ssub.s32 %s35, %s42
      %p448 = scmp.eq.s32.totalorder %s447, 0
      %s450 = sadd.s32 %s449, 1
      %s451 = scalar_select %p448, %s449, %s450
      %p454 = pneg %p448
      %p455 = scmp.eq.s32.totalorder %s35, 1
      %p456 = por %p454, %p455
      %p457 = scmp.ne.s32.totalorder %s449, %s452
      %p458 = scmp.eq.s32.totalorder %s35, 0
      %p459 = por %p457, %p458
      %p460 = scmp.ne.s32.totalorder %s449, %s452
      %p461 = scmp.eq.s32.totalorder %s40, 1
      %p462 = por %p460, %p461
      %p463 = scmp.ne.s32.totalorder %s452, %s453
      %p464 = scmp.eq.s32.totalorder %s40, 0
      %p465 = por %p463, %p464
      %p466 = scmp.ne.s32.totalorder %s452, %s453
      %p467 = scmp.eq.s32.totalorder %s41, 1
      %p468 = por %p466, %p467
      %p470 = scmp.ne.s32.totalorder %s453, %s469
      %p471 = scmp.eq.s32.totalorder %s41, 0
      %p472 = por %p470, %p471
      %p473 = scmp.le.s32.totalorder 1, %s35
      %p474 = scmp.lt.s32.totalorder %s35, 3
      %p475 = pnand %p473, %p474
      %p476 = pneg %p475
      // Predicated region
      $region9: #{encoder_forward.1} parent=5 // pred_check
        _
      $region10: #{encoder_forward.1} parent=5 // pred_check_branch
        %478 = sbr.rel (%p475) target = $region12
      $region11: #{encoder_forward.1} parent=5 // pred_region
        %s479 = ssub.s32 %s35, 1
        // Predicated region
        $region13: #{encoder_forward.1} parent=11 // pred_check
          %p480 = pneg %p82
        $region14: #{encoder_forward.1} parent=11 // pred_check_branch
          %482 = sbr.rel (%p480) target = $region16
        $region15: #{encoder_forward.1} parent=11 // pred_region
          _
        $region16: #{encoder_forward.1} parent=11 // pred_fallthru
          _
        // Predicated region
        $region17: #{encoder_forward.1} parent=11 // pred_check
          %p483 = pneg %p103
        $region18: #{encoder_forward.1} parent=11 // pred_check_branch
          %485 = sbr.rel (%p483) target = $region20
        $region19: #{encoder_forward.1} parent=11 // pred_region
          _
        $region20: #{encoder_forward.1} parent=11 // pred_fallthru
          _
        // Predicated region
        $region21: #{encoder_forward.1} parent=11 // pred_check
          %p486 = pneg %p124
        $region22: #{encoder_forward.1} parent=11 // pred_check_branch
          %488 = sbr.rel (%p486) target = $region24
        $region23: #{encoder_forward.1} parent=11 // pred_region
          _
        $region24: #{encoder_forward.1} parent=11 // pred_fallthru
          _
        // Predicated region
        $region25: #{encoder_forward.1} parent=11 // pred_check
          %p489 = pneg %p145
        $region26: #{encoder_forward.1} parent=11 // pred_check_branch
          %491 = sbr.rel (%p489) target = $region28
        $region27: #{encoder_forward.1} parent=11 // pred_region
          _
        $region28: #{encoder_forward.1} parent=11 // pred_fallthru
          _
        // Predicated region
        $region29: #{encoder_forward.1} parent=11 // pred_check
          %p492 = pneg %p166
        $region30: #{encoder_forward.1} parent=11 // pred_check_branch
          %494 = sbr.rel (%p492) target = $region32
        $region31: #{encoder_forward.1} parent=11 // pred_region
          _
        $region32: #{encoder_forward.1} parent=11 // pred_fallthru
          _
        // Predicated region
        $region33: #{encoder_forward.1} parent=11 // pred_check
          %p495 = pneg %p187
        $region34: #{encoder_forward.1} parent=11 // pred_check_branch
          %497 = sbr.rel (%p495) target = $region36
        $region35: #{encoder_forward.1} parent=11 // pred_region
          _
        $region36: #{encoder_forward.1} parent=11 // pred_fallthru
          _
        // Predicated region
        $region37: #{encoder_forward.1} parent=11 // pred_check
          %p498 = pneg %p208
        $region38: #{encoder_forward.1} parent=11 // pred_check_branch
          %500 = sbr.rel (%p498) target = $region40
        $region39: #{encoder_forward.1} parent=11 // pred_region
          _
        $region40: #{encoder_forward.1} parent=11 // pred_fallthru
          _
        // Predicated region
        $region41: #{encoder_forward.1} parent=11 // pred_check
          %p501 = pneg %p229
        $region42: #{encoder_forward.1} parent=11 // pred_check_branch
          %503 = sbr.rel (%p501) target = $region44
        $region43: #{encoder_forward.1} parent=11 // pred_region
          _
        $region44: #{encoder_forward.1} parent=11 // pred_fallthru
          _
        // Predicated region
        $region45: #{encoder_forward.1} parent=11 // pred_check
          %p504 = pneg %p250
        $region46: #{encoder_forward.1} parent=11 // pred_check_branch
          %506 = sbr.rel (%p504) target = $region48
        $region47: #{encoder_forward.1} parent=11 // pred_region
          _
        $region48: #{encoder_forward.1} parent=11 // pred_fallthru
          _
        // Predicated region
        $region49: #{encoder_forward.1} parent=11 // pred_check
          %p507 = pneg %p271
        $region50: #{encoder_forward.1} parent=11 // pred_check_branch
          %509 = sbr.rel (%p507) target = $region52
        $region51: #{encoder_forward.1} parent=11 // pred_region
          _
        $region52: #{encoder_forward.1} parent=11 // pred_fallthru
          _
        // Predicated region
        $region53: #{encoder_forward.1} parent=11 // pred_check
          %p510 = pneg %p292
        $region54: #{encoder_forward.1} parent=11 // pred_check_branch
          %512 = sbr.rel (%p510) target = $region56
        $region55: #{encoder_forward.1} parent=11 // pred_region
          _
        $region56: #{encoder_forward.1} parent=11 // pred_fallthru
          _
        // Predicated region
        $region57: #{encoder_forward.1} parent=11 // pred_check
          %p513 = pneg %p313
        $region58: #{encoder_forward.1} parent=11 // pred_check_branch
          %515 = sbr.rel (%p513) target = $region60
        $region59: #{encoder_forward.1} parent=11 // pred_region
          _
        $region60: #{encoder_forward.1} parent=11 // pred_fallthru
          _
        // Predicated region
        $region61: #{encoder_forward.1} parent=11 // pred_check
          %p516 = pneg %p334
        $region62: #{encoder_forward.1} parent=11 // pred_check_branch
          %518 = sbr.rel (%p516) target = $region64
        $region63: #{encoder_forward.1} parent=11 // pred_region
          _
        $region64: #{encoder_forward.1} parent=11 // pred_fallthru
          _
        // Predicated region
        $region65: #{encoder_forward.1} parent=11 // pred_check
          %p519 = pneg %p355
        $region66: #{encoder_forward.1} parent=11 // pred_check_branch
          %521 = sbr.rel (%p519) target = $region68
        $region67: #{encoder_forward.1} parent=11 // pred_region
          _
        $region68: #{encoder_forward.1} parent=11 // pred_fallthru
          _
        // Predicated region
        $region69: #{encoder_forward.1} parent=11 // pred_check
          %p522 = pneg %p376
        $region70: #{encoder_forward.1} parent=11 // pred_check_branch
          %524 = sbr.rel (%p522) target = $region72
        $region71: #{encoder_forward.1} parent=11 // pred_region
          _
        $region72: #{encoder_forward.1} parent=11 // pred_fallthru
          _
        // Predicated region
        $region73: #{encoder_forward.1} parent=11 // pred_check
          %p525 = pneg %p397
        $region74: #{encoder_forward.1} parent=11 // pred_check_branch
          %527 = sbr.rel (%p525) target = $region76
        $region75: #{encoder_forward.1} parent=11 // pred_region
          _
        $region76: #{encoder_forward.1} parent=11 // pred_fallthru
          _
        // Predicated region
        $region77: #{encoder_forward.1} parent=11 // pred_check
          %p528 = pneg %p418
        $region78: #{encoder_forward.1} parent=11 // pred_check_branch
          %530 = sbr.rel (%p528) target = $region80
        $region79: #{encoder_forward.1} parent=11 // pred_region
          _
        $region80: #{encoder_forward.1} parent=11 // pred_fallthru
          _
        // Predicated region
        $region81: #{encoder_forward.1} parent=11 // pred_check
          %p531 = pneg %p439
        $region82: #{encoder_forward.1} parent=11 // pred_check_branch
          %533 = sbr.rel (%p531) target = $region84
        $region83: #{encoder_forward.1} parent=11 // pred_region
          _
        $region84: #{encoder_forward.1} parent=11 // pred_fallthru
          _
      $region12: #{encoder_forward.1} parent=5 // pred_fallthru
        _
      %p534 = scmp.lt.s32.totalorder %s35, 2
      // Predicated region
      $region85: #{encoder_forward.1} parent=5 // pred_check
        %p535 = pneg %p534
      $region86: #{encoder_forward.1} parent=5 // pred_check_branch
        %537 = sbr.rel (%p535) target = $region88
      $region87: #{encoder_forward.1} parent=5 // pred_region
        // Predicated region
        $region89: #{encoder_forward.1} parent=87 // pred_check
          %p538 = pneg %p55
        $region90: #{encoder_forward.1} parent=87 // pred_check_branch
          %540 = sbr.rel (%p538) target = $region92
        $region91: #{encoder_forward.1} parent=87 // pred_region
          %p541 = scmp.lt.s32.totalorder %s35, 1
          %s542 = scalar_select %p541, %s35, 1
          %s543 = smul.addr %s542, 8
          %s544 = scalar_lea.vmem %s1, %s543
        $region92: #{encoder_forward.1} parent=87 // pred_fallthru
          _
      $region88: #{encoder_forward.1} parent=5 // pred_fallthru
        _
      %p545 = scmp.le.s32.totalorder 1, %s35
      %p546 = scmp.lt.s32.totalorder %s35, 3
      %p547 = pnand %p545, %p546
      %p548 = pneg %p547
      // Predicated region
      $region93: #{encoder_forward.1} parent=5 // pred_check
        _
      $region94: #{encoder_forward.1} parent=5 // pred_check_branch
        %550 = sbr.rel (%p547) target = $region96
      $region95: #{encoder_forward.1} parent=5 // pred_region
        %s551 = ssub.s32 %s35, 1
        %p552 = scmp.lt.s32.totalorder %s40, 1
        %s553 = scalar_select %p552, %s40, 1
        %s554 = smul.addr %s553, 8
        %s555 = scalar_lea.vmem %s1, %s554
        %p556 = pneg %p61
        %p557 = pneg %p58
        %p558 = pneg %p82
        %p559 = pneg %p79
        %p560 = pneg %p103
        %p561 = pneg %p100
        %p562 = pneg %p124
        %p563 = pneg %p121
        %p564 = pneg %p145
        %p565 = pneg %p142
        %p566 = pneg %p166
        %p567 = pneg %p163
        %p568 = pneg %p187
        %p569 = pneg %p184
        %p570 = pneg %p208
        %p571 = pneg %p205
        %p572 = pneg %p229
        %p573 = pneg %p226
        %p574 = pneg %p250
        %p575 = pneg %p247
        %p576 = pneg %p271
        %p577 = pneg %p268
        %p578 = pneg %p292
        %p579 = pneg %p289
        %p580 = pneg %p313
        %p581 = pneg %p310
        %p582 = pneg %p334
        %p583 = pneg %p331
        %p584 = pneg %p355
        %p585 = pneg %p352
        %p586 = pneg %p376
        %p587 = pneg %p373
        %p588 = pneg %p397
        %p589 = pneg %p394
        %p590 = pneg %p418
        %p591 = pneg %p415
        %p592 = pneg %p439
        %p593 = pneg %p436
        %p594 = pneg %p465
        %p595 = pneg %p462
        %s596 = sand.u32 %s452, 1
        %s597 = scalar_lea.sflag [#allocation5], %s596
        %s598 = sand.u32 %s452, 1
        %s599 = smul.addr %s598, 8
        %s600 = scalar_lea.vmem [#allocation4], %s599
        %p601 = scmp.lt.s32.totalorder %s40, 1
        %s602 = scalar_select %p601, %s40, 1
        %s603 = smul.addr %s602, 8
        %s604 = scalar_lea.vmem %s1, %s603
        %s606 = sld [smem:[#allocation3 + %s40]]
        %v607 = vlaneseq
        %v608 = vand.u32 %v607, 127
        %v609 = vstv %s606
        %vm610 = vcmp.lt.s32.totalorder %v608, %v609
        %v611 = vsel %vm610, 0.0, -1e+09
        %v612 = vld [vmem:[%s604] sm:$0xff]
        loop: start=0, step=1, limit=2
        $region97: #{encoder_forward.1} parent=95 // loop_pre_header
          _
        $region98: #{encoder_forward.1} parent=95 // loop_header
          %s614 = sphi 0, %s618
          %p615 = scmp.ge.s32.totalorder %s614, 2
          %v619 = vphi %v612, %v2158
        $region99: #{encoder_forward.1} parent=95 // loop_header_branch
          %617 = sbr.rel (%p615) target = $region103
        $region100: #{encoder_forward.1} parent=95 // loop_body
          %v620 = vpack.c.bf16 %v619, %v619
          %v621 = vld [vmem:[%s2] sm:$0xf]
          %v622 = vld [vmem:[%s2 + $0x4] sm:$0xf]
          %v623 = vld [vmem:[%s2 + $0x8] sm:$0xf]
          %v624 = vld [vmem:[%s2 + $0xc] sm:$0xf]
          %v625 = vld [vmem:[%s5] sm:$0x1]
          %v626 = vld [vmem:[%s5 + $0x1] sm:$0x1]
          %v627 = vld [vmem:[%s5 + $0x2] sm:$0x1]
          %v628 = vld [vmem:[%s5 + $0x3] sm:$0x1]
          %v633 = vlaneseq
          %v634 = vshrl.u32 %v633, 7
          %v635 = vsub.s32 0, %v634
          %v636 = vrot.slane %v625, %v635
          %v637 = vlaneseq
          %v638 = vshrl.u32 %v637, 7
          %v639 = vsub.s32 0, %v638
          %v640 = vrot.slane %v626, %v639
          %v641 = vlaneseq
          %v642 = vshrl.u32 %v641, 7
          %v643 = vsub.s32 0, %v642
          %v644 = vrot.slane %v627, %v643
          %v645 = vlaneseq
          %v646 = vshrl.u32 %v645, 7
          %v647 = vsub.s32 0, %v646
          %v648 = vrot.slane %v628, %v647
          %vm653 = vcmask 261120
          %v655 = vsel %vm653, %v620, 0
          %v658 = vsel %vm653, %v621, 0
          %660 = vmatprep.subr.bf16.mxu0 0
          %661 = vmatpush1.bf16.xpose.msra.mxu0 0
          %662 = vmatprep.subr.bf16.mxu0 0
          %663 = vmatpush1.bf16.xpose.msra.mxu0 0
          %664 = vmatprep.subr.bf16.mxu0 0
          %665 = vmatpush1.bf16.xpose.msra.mxu0 0
          %666 = vmatprep.subr.bf16.mxu0 0
          %667 = vmatpush1.bf16.xpose.msra.mxu0 0
          %668 = vmatprep.subr.bf16.mxu0 0
          %669 = vmatpush1.bf16.xpose.msra.mxu0 0
          %670 = vmatprep.subr.bf16.mxu0 0
          %671 = vmatpush1.bf16.xpose.msra.mxu0 0
          %672 = vmatprep.subr.bf16.mxu0 0
          %673 = vmatpush1.bf16.xpose.msra.mxu0 0
          %674 = vmatprep.subr.bf16.mxu0 0
          %675 = vmatpush1.bf16.xpose.msra.mxu0 %v658
          %676 = vmatprep.subr.bf16.mxu0 0
          %677 = vmatpush2.bf16.xpose.msra.mxu0 0
          %678 = vmatprep.subr.bf16.mxu0 0
          %679 = vmatpush2.bf16.xpose.msra.mxu0 0
          %680 = vmatprep.subr.bf16.mxu0 0
          %681 = vmatpush2.bf16.xpose.msra.mxu0 0
          %682 = vmatprep.subr.bf16.mxu0 0
          %683 = vmatpush2.bf16.xpose.msra.mxu0 0
          %684 = vmatprep.subr.bf16.mxu0 0
          %685 = vmatpush2.bf16.xpose.msra.mxu0 0
          %686 = vmatprep.subr.bf16.mxu0 0
          %687 = vmatpush2.bf16.xpose.msra.mxu0 0
          %688 = vmatprep.subr.bf16.mxu0 0
          %689 = vmatpush2.bf16.xpose.msra.mxu0 0
          %690 = vmatprep.subr.bf16.mxu0 0
          %691 = vmatpush2.bf16.xpose.msra.mxu0 0
          %692 = vmatprep.mubr.bf16.mxu0 0
          %693 = vmatmul.mubr.bf16.gmra.mxu0 %v655
          %v694 = vpop.f32.mrf.mxu0
          %v695 = vadd.f32 %v636, %v694
          %v696 = vpop.f32.mrf.mxu0
          %v697 = vpop.f32.mrf.mxu0
          %v698 = vpop.f32.mrf.mxu0
          %699 = vdwg.mxu0
          %v701 = vsel %vm653, %v622, 0
          %703 = vmatprep.subr.bf16.mxu0 0
          %704 = vmatpush1.bf16.xpose.msra.mxu0 0
          %705 = vmatprep.subr.bf16.mxu0 0
          %706 = vmatpush1.bf16.xpose.msra.mxu0 0
          %707 = vmatprep.subr.bf16.mxu0 0
          %708 = vmatpush1.bf16.xpose.msra.mxu0 0
          %709 = vmatprep.subr.bf16.mxu0 0
          %710 = vmatpush1.bf16.xpose.msra.mxu0 0
          %711 = vmatprep.subr.bf16.mxu0 0
          %712 = vmatpush1.bf16.xpose.msra.mxu0 0
          %713 = vmatprep.subr.bf16.mxu0 0
          %714 = vmatpush1.bf16.xpose.msra.mxu0 0
          %715 = vmatprep.subr.bf16.mxu0 0
          %716 = vmatpush1.bf16.xpose.msra.mxu0 0
          %717 = vmatprep.subr.bf16.mxu0 0
          %718 = vmatpush1.bf16.xpose.msra.mxu0 %v701
          %719 = vmatprep.subr.bf16.mxu0 0
          %720 = vmatpush2.bf16.xpose.msra.mxu0 0
          %721 = vmatprep.subr.bf16.mxu0 0
          %722 = vmatpush2.bf16.xpose.msra.mxu0 0
          %723 = vmatprep.subr.bf16.mxu0 0
          %724 = vmatpush2.bf16.xpose.msra.mxu0 0
          %725 = vmatprep.subr.bf16.mxu0 0
          %726 = vmatpush2.bf16.xpose.msra.mxu0 0
          %727 = vmatprep.subr.bf16.mxu0 0
          %728 = vmatpush2.bf16.xpose.msra.mxu0 0
          %729 = vmatprep.subr.bf16.mxu0 0
          %730 = vmatpush2.bf16.xpose.msra.mxu0 0
          %731 = vmatprep.subr.bf16.mxu0 0
          %732 = vmatpush2.bf16.xpose.msra.mxu0 0
          %733 = vmatprep.subr.bf16.mxu0 0
          %734 = vmatpush2.bf16.xpose.msra.mxu0 0
          %735 = vmatprep.mubr.bf16.mxu0 0
          %736 = vmatmul.mubr.bf16.gmra.mxu0 %v655
          %v737 = vpop.f32.mrf.mxu0
          %v738 = vadd.f32 %v640, %v737
          %v739 = vpop.f32.mrf.mxu0
          %v740 = vpop.f32.mrf.mxu0
          %v741 = vpop.f32.mrf.mxu0
          %742 = vdwg.mxu0
          %v744 = vsel %vm653, %v623, 0
          %746 = vmatprep.subr.bf16.mxu0 0
          %747 = vmatpush1.bf16.xpose.msra.mxu0 0
          %748 = vmatprep.subr.bf16.mxu0 0
          %749 = vmatpush1.bf16.xpose.msra.mxu0 0
          %750 = vmatprep.subr.bf16.mxu0 0
          %751 = vmatpush1.bf16.xpose.msra.mxu0 0
          %752 = vmatprep.subr.bf16.mxu0 0
          %753 = vmatpush1.bf16.xpose.msra.mxu0 0
          %754 = vmatprep.subr.bf16.mxu0 0
          %755 = vmatpush1.bf16.xpose.msra.mxu0 0
          %756 = vmatprep.subr.bf16.mxu0 0
          %757 = vmatpush1.bf16.xpose.msra.mxu0 0
          %758 = vmatprep.subr.bf16.mxu0 0
          %759 = vmatpush1.bf16.xpose.msra.mxu0 0
          %760 = vmatprep.subr.bf16.mxu0 0
          %761 = vmatpush1.bf16.xpose.msra.mxu0 %v744
          %762 = vmatprep.subr.bf16.mxu0 0
          %763 = vmatpush2.bf16.xpose.msra.mxu0 0
          %764 = vmatprep.subr.bf16.mxu0 0
          %765 = vmatpush2.bf16.xpose.msra.mxu0 0
          %766 = vmatprep.subr.bf16.mxu0 0
          %767 = vmatpush2.bf16.xpose.msra.mxu0 0
          %768 = vmatprep.subr.bf16.mxu0 0
          %769 = vmatpush2.bf16.xpose.msra.mxu0 0
          %770 = vmatprep.subr.bf16.mxu0 0
          %771 = vmatpush2.bf16.xpose.msra.mxu0 0
          %772 = vmatprep.subr.bf16.mxu0 0
          %773 = vmatpush2.bf16.xpose.msra.mxu0 0
          %774 = vmatprep.subr.bf16.mxu0 0
          %775 = vmatpush2.bf16.xpose.msra.mxu0 0
          %776 = vmatprep.subr.bf16.mxu0 0
          %777 = vmatpush2.bf16.xpose.msra.mxu0 0
          %778 = vmatprep.mubr.bf16.mxu0 0
          %779 = vmatmul.mubr.bf16.gmra.mxu0 %v655
          %v780 = vpop.f32.mrf.mxu0
          %v781 = vadd.f32 %v644, %v780
          %v782 = vpop.f32.mrf.mxu0
          %v783 = vpop.f32.mrf.mxu0
          %v784 = vpop.f32.mrf.mxu0
          %785 = vdwg.mxu0
          %v787 = vsel %vm653, %v624, 0
          %789 = vmatprep.subr.bf16.mxu0 0
          %790 = vmatpush1.bf16.xpose.msra.mxu0 0
          %791 = vmatprep.subr.bf16.mxu0 0
          %792 = vmatpush1.bf16.xpose.msra.mxu0 0
          %793 = vmatprep.subr.bf16.mxu0 0
          %794 = vmatpush1.bf16.xpose.msra.mxu0 0
          %795 = vmatprep.subr.bf16.mxu0 0
          %796 = vmatpush1.bf16.xpose.msra.mxu0 0
          %797 = vmatprep.subr.bf16.mxu0 0
          %798 = vmatpush1.bf16.xpose.msra.mxu0 0
          %799 = vmatprep.subr.bf16.mxu0 0
          %800 = vmatpush1.bf16.xpose.msra.mxu0 0
          %801 = vmatprep.subr.bf16.mxu0 0
          %802 = vmatpush1.bf16.xpose.msra.mxu0 0
          %803 = vmatprep.subr.bf16.mxu0 0
          %804 = vmatpush1.bf16.xpose.msra.mxu0 %v787
          %805 = vmatprep.subr.bf16.mxu0 0
          %806 = vmatpush2.bf16.xpose.msra.mxu0 0
          %807 = vmatprep.subr.bf16.mxu0 0
          %808 = vmatpush2.bf16.xpose.msra.mxu0 0
          %809 = vmatprep.subr.bf16.mxu0 0
          %810 = vmatpush2.bf16.xpose.msra.mxu0 0
          %811 = vmatprep.subr.bf16.mxu0 0
          %812 = vmatpush2.bf16.xpose.msra.mxu0 0
          %813 = vmatprep.subr.bf16.mxu0 0
          %814 = vmatpush2.bf16.xpose.msra.mxu0 0
          %815 = vmatprep.subr.bf16.mxu0 0
          %816 = vmatpush2.bf16.xpose.msra.mxu0 0
          %817 = vmatprep.subr.bf16.mxu0 0
          %818 = vmatpush2.bf16.xpose.msra.mxu0 0
          %819 = vmatprep.subr.bf16.mxu0 0
          %820 = vmatpush2.bf16.xpose.msra.mxu0 0
          %821 = vmatprep.mubr.bf16.mxu0 0
          %822 = vmatmul.mubr.bf16.gmra.mxu0 %v655
          %v823 = vpop.f32.mrf.mxu0
          %v824 = vadd.f32 %v648, %v823
          %v825 = vpop.f32.mrf.mxu0
          %v826 = vpop.f32.mrf.mxu0
          %v827 = vpop.f32.mrf.mxu0
          %828 = vdwg.mxu0
          %v829 = vld [vmem:[%s3] sm:$0xf]
          %v830 = vld [vmem:[%s3 + $0x4] sm:$0xf]
          %v831 = vld [vmem:[%s3 + $0x8] sm:$0xf]
          %v832 = vld [vmem:[%s3 + $0xc] sm:$0xf]
          %v833 = vld [vmem:[%s6] sm:$0x1]
          %v834 = vld [vmem:[%s6 + $0x1] sm:$0x1]
          %v835 = vld [vmem:[%s6 + $0x2] sm:$0x1]
          %v836 = vld [vmem:[%s6 + $0x3] sm:$0x1]
          %v841 = vlaneseq
          %v842 = vshrl.u32 %v841, 7
          %v843 = vsub.s32 0, %v842
          %v844 = vrot.slane %v833, %v843
          %v845 = vlaneseq
          %v846 = vshrl.u32 %v845, 7
          %v847 = vsub.s32 0, %v846
          %v848 = vrot.slane %v834, %v847
          %v849 = vlaneseq
          %v850 = vshrl.u32 %v849, 7
          %v851 = vsub.s32 0, %v850
          %v852 = vrot.slane %v835, %v851
          %v853 = vlaneseq
          %v854 = vshrl.u32 %v853, 7
          %v855 = vsub.s32 0, %v854
          %v856 = vrot.slane %v836, %v855
          %v862 = vsel %vm653, %v829, 0
          %864 = vmatprep.subr.bf16.mxu0 0
          %865 = vmatpush1.bf16.xpose.msra.mxu0 0
          %866 = vmatprep.subr.bf16.mxu0 0
          %867 = vmatpush1.bf16.xpose.msra.mxu0 0
          %868 = vmatprep.subr.bf16.mxu0 0
          %869 = vmatpush1.bf16.xpose.msra.mxu0 0
          %870 = vmatprep.subr.bf16.mxu0 0
          %871 = vmatpush1.bf16.xpose.msra.mxu0 0
          %872 = vmatprep.subr.bf16.mxu0 0
          %873 = vmatpush1.bf16.xpose.msra.mxu0 0
          %874 = vmatprep.subr.bf16.mxu0 0
          %875 = vmatpush1.bf16.xpose.msra.mxu0 0
          %876 = vmatprep.subr.bf16.mxu0 0
          %877 = vmatpush1.bf16.xpose.msra.mxu0 0
          %878 = vmatprep.subr.bf16.mxu0 0
          %879 = vmatpush1.bf16.xpose.msra.mxu0 %v862
          %880 = vmatprep.subr.bf16.mxu0 0
          %881 = vmatpush2.bf16.xpose.msra.mxu0 0
          %882 = vmatprep.subr.bf16.mxu0 0
          %883 = vmatpush2.bf16.xpose.msra.mxu0 0
          %884 = vmatprep.subr.bf16.mxu0 0
          %885 = vmatpush2.bf16.xpose.msra.mxu0 0
          %886 = vmatprep.subr.bf16.mxu0 0
          %887 = vmatpush2.bf16.xpose.msra.mxu0 0
          %888 = vmatprep.subr.bf16.mxu0 0
          %889 = vmatpush2.bf16.xpose.msra.mxu0 0
          %890 = vmatprep.subr.bf16.mxu0 0
          %891 = vmatpush2.bf16.xpose.msra.mxu0 0
          %892 = vmatprep.subr.bf16.mxu0 0
          %893 = vmatpush2.bf16.xpose.msra.mxu0 0
          %894 = vmatprep.subr.bf16.mxu0 0
          %895 = vmatpush2.bf16.xpose.msra.mxu0 0
          %896 = vmatprep.mubr.bf16.mxu0 0
          %897 = vmatmul.mubr.bf16.gmra.mxu0 %v655
          %v898 = vpop.f32.mrf.mxu0
          %v899 = vadd.f32 %v844, %v898
          %v900 = vpop.f32.mrf.mxu0
          %v901 = vpop.f32.mrf.mxu0
          %v902 = vpop.f32.mrf.mxu0
          %903 = vdwg.mxu0
          %v905 = vsel %vm653, %v830, 0
          %907 = vmatprep.subr.bf16.mxu0 0
          %908 = vmatpush1.bf16.xpose.msra.mxu0 0
          %909 = vmatprep.subr.bf16.mxu0 0
          %910 = vmatpush1.bf16.xpose.msra.mxu0 0
          %911 = vmatprep.subr.bf16.mxu0 0
          %912 = vmatpush1.bf16.xpose.msra.mxu0 0
          %913 = vmatprep.subr.bf16.mxu0 0
          %914 = vmatpush1.bf16.xpose.msra.mxu0 0
          %915 = vmatprep.subr.bf16.mxu0 0
          %916 = vmatpush1.bf16.xpose.msra.mxu0 0
          %917 = vmatprep.subr.bf16.mxu0 0
          %918 = vmatpush1.bf16.xpose.msra.mxu0 0
          %919 = vmatprep.subr.bf16.mxu0 0
          %920 = vmatpush1.bf16.xpose.msra.mxu0 0
          %921 = vmatprep.subr.bf16.mxu0 0
          %922 = vmatpush1.bf16.xpose.msra.mxu0 %v905
          %923 = vmatprep.subr.bf16.mxu0 0
          %924 = vmatpush2.bf16.xpose.msra.mxu0 0
          %925 = vmatprep.subr.bf16.mxu0 0
          %926 = vmatpush2.bf16.xpose.msra.mxu0 0
          %927 = vmatprep.subr.bf16.mxu0 0
          %928 = vmatpush2.bf16.xpose.msra.mxu0 0
          %929 = vmatprep.subr.bf16.mxu0 0
          %930 = vmatpush2.bf16.xpose.msra.mxu0 0
          %931 = vmatprep.subr.bf16.mxu0 0
          %932 = vmatpush2.bf16.xpose.msra.mxu0 0
          %933 = vmatprep.subr.bf16.mxu0 0
          %934 = vmatpush2.bf16.xpose.msra.mxu0 0
          %935 = vmatprep.subr.bf16.mxu0 0
          %936 = vmatpush2.bf16.xpose.msra.mxu0 0
          %937 = vmatprep.subr.bf16.mxu0 0
          %938 = vmatpush2.bf16.xpose.msra.mxu0 0
          %939 = vmatprep.mubr.bf16.mxu0 0
          %940 = vmatmul.mubr.bf16.gmra.mxu0 %v655
          %v941 = vpop.f32.mrf.mxu0
          %v942 = vadd.f32 %v848, %v941
          %v943 = vpop.f32.mrf.mxu0
          %v944 = vpop.f32.mrf.mxu0
          %v945 = vpop.f32.mrf.mxu0
          %946 = vdwg.mxu0
          %v948 = vsel %vm653, %v831, 0
          %950 = vmatprep.subr.bf16.mxu0 0
          %951 = vmatpush1.bf16.xpose.msra.mxu0 0
          %952 = vmatprep.subr.bf16.mxu0 0
          %953 = vmatpush1.bf16.xpose.msra.mxu0 0
          %954 = vmatprep.subr.bf16.mxu0 0
          %955 = vmatpush1.bf16.xpose.msra.mxu0 0
          %956 = vmatprep.subr.bf16.mxu0 0
          %957 = vmatpush1.bf16.xpose.msra.mxu0 0
          %958 = vmatprep.subr.bf16.mxu0 0
          %959 = vmatpush1.bf16.xpose.msra.mxu0 0
          %960 = vmatprep.subr.bf16.mxu0 0
          %961 = vmatpush1.bf16.xpose.msra.mxu0 0
          %962 = vmatprep.subr.bf16.mxu0 0
          %963 = vmatpush1.bf16.xpose.msra.mxu0 0
          %964 = vmatprep.subr.bf16.mxu0 0
          %965 = vmatpush1.bf16.xpose.msra.mxu0 %v948
          %966 = vmatprep.subr.bf16.mxu0 0
          %967 = vmatpush2.bf16.xpose.msra.mxu0 0
          %968 = vmatprep.subr.bf16.mxu0 0
          %969 = vmatpush2.bf16.xpose.msra.mxu0 0
          %970 = vmatprep.subr.bf16.mxu0 0
          %971 = vmatpush2.bf16.xpose.msra.mxu0 0
          %972 = vmatprep.subr.bf16.mxu0 0
          %973 = vmatpush2.bf16.xpose.msra.mxu0 0
          %974 = vmatprep.subr.bf16.mxu0 0
          %975 = vmatpush2.bf16.xpose.msra.mxu0 0
          %976 = vmatprep.subr.bf16.mxu0 0
          %977 = vmatpush2.bf16.xpose.msra.mxu0 0
          %978 = vmatprep.subr.bf16.mxu0 0
          %979 = vmatpush2.bf16.xpose.msra.mxu0 0
          %980 = vmatprep.subr.bf16.mxu0 0
          %981 = vmatpush2.bf16.xpose.msra.mxu0 0
          %982 = vmatprep.mubr.bf16.mxu0 0
          %983 = vmatmul.mubr.bf16.gmra.mxu0 %v655
          %v984 = vpop.f32.mrf.mxu0
          %v985 = vadd.f32 %v852, %v984
          %v986 = vpop.f32.mrf.mxu0
          %v987 = vpop.f32.mrf.mxu0
          %v988 = vpop.f32.mrf.mxu0
          %989 = vdwg.mxu0
          %v991 = vsel %vm653, %v832, 0
          %993 = vmatprep.subr.bf16.mxu0 0
          %994 = vmatpush1.bf16.xpose.msra.mxu0 0
          %995 = vmatprep.subr.bf16.mxu0 0
          %996 = vmatpush1.bf16.xpose.msra.mxu0 0
          %997 = vmatprep.subr.bf16.mxu0 0
          %998 = vmatpush1.bf16.xpose.msra.mxu0 0
          %999 = vmatprep.subr.bf16.mxu0 0
          %1000 = vmatpush1.bf16.xpose.msra.mxu0 0
          %1001 = vmatprep.subr.bf16.mxu0 0
          %1002 = vmatpush1.bf16.xpose.msra.mxu0 0
          %1003 = vmatprep.subr.bf16.mxu0 0
          %1004 = vmatpush1.bf16.xpose.msra.mxu0 0
          %1005 = vmatprep.subr.bf16.mxu0 0
          %1006 = vmatpush1.bf16.xpose.msra.mxu0 0
          %1007 = vmatprep.subr.bf16.mxu0 0
          %1008 = vmatpush1.bf16.xpose.msra.mxu0 %v991
          %1009 = vmatprep.subr.bf16.mxu0 0
          %1010 = vmatpush2.bf16.xpose.msra.mxu0 0
          %1011 = vmatprep.subr.bf16.mxu0 0
          %1012 = vmatpush2.bf16.xpose.msra.mxu0 0
          %1013 = vmatprep.subr.bf16.mxu0 0
          %1014 = vmatpush2.bf16.xpose.msra.mxu0 0
          %1015 = vmatprep.subr.bf16.mxu0 0
          %1016 = vmatpush2.bf16.xpose.msra.mxu0 0
          %1017 = vmatprep.subr.bf16.mxu0 0
          %1018 = vmatpush2.bf16.xpose.msra.mxu0 0
          %1019 = vmatprep.subr.bf16.mxu0 0
          %1020 = vmatpush2.bf16.xpose.msra.mxu0 0
          %1021 = vmatprep.subr.bf16.mxu0 0
          %1022 = vmatpush2.bf16.xpose.msra.mxu0 0
          %1023 = vmatprep.subr.bf16.mxu0 0
          %1024 = vmatpush2.bf16.xpose.msra.mxu0 0
          %1025 = vmatprep.mubr.bf16.mxu0 0
          %1026 = vmatmul.mubr.bf16.gmra.mxu0 %v655
          %v1027 = vpop.f32.mrf.mxu0
          %v1028 = vadd.f32 %v856, %v1027
          %v1029 = vpop.f32.mrf.mxu0
          %v1030 = vpop.f32.mrf.mxu0
          %v1031 = vpop.f32.mrf.mxu0
          %1032 = vdwg.mxu0
          %v1033 = vld [vmem:[%s4] sm:$0xf]
          %v1034 = vld [vmem:[%s4 + $0x4] sm:$0xf]
          %v1035 = vld [vmem:[%s4 + $0x8] sm:$0xf]
          %v1036 = vld [vmem:[%s4 + $0xc] sm:$0xf]
          %v1037 = vld [vmem:[%s7] sm:$0x1]
          %v1038 = vld [vmem:[%s7 + $0x1] sm:$0x1]
          %v1039 = vld [vmem:[%s7 + $0x2] sm:$0x1]
          %v1040 = vld [vmem:[%s7 + $0x3] sm:$0x1]
          %v1045 = vlaneseq
          %v1046 = vshrl.u32 %v1045, 7
          %v1047 = vsub.s32 0, %v1046
          %v1048 = vrot.slane %v1037, %v1047
          %v1049 = vlaneseq
          %v1050 = vshrl.u32 %v1049, 7
          %v1051 = vsub.s32 0, %v1050
          %v1052 = vrot.slane %v1038, %v1051
          %v1053 = vlaneseq
          %v1054 = vshrl.u32 %v1053, 7
          %v1055 = vsub.s32 0, %v1054
          %v1056 = vrot.slane %v1039, %v1055
          %v1057 = vlaneseq
          %v1058 = vshrl.u32 %v1057, 7
          %v1059 = vsub.s32 0, %v1058
          %v1060 = vrot.slane %v1040, %v1059
          %v1066 = vsel %vm653, %v1033, 0
          %1068 = vmatprep.subr.bf16.mxu0 0
          %1069 = vmatpush1.bf16.xpose.msra.mxu0 0
          %1070 = vmatprep.subr.bf16.mxu0 0
          %1071 = vmatpush1.bf16.xpose.msra.mxu0 0
          %1072 = vmatprep.subr.bf16.mxu0 0
          %1073 = vmatpush1.bf16.xpose.msra.mxu0 0
          %1074 = vmatprep.subr.bf16.mxu0 0
          %1075 = vmatpush1.bf16.xpose.msra.mxu0 0
          %1076 = vmatprep.subr.bf16.mxu0 0
          %1077 = vmatpush1.bf16.xpose.msra.mxu0 0
          %1078 = vmatprep.subr.bf16.mxu0 0
          %1079 = vmatpush1.bf16.xpose.msra.mxu0 0
          %1080 = vmatprep.subr.bf16.mxu0 0
          %1081 = vmatpush1.bf16.xpose.msra.mxu0 0
          %1082 = vmatprep.subr.bf16.mxu0 0
          %1083 = vmatpush1.bf16.xpose.msra.mxu0 %v1066
          %1084 = vmatprep.subr.bf16.mxu0 0
          %1085 = vmatpush2.bf16.xpose.msra.mxu0 0
          %1086 = vmatprep.subr.bf16.mxu0 0
          %1087 = vmatpush2.bf16.xpose.msra.mxu0 0
          %1088 = vmatprep.subr.bf16.mxu0 0
          %1089 = vmatpush2.bf16.xpose.msra.mxu0 0
          %1090 = vmatprep.subr.bf16.mxu0 0
          %1091 = vmatpush2.bf16.xpose.msra.mxu0 0
          %1092 = vmatprep.subr.bf16.mxu0 0
          %1093 = vmatpush2.bf16.xpose.msra.mxu0 0
          %1094 = vmatprep.subr.bf16.mxu0 0
          %1095 = vmatpush2.bf16.xpose.msra.mxu0 0
          %1096 = vmatprep.subr.bf16.mxu0 0
          %1097 = vmatpush2.bf16.xpose.msra.mxu0 0
          %1098 = vmatprep.subr.bf16.mxu0 0
          %1099 = vmatpush2.bf16.xpose.msra.mxu0 0
          %1100 = vmatprep.mubr.bf16.mxu0 0
          %1101 = vmatmul.mubr.bf16.gmra.mxu0 %v655
          %v1102 = vpop.f32.mrf.mxu0
          %v1103 = vadd.f32 %v1048, %v1102
          %v1104 = vpop.f32.mrf.mxu0
          %v1105 = vpop.f32.mrf.mxu0
          %v1106 = vpop.f32.mrf.mxu0
          %1107 = vdwg.mxu0
          %v1109 = vsel %vm653, %v1034, 0
          %1111 = vmatprep.subr.bf16.mxu0 0
          %1112 = vmatpush1.bf16.xpose.msra.mxu0 0
          %1113 = vmatprep.subr.bf16.mxu0 0
          %1114 = vmatpush1.bf16.xpose.msra.mxu0 0
          %1115 = vmatprep.subr.bf16.mxu0 0
          %1116 = vmatpush1.bf16.xpose.msra.mxu0 0
          %1117 = vmatprep.subr.bf16.mxu0 0
          %1118 = vmatpush1.bf16.xpose.msra.mxu0 0
          %1119 = vmatprep.subr.bf16.mxu0 0
          %1120 = vmatpush1.bf16.xpose.msra.mxu0 0
          %1121 = vmatprep.subr.bf16.mxu0 0
          %1122 = vmatpush1.bf16.xpose.msra.mxu0 0
          %1123 = vmatprep.subr.bf16.mxu0 0
          %1124 = vmatpush1.bf16.xpose.msra.mxu0 0
          %1125 = vmatprep.subr.bf16.mxu0 0
          %1126 = vmatpush1.bf16.xpose.msra.mxu0 %v1109
          %1127 = vmatprep.subr.bf16.mxu0 0
          %1128 = vmatpush2.bf16.xpose.msra.mxu0 0
          %1129 = vmatprep.subr.bf16.mxu0 0
          %1130 = vmatpush2.bf16.xpose.msra.mxu0 0
          %1131 = vmatprep.subr.bf16.mxu0 0
          %1132 = vmatpush2.bf16.xpose.msra.mxu0 0
          %1133 = vmatprep.subr.bf16.mxu0 0
          %1134 = vmatpush2.bf16.xpose.msra.mxu0 0
          %1135 = vmatprep.subr.bf16.mxu0 0
          %1136 = vmatpush2.bf16.xpose.msra.mxu0 0
          %1137 = vmatprep.subr.bf16.mxu0 0
          %1138 = vmatpush2.bf16.xpose.msra.mxu0 0
          %1139 = vmatprep.subr.bf16.mxu0 0
          %1140 = vmatpush2.bf16.xpose.msra.mxu0 0
          %1141 = vmatprep.subr.bf16.mxu0 0
          %1142 = vmatpush2.bf16.xpose.msra.mxu0 0
          %1143 = vmatprep.mubr.bf16.mxu0 0
          %1144 = vmatmul.mubr.bf16.gmra.mxu0 %v655
          %v1145 = vpop.f32.mrf.mxu0
          %v1146 = vadd.f32 %v1052, %v1145
          %v1147 = vpop.f32.mrf.mxu0
          %v1148 = vpop.f32.mrf.mxu0
          %v1149 = vpop.f32.mrf.mxu0
          %1150 = vdwg.mxu0
          %v1152 = vsel %vm653, %v1035, 0
          %1154 = vmatprep.subr.bf16.mxu0 0
          %1155 = vmatpush1.bf16.xpose.msra.mxu0 0
          %1156 = vmatprep.subr.bf16.mxu0 0
          %1157 = vmatpush1.bf16.xpose.msra.mxu0 0
          %1158 = vmatprep.subr.bf16.mxu0 0
          %1159 = vmatpush1.bf16.xpose.msra.mxu0 0
          %1160 = vmatprep.subr.bf16.mxu0 0
          %1161 = vmatpush1.bf16.xpose.msra.mxu0 0
          %1162 = vmatprep.subr.bf16.mxu0 0
          %1163 = vmatpush1.bf16.xpose.msra.mxu0 0
          %1164 = vmatprep.subr.bf16.mxu0 0
          %1165 = vmatpush1.bf16.xpose.msra.mxu0 0
          %1166 = vmatprep.subr.bf16.mxu0 0
          %1167 = vmatpush1.bf16.xpose.msra.mxu0 0
          %1168 = vmatprep.subr.bf16.mxu0 0
          %1169 = vmatpush1.bf16.xpose.msra.mxu0 %v1152
          %1170 = vmatprep.subr.bf16.mxu0 0
          %1171 = vmatpush2.bf16.xpose.msra.mxu0 0
          %1172 = vmatprep.subr.bf16.mxu0 0
          %1173 = vmatpush2.bf16.xpose.msra.mxu0 0
          %1174 = vmatprep.subr.bf16.mxu0 0
          %1175 = vmatpush2.bf16.xpose.msra.mxu0 0
          %1176 = vmatprep.subr.bf16.mxu0 0
          %1177 = vmatpush2.bf16.xpose.msra.mxu0 0
          %1178 = vmatprep.subr.bf16.mxu0 0
          %1179 = vmatpush2.bf16.xpose.msra.mxu0 0
          %1180 = vmatprep.subr.bf16.mxu0 0
          %1181 = vmatpush2.bf16.xpose.msra.mxu0 0
          %1182 = vmatprep.subr.bf16.mxu0 0
          %1183 = vmatpush2.bf16.xpose.msra.mxu0 0
          %1184 = vmatprep.subr.bf16.mxu0 0
          %1185 = vmatpush2.bf16.xpose.msra.mxu0 0
          %1186 = vmatprep.mubr.bf16.mxu0 0
          %1187 = vmatmul.mubr.bf16.gmra.mxu0 %v655
          %v1188 = vpop.f32.mrf.mxu0
          %v1189 = vadd.f32 %v1056, %v1188
          %v1190 = vpop.f32.mrf.mxu0
          %v1191 = vpop.f32.mrf.mxu0
          %v1192 = vpop.f32.mrf.mxu0
          %1193 = vdwg.mxu0
          %v1195 = vsel %vm653, %v1036, 0
          %1197 = vmatprep.subr.bf16.mxu0 0
          %1198 = vmatpush1.bf16.xpose.msra.mxu0 0
          %1199 = vmatprep.subr.bf16.mxu0 0
          %1200 = vmatpush1.bf16.xpose.msra.mxu0 0
          %1201 = vmatprep.subr.bf16.mxu0 0
          %1202 = vmatpush1.bf16.xpose.msra.mxu0 0
          %1203 = vmatprep.subr.bf16.mxu0 0
          %1204 = vmatpush1.bf16.xpose.msra.mxu0 0
          %1205 = vmatprep.subr.bf16.mxu0 0
          %1206 = vmatpush1.bf16.xpose.msra.mxu0 0
          %1207 = vmatprep.subr.bf16.mxu0 0
          %1208 = vmatpush1.bf16.xpose.msra.mxu0 0
          %1209 = vmatprep.subr.bf16.mxu0 0
          %1210 = vmatpush1.bf16.xpose.msra.mxu0 0
          %1211 = vmatprep.subr.bf16.mxu0 0
          %1212 = vmatpush1.bf16.xpose.msra.mxu0 %v1195
          %1213 = vmatprep.subr.bf16.mxu0 0
          %1214 = vmatpush2.bf16.xpose.msra.mxu0 0
          %1215 = vmatprep.subr.bf16.mxu0 0
          %1216 = vmatpush2.bf16.xpose.msra.mxu0 0
          %1217 = vmatprep.subr.bf16.mxu0 0
          %1218 = vmatpush2.bf16.xpose.msra.mxu0 0
          %1219 = vmatprep.subr.bf16.mxu0 0
          %1220 = vmatpush2.bf16.xpose.msra.mxu0 0
          %1221 = vmatprep.subr.bf16.mxu0 0
          %1222 = vmatpush2.bf16.xpose.msra.mxu0 0
          %1223 = vmatprep.subr.bf16.mxu0 0
          %1224 = vmatpush2.bf16.xpose.msra.mxu0 0
          %1225 = vmatprep.subr.bf16.mxu0 0
          %1226 = vmatpush2.bf16.xpose.msra.mxu0 0
          %1227 = vmatprep.subr.bf16.mxu0 0
          %1228 = vmatpush2.bf16.xpose.msra.mxu0 0
          %1229 = vmatprep.mubr.bf16.mxu0 0
          %1230 = vmatmul.mubr.bf16.gmra.mxu0 %v655
          %v1231 = vpop.f32.mrf.mxu0
          %v1232 = vadd.f32 %v1060, %v1231
          %v1233 = vpop.f32.mrf.mxu0
          %v1234 = vpop.f32.mrf.mxu0
          %v1235 = vpop.f32.mrf.mxu0
          %1236 = vdwg.mxu0
          %v1237 = vpack.c.bf16 %v695, %v695
          %v1238 = vpack.c.bf16 %v738, %v738
          %v1239 = vpack.c.bf16 %v781, %v781
          %v1240 = vpack.c.bf16 %v824, %v824
          %v1241 = vpack.c.bf16 %v899, %v899
          %v1242 = vpack.c.bf16 %v942, %v942
          %v1243 = vpack.c.bf16 %v985, %v985
          %v1244 = vpack.c.bf16 %v1028, %v1028
          %vm1245 = vcmask 64512
          %v1247 = vsel %vm1245, %v1237, 0
          %v1250 = vsel %vm1245, %v1241, 0
          %1252 = vmatprep.subr.bf16.mxu0 0
          %1253 = vmatpush1.bf16.xpose.msra.mxu0 0
          %1254 = vmatprep.subr.bf16.mxu0 0
          %1255 = vmatpush1.bf16.xpose.msra.mxu0 0
          %1256 = vmatprep.subr.bf16.mxu0 0
          %1257 = vmatpush1.bf16.xpose.msra.mxu0 0
          %1258 = vmatprep.subr.bf16.mxu0 0
          %1259 = vmatpush1.bf16.xpose.msra.mxu0 0
          %1260 = vmatprep.subr.bf16.mxu0 0
          %1261 = vmatpush1.bf16.xpose.msra.mxu0 0
          %1262 = vmatprep.subr.bf16.mxu0 0
          %1263 = vmatpush1.bf16.xpose.msra.mxu0 0
          %1264 = vmatprep.subr.bf16.mxu0 0
          %1265 = vmatpush1.bf16.xpose.msra.mxu0 0
          %1266 = vmatprep.subr.bf16.mxu0 0
          %1267 = vmatpush1.bf16.xpose.msra.mxu0 %v1250
          %1268 = vmatprep.subr.bf16.mxu0 0
          %1269 = vmatpush2.bf16.xpose.msra.mxu0 0
          %1270 = vmatprep.subr.bf16.mxu0 0
          %1271 = vmatpush2.bf16.xpose.msra.mxu0 0
          %1272 = vmatprep.subr.bf16.mxu0 0
          %1273 = vmatpush2.bf16.xpose.msra.mxu0 0
          %1274 = vmatprep.subr.bf16.mxu0 0
          %1275 = vmatpush2.bf16.xpose.msra.mxu0 0
          %1276 = vmatprep.subr.bf16.mxu0 0
          %1277 = vmatpush2.bf16.xpose.msra.mxu0 0
          %1278 = vmatprep.subr.bf16.mxu0 0
          %1279 = vmatpush2.bf16.xpose.msra.mxu0 0
          %1280 = vmatprep.subr.bf16.mxu0 0
          %1281 = vmatpush2.bf16.xpose.msra.mxu0 0
          %1282 = vmatprep.subr.bf16.mxu0 0
          %1283 = vmatpush2.bf16.xpose.msra.mxu0 0
          %1284 = vmatprep.mubr.bf16.mxu0 0
          %1285 = vmatmul.mubr.bf16.gmra.mxu0 %v1247
          %v1286 = vpop.f32.mrf.mxu0
          %v1287 = vadd.f32 0.0, %v1286
          %v1288 = vpop.f32.mrf.mxu0
          %v1289 = vpop.f32.mrf.mxu0
          %v1290 = vpop.f32.mrf.mxu0
          %1291 = vdwg.mxu0
          %v1293 = vsel %vm1245, %v1238, 0
          %v1296 = vsel %vm1245, %v1242, 0
          %1298 = vmatprep.subr.bf16.mxu0 0
          %1299 = vmatpush1.bf16.xpose.msra.mxu0 0
          %1300 = vmatprep.subr.bf16.mxu0 0
          %1301 = vmatpush1.bf16.xpose.msra.mxu0 0
          %1302 = vmatprep.subr.bf16.mxu0 0
          %1303 = vmatpush1.bf16.xpose.msra.mxu0 0
          %1304 = vmatprep.subr.bf16.mxu0 0
          %1305 = vmatpush1.bf16.xpose.msra.mxu0 0
          %1306 = vmatprep.subr.bf16.mxu0 0
          %1307 = vmatpush1.bf16.xpose.msra.mxu0 0
          %1308 = vmatprep.subr.bf16.mxu0 0
          %1309 = vmatpush1.bf16.xpose.msra.mxu0 0
          %1310 = vmatprep.subr.bf16.mxu0 0
          %1311 = vmatpush1.bf16.xpose.msra.mxu0 0
          %1312 = vmatprep.subr.bf16.mxu0 0
          %1313 = vmatpush1.bf16.xpose.msra.mxu0 %v1296
          %1314 = vmatprep.subr.bf16.mxu0 0
          %1315 = vmatpush2.bf16.xpose.msra.mxu0 0
          %1316 = vmatprep.subr.bf16.mxu0 0
          %1317 = vmatpush2.bf16.xpose.msra.mxu0 0
          %1318 = vmatprep.subr.bf16.mxu0 0
          %1319 = vmatpush2.bf16.xpose.msra.mxu0 0
          %1320 = vmatprep.subr.bf16.mxu0 0
          %1321 = vmatpush2.bf16.xpose.msra.mxu0 0
          %1322 = vmatprep.subr.bf16.mxu0 0
          %1323 = vmatpush2.bf16.xpose.msra.mxu0 0
          %1324 = vmatprep.subr.bf16.mxu0 0
          %1325 = vmatpush2.bf16.xpose.msra.mxu0 0
          %1326 = vmatprep.subr.bf16.mxu0 0
          %1327 = vmatpush2.bf16.xpose.msra.mxu0 0
          %1328 = vmatprep.subr.bf16.mxu0 0
          %1329 = vmatpush2.bf16.xpose.msra.mxu0 0
          %1330 = vmatprep.mubr.bf16.mxu0 0
          %1331 = vmatmul.mubr.bf16.gmra.mxu0 %v1293
          %v1332 = vpop.f32.mrf.mxu0
          %v1333 = vadd.f32 0.0, %v1332
          %v1334 = vpop.f32.mrf.mxu0
          %v1335 = vpop.f32.mrf.mxu0
          %v1336 = vpop.f32.mrf.mxu0
          %1337 = vdwg.mxu0
          %v1339 = vsel %vm1245, %v1239, 0
          %v1342 = vsel %vm1245, %v1243, 0
          %1344 = vmatprep.subr.bf16.mxu0 0
          %1345 = vmatpush1.bf16.xpose.msra.mxu0 0
          %1346 = vmatprep.subr.bf16.mxu0 0
          %1347 = vmatpush1.bf16.xpose.msra.mxu0 0
          %1348 = vmatprep.subr.bf16.mxu0 0
          %1349 = vmatpush1.bf16.xpose.msra.mxu0 0
          %1350 = vmatprep.subr.bf16.mxu0 0
          %1351 = vmatpush1.bf16.xpose.msra.mxu0 0
          %1352 = vmatprep.subr.bf16.mxu0 0
          %1353 = vmatpush1.bf16.xpose.msra.mxu0 0
          %1354 = vmatprep.subr.bf16.mxu0 0
          %1355 = vmatpush1.bf16.xpose.msra.mxu0 0
          %1356 = vmatprep.subr.bf16.mxu0 0
          %1357 = vmatpush1.bf16.xpose.msra.mxu0 0
          %1358 = vmatprep.subr.bf16.mxu0 0
          %1359 = vmatpush1.bf16.xpose.msra.mxu0 %v1342
          %1360 = vmatprep.subr.bf16.mxu0 0
          %1361 = vmatpush2.bf16.xpose.msra.mxu0 0
          %1362 = vmatprep.subr.bf16.mxu0 0
          %1363 = vmatpush2.bf16.xpose.msra.mxu0 0
          %1364 = vmatprep.subr.bf16.mxu0 0
          %1365 = vmatpush2.bf16.xpose.msra.mxu0 0
          %1366 = vmatprep.subr.bf16.mxu0 0
          %1367 = vmatpush2.bf16.xpose.msra.mxu0 0
          %1368 = vmatprep.subr.bf16.mxu0 0
          %1369 = vmatpush2.bf16.xpose.msra.mxu0 0
          %1370 = vmatprep.subr.bf16.mxu0 0
          %1371 = vmatpush2.bf16.xpose.msra.mxu0 0
          %1372 = vmatprep.subr.bf16.mxu0 0
          %1373 = vmatpush2.bf16.xpose.msra.mxu0 0
          %1374 = vmatprep.subr.bf16.mxu0 0
          %1375 = vmatpush2.bf16.xpose.msra.mxu0 0
          %1376 = vmatprep.mubr.bf16.mxu0 0
          %1377 = vmatmul.mubr.bf16.gmra.mxu0 %v1339
          %v1378 = vpop.f32.mrf.mxu0
          %v1379 = vadd.f32 0.0, %v1378
          %v1380 = vpop.f32.mrf.mxu0
          %v1381 = vpop.f32.mrf.mxu0
          %v1382 = vpop.f32.mrf.mxu0
          %1383 = vdwg.mxu0
          %v1385 = vsel %vm1245, %v1240, 0
          %v1388 = vsel %vm1245, %v1244, 0
          %1390 = vmatprep.subr.bf16.mxu0 0
          %1391 = vmatpush1.bf16.xpose.msra.mxu0 0
          %1392 = vmatprep.subr.bf16.mxu0 0
          %1393 = vmatpush1.bf16.xpose.msra.mxu0 0
          %1394 = vmatprep.subr.bf16.mxu0 0
          %1395 = vmatpush1.bf16.xpose.msra.mxu0 0
          %1396 = vmatprep.subr.bf16.mxu0 0
          %1397 = vmatpush1.bf16.xpose.msra.mxu0 0
          %1398 = vmatprep.subr.bf16.mxu0 0
          %1399 = vmatpush1.bf16.xpose.msra.mxu0 0
          %1400 = vmatprep.subr.bf16.mxu0 0
          %1401 = vmatpush1.bf16.xpose.msra.mxu0 0
          %1402 = vmatprep.subr.bf16.mxu0 0
          %1403 = vmatpush1.bf16.xpose.msra.mxu0 0
          %1404 = vmatprep.subr.bf16.mxu0 0
          %1405 = vmatpush1.bf16.xpose.msra.mxu0 %v1388
          %1406 = vmatprep.subr.bf16.mxu0 0
          %1407 = vmatpush2.bf16.xpose.msra.mxu0 0
          %1408 = vmatprep.subr.bf16.mxu0 0
          %1409 = vmatpush2.bf16.xpose.msra.mxu0 0
          %1410 = vmatprep.subr.bf16.mxu0 0
          %1411 = vmatpush2.bf16.xpose.msra.mxu0 0
          %1412 = vmatprep.subr.bf16.mxu0 0
          %1413 = vmatpush2.bf16.xpose.msra.mxu0 0
          %1414 = vmatprep.subr.bf16.mxu0 0
          %1415 = vmatpush2.bf16.xpose.msra.mxu0 0
          %1416 = vmatprep.subr.bf16.mxu0 0
          %1417 = vmatpush2.bf16.xpose.msra.mxu0 0
          %1418 = vmatprep.subr.bf16.mxu0 0
          %1419 = vmatpush2.bf16.xpose.msra.mxu0 0
          %1420 = vmatprep.subr.bf16.mxu0 0
          %1421 = vmatpush2.bf16.xpose.msra.mxu0 0
          %1422 = vmatprep.mubr.bf16.mxu0 0
          %1423 = vmatmul.mubr.bf16.gmra.mxu0 %v1385
          %v1424 = vpop.f32.mrf.mxu0
          %v1425 = vadd.f32 0.0, %v1424
          %v1426 = vpop.f32.mrf.mxu0
          %v1427 = vpop.f32.mrf.mxu0
          %v1428 = vpop.f32.mrf.mxu0
          %1429 = vdwg.mxu0
          %v1430 = vmul.f32 %v1287, 0.35355338
          %v1431 = vmul.f32 %v1333, 0.35355338
          %v1432 = vmul.f32 %v1379, 0.35355338
          %v1433 = vmul.f32 %v1425, 0.35355338
          %v1434 = vadd.f32 %v1430, %v611
          %v1435 = vadd.f32 %v1431, %v611
          %v1436 = vadd.f32 %v1432, %v611
          %v1437 = vadd.f32 %v1433, %v611
          %v1438 = vsel %vm1245, %v1434, -inf
          %1439 = vmax.xlane.f32.xlu0 %v1438
          %v1440 = vpop.xlane.xlu0 %1439
          %v1441 = vsel %vm1245, %v1435, -inf
          %1442 = vmax.xlane.f32.xlu0 %v1441
          %v1443 = vpop.xlane.xlu0 %1442
          %v1444 = vsel %vm1245, %v1436, -inf
          %1445 = vmax.xlane.f32.xlu0 %v1444
          %v1446 = vpop.xlane.xlu0 %1445
          %v1447 = vsel %vm1245, %v1437, -inf
          %1448 = vmax.xlane.f32.xlu0 %v1447
          %v1449 = vpop.xlane.xlu0 %1448
          %v1450 = vsub.f32 %v1434, %v1440
          %v1451 = vsub.f32 %v1435, %v1443
          %v1452 = vsub.f32 %v1436, %v1446
          %v1453 = vsub.f32 %v1437, %v1449
          %v1454 = vmul.f32 %v1450, 1.442695
          %v1455 = vpow.pop %v1454
          %v1456 = vmul.f32 %v1451, 1.442695
          %v1457 = vpow.pop %v1456
          %v1458 = vmul.f32 %v1452, 1.442695
          %v1459 = vpow.pop %v1458
          %v1460 = vmul.f32 %v1453, 1.442695
          %v1461 = vpow.pop %v1460
          %v1462 = vsel %vm1245, %v1455, 0.0
          %1463 = vadd.xlane.f32.xlu0 %v1462
          %v1464 = vpop.xlane.xlu0 %1463
          %v1465 = vsel %vm1245, %v1457, 0.0
          %1466 = vadd.xlane.f32.xlu0 %v1465
          %v1467 = vpop.xlane.xlu0 %1466
          %v1468 = vsel %vm1245, %v1459, 0.0
          %1469 = vadd.xlane.f32.xlu0 %v1468
          %v1470 = vpop.xlane.xlu0 %1469
          %v1471 = vsel %vm1245, %v1461, 0.0
          %1472 = vadd.xlane.f32.xlu0 %v1471
          %v1473 = vpop.xlane.xlu0 %1472
          %v1474 = vrcp.pop %v1464
          %v1475 = vmul.f32 %v1455, %v1474
          %v1476 = vrcp.pop %v1467
          %v1477 = vmul.f32 %v1457, %v1476
          %v1478 = vrcp.pop %v1470
          %v1479 = vmul.f32 %v1459, %v1478
          %v1480 = vrcp.pop %v1473
          %v1481 = vmul.f32 %v1461, %v1480
          %v1482 = vpack.c.bf16 %v1475, %v1475
          %v1483 = vpack.c.bf16 %v1477, %v1477
          %v1484 = vpack.c.bf16 %v1479, %v1479
          %v1485 = vpack.c.bf16 %v1481, %v1481
          %v1486 = vpack.c.bf16 %v1103, %v1103
          %v1487 = vpack.c.bf16 %v1146, %v1146
          %v1488 = vpack.c.bf16 %v1189, %v1189
          %v1489 = vpack.c.bf16 %v1232, %v1232
          %v1491 = vsel %vm1245, %v1482, 0
          %vm1493 = vcmask 1043456
          %v1495 = vsel %vm1493, %v1486, 0
          %1497 = vmatprep.subr.bf16.mxu0 0
          %1498 = vmatpush1.bf16.msra.mxu0 0
          %1499 = vmatprep.subr.bf16.mxu0 0
          %1500 = vmatpush1.bf16.msra.mxu0 0
          %1501 = vmatprep.subr.bf16.mxu0 0
          %1502 = vmatpush1.bf16.msra.mxu0 0
          %1503 = vmatprep.subr.bf16.mxu0 0
          %1504 = vmatpush1.bf16.msra.mxu0 0
          %1505 = vmatprep.subr.bf16.mxu0 0
          %1506 = vmatpush1.bf16.msra.mxu0 0
          %1507 = vmatprep.subr.bf16.mxu0 0
          %1508 = vmatpush1.bf16.msra.mxu0 0
          %1509 = vmatprep.subr.bf16.mxu0 0
          %1510 = vmatpush1.bf16.msra.mxu0 0
          %1511 = vmatprep.subr.bf16.mxu0 0
          %1512 = vmatpush1.bf16.msra.mxu0 %v1495
          %1513 = vmatprep.subr.bf16.mxu0 0
          %1514 = vmatpush2.bf16.msra.mxu0 0
          %1515 = vmatprep.subr.bf16.mxu0 0
          %1516 = vmatpush2.bf16.msra.mxu0 0
          %1517 = vmatprep.subr.bf16.mxu0 0
          %1518 = vmatpush2.bf16.msra.mxu0 0
          %1519 = vmatprep.subr.bf16.mxu0 0
          %1520 = vmatpush2.bf16.msra.mxu0 0
          %1521 = vmatprep.subr.bf16.mxu0 0
          %1522 = vmatpush2.bf16.msra.mxu0 0
          %1523 = vmatprep.subr.bf16.mxu0 0
          %1524 = vmatpush2.bf16.msra.mxu0 0
          %1525 = vmatprep.subr.bf16.mxu0 0
          %1526 = vmatpush2.bf16.msra.mxu0 0
          %1527 = vmatprep.subr.bf16.mxu0 0
          %1528 = vmatpush2.bf16.msra.mxu0 0
          %1529 = vmatprep.mubr.bf16.mxu0 0
          %1530 = vmatmul.mubr.bf16.gmra.mxu0 %v1491
          %v1531 = vpop.f32.mrf.mxu0
          %v1532 = vadd.f32 0.0, %v1531
          %v1533 = vpop.f32.mrf.mxu0
          %v1534 = vpop.f32.mrf.mxu0
          %v1535 = vpop.f32.mrf.mxu0
          %1536 = vdwg.mxu0
          %v1538 = vsel %vm1245, %v1483, 0
          %v1541 = vsel %vm1493, %v1487, 0
          %1543 = vmatprep.subr.bf16.mxu0 0
          %1544 = vmatpush1.bf16.msra.mxu0 0
          %1545 = vmatprep.subr.bf16.mxu0 0
          %1546 = vmatpush1.bf16.msra.mxu0 0
          %1547 = vmatprep.subr.bf16.mxu0 0
          %1548 = vmatpush1.bf16.msra.mxu0 0
          %1549 = vmatprep.subr.bf16.mxu0 0
          %1550 = vmatpush1.bf16.msra.mxu0 0
          %1551 = vmatprep.subr.bf16.mxu0 0
          %1552 = vmatpush1.bf16.msra.mxu0 0
          %1553 = vmatprep.subr.bf16.mxu0 0
          %1554 = vmatpush1.bf16.msra.mxu0 0
          %1555 = vmatprep.subr.bf16.mxu0 0
          %1556 = vmatpush1.bf16.msra.mxu0 0
          %1557 = vmatprep.subr.bf16.mxu0 0
          %1558 = vmatpush1.bf16.msra.mxu0 %v1541
          %1559 = vmatprep.subr.bf16.mxu0 0
          %1560 = vmatpush2.bf16.msra.mxu0 0
          %1561 = vmatprep.subr.bf16.mxu0 0
          %1562 = vmatpush2.bf16.msra.mxu0 0
          %1563 = vmatprep.subr.bf16.mxu0 0
          %1564 = vmatpush2.bf16.msra.mxu0 0
          %1565 = vmatprep.subr.bf16.mxu0 0
          %1566 = vmatpush2.bf16.msra.mxu0 0
          %1567 = vmatprep.subr.bf16.mxu0 0
          %1568 = vmatpush2.bf16.msra.mxu0 0
          %1569 = vmatprep.subr.bf16.mxu0 0
          %1570 = vmatpush2.bf16.msra.mxu0 0
          %1571 = vmatprep.subr.bf16.mxu0 0
          %1572 = vmatpush2.bf16.msra.mxu0 0
          %1573 = vmatprep.subr.bf16.mxu0 0
          %1574 = vmatpush2.bf16.msra.mxu0 0
          %1575 = vmatprep.mubr.bf16.mxu0 0
          %1576 = vmatmul.mubr.bf16.gmra.mxu0 %v1538
          %v1577 = vpop.f32.mrf.mxu0
          %v1578 = vadd.f32 0.0, %v1577
          %v1579 = vpop.f32.mrf.mxu0
          %v1580 = vpop.f32.mrf.mxu0
          %v1581 = vpop.f32.mrf.mxu0
          %1582 = vdwg.mxu0
          %v1584 = vsel %vm1245, %v1484, 0
          %v1587 = vsel %vm1493, %v1488, 0
          %1589 = vmatprep.subr.bf16.mxu0 0
          %1590 = vmatpush1.bf16.msra.mxu0 0
          %1591 = vmatprep.subr.bf16.mxu0 0
          %1592 = vmatpush1.bf16.msra.mxu0 0
          %1593 = vmatprep.subr.bf16.mxu0 0
          %1594 = vmatpush1.bf16.msra.mxu0 0
          %1595 = vmatprep.subr.bf16.mxu0 0
          %1596 = vmatpush1.bf16.msra.mxu0 0
          %1597 = vmatprep.subr.bf16.mxu0 0
          %1598 = vmatpush1.bf16.msra.mxu0 0
          %1599 = vmatprep.subr.bf16.mxu0 0
          %1600 = vmatpush1.bf16.msra.mxu0 0
          %1601 = vmatprep.subr.bf16.mxu0 0
          %1602 = vmatpush1.bf16.msra.mxu0 0
          %1603 = vmatprep.subr.bf16.mxu0 0
          %1604 = vmatpush1.bf16.msra.mxu0 %v1587
          %1605 = vmatprep.subr.bf16.mxu0 0
          %1606 = vmatpush2.bf16.msra.mxu0 0
          %1607 = vmatprep.subr.bf16.mxu0 0
          %1608 = vmatpush2.bf16.msra.mxu0 0
          %1609 = vmatprep.subr.bf16.mxu0 0
          %1610 = vmatpush2.bf16.msra.mxu0 0
          %1611 = vmatprep.subr.bf16.mxu0 0
          %1612 = vmatpush2.bf16.msra.mxu0 0
          %1613 = vmatprep.subr.bf16.mxu0 0
          %1614 = vmatpush2.bf16.msra.mxu0 0
          %1615 = vmatprep.subr.bf16.mxu0 0
          %1616 = vmatpush2.bf16.msra.mxu0 0
          %1617 = vmatprep.subr.bf16.mxu0 0
          %1618 = vmatpush2.bf16.msra.mxu0 0
          %1619 = vmatprep.subr.bf16.mxu0 0
          %1620 = vmatpush2.bf16.msra.mxu0 0
          %1621 = vmatprep.mubr.bf16.mxu0 0
          %1622 = vmatmul.mubr.bf16.gmra.mxu0 %v1584
          %v1623 = vpop.f32.mrf.mxu0
          %v1624 = vadd.f32 0.0, %v1623
          %v1625 = vpop.f32.mrf.mxu0
          %v1626 = vpop.f32.mrf.mxu0
          %v1627 = vpop.f32.mrf.mxu0
          %1628 = vdwg.mxu0
          %v1630 = vsel %vm1245, %v1485, 0
          %v1633 = vsel %vm1493, %v1489, 0
          %1635 = vmatprep.subr.bf16.mxu0 0
          %1636 = vmatpush1.bf16.msra.mxu0 0
          %1637 = vmatprep.subr.bf16.mxu0 0
          %1638 = vmatpush1.bf16.msra.mxu0 0
          %1639 = vmatprep.subr.bf16.mxu0 0
          %1640 = vmatpush1.bf16.msra.mxu0 0
          %1641 = vmatprep.subr.bf16.mxu0 0
          %1642 = vmatpush1.bf16.msra.mxu0 0
          %1643 = vmatprep.subr.bf16.mxu0 0
          %1644 = vmatpush1.bf16.msra.mxu0 0
          %1645 = vmatprep.subr.bf16.mxu0 0
          %1646 = vmatpush1.bf16.msra.mxu0 0
          %1647 = vmatprep.subr.bf16.mxu0 0
          %1648 = vmatpush1.bf16.msra.mxu0 0
          %1649 = vmatprep.subr.bf16.mxu0 0
          %1650 = vmatpush1.bf16.msra.mxu0 %v1633
          %1651 = vmatprep.subr.bf16.mxu0 0
          %1652 = vmatpush2.bf16.msra.mxu0 0
          %1653 = vmatprep.subr.bf16.mxu0 0
          %1654 = vmatpush2.bf16.msra.mxu0 0
          %1655 = vmatprep.subr.bf16.mxu0 0
          %1656 = vmatpush2.bf16.msra.mxu0 0
          %1657 = vmatprep.subr.bf16.mxu0 0
          %1658 = vmatpush2.bf16.msra.mxu0 0
          %1659 = vmatprep.subr.bf16.mxu0 0
          %1660 = vmatpush2.bf16.msra.mxu0 0
          %1661 = vmatprep.subr.bf16.mxu0 0
          %1662 = vmatpush2.bf16.msra.mxu0 0
          %1663 = vmatprep.subr.bf16.mxu0 0
          %1664 = vmatpush2.bf16.msra.mxu0 0
          %1665 = vmatprep.subr.bf16.mxu0 0
          %1666 = vmatpush2.bf16.msra.mxu0 0
          %1667 = vmatprep.mubr.bf16.mxu0 0
          %1668 = vmatmul.mubr.bf16.gmra.mxu0 %v1630
          %v1669 = vpop.f32.mrf.mxu0
          %v1670 = vadd.f32 0.0, %v1669
          %v1671 = vpop.f32.mrf.mxu0
          %v1672 = vpop.f32.mrf.mxu0
          %v1673 = vpop.f32.mrf.mxu0
          %1674 = vdwg.mxu0
          %v1675 = vpack.c.bf16 %v1532, %v1532
          %v1676 = vpack.c.bf16 %v1578, %v1578
          %v1677 = vpack.c.bf16 %v1624, %v1624
          %v1678 = vpack.c.bf16 %v1670, %v1670
          %v1679 = vld [vmem:[%s8] sm:$0xf]
          %v1680 = vld [vmem:[%s8 + $0x4] sm:$0xf]
          %v1681 = vld [vmem:[%s8 + $0x8] sm:$0xf]
          %v1682 = vld [vmem:[%s8 + $0xc] sm:$0xf]
          %v1683 = vld [vmem:[%s8 + $0x10] sm:$0xf]
          %v1684 = vld [vmem:[%s8 + $0x14] sm:$0xf]
          %v1685 = vld [vmem:[%s8 + $0x18] sm:$0xf]
          %v1686 = vld [vmem:[%s8 + $0x1c] sm:$0xf]
          %v1687 = vld [vmem:[%s8 + $0x20] sm:$0xf]
          %v1688 = vld [vmem:[%s8 + $0x24] sm:$0xf]
          %v1689 = vld [vmem:[%s8 + $0x28] sm:$0xf]
          %v1690 = vld [vmem:[%s8 + $0x2c] sm:$0xf]
          %v1691 = vld [vmem:[%s8 + $0x30] sm:$0xf]
          %v1692 = vld [vmem:[%s8 + $0x34] sm:$0xf]
          %v1693 = vld [vmem:[%s8 + $0x38] sm:$0xf]
          %v1694 = vld [vmem:[%s8 + $0x3c] sm:$0xf]
          %v1699 = vunpack.c.l.b16 %v1679
          %v1700 = vunpack.c.l.b16 %v1680
          %v1701 = vunpack.c.l.b16 %v1681
          %v1702 = vunpack.c.l.b16 %v1682
          %v1703 = vpack.c.b16 %v1700, %v1699
          %v1704 = vpack.c.b16 %v1702, %v1701
          %v1706 = vsel %vm1245, %v1675, 0
          %v1709 = vsel %vm1245, %v1703, 0
          %v1712 = vsel %vm1245, %v1704, 0
          %1714 = vmatprep.subr.bf16.mxu0 0
          %1715 = vmatpush1.bf16.xpose.msra.mxu0 0
          %1716 = vmatprep.subr.bf16.mxu0 0
          %1717 = vmatpush1.bf16.xpose.msra.mxu0 0
          %1718 = vmatprep.subr.bf16.mxu0 0
          %1719 = vmatpush1.bf16.xpose.msra.mxu0 0
          %1720 = vmatprep.subr.bf16.mxu0 0
          %1721 = vmatpush1.bf16.xpose.msra.mxu0 0
          %1722 = vmatprep.subr.bf16.mxu0 0
          %1723 = vmatpush1.bf16.xpose.msra.mxu0 0
          %1724 = vmatprep.subr.bf16.mxu0 0
          %1725 = vmatpush1.bf16.xpose.msra.mxu0 0
          %1726 = vmatprep.subr.bf16.mxu0 0
          %1727 = vmatpush1.bf16.xpose.msra.mxu0 %v1712
          %1728 = vmatprep.subr.bf16.mxu0 0
          %1729 = vmatpush1.bf16.xpose.msra.mxu0 %v1709
          %1730 = vmatprep.subr.bf16.mxu0 0
          %1731 = vmatpush2.bf16.xpose.msra.mxu0 0
          %1732 = vmatprep.subr.bf16.mxu0 0
          %1733 = vmatpush2.bf16.xpose.msra.mxu0 0
          %1734 = vmatprep.subr.bf16.mxu0 0
          %1735 = vmatpush2.bf16.xpose.msra.mxu0 0
          %1736 = vmatprep.subr.bf16.mxu0 0
          %1737 = vmatpush2.bf16.xpose.msra.mxu0 0
          %1738 = vmatprep.subr.bf16.mxu0 0
          %1739 = vmatpush2.bf16.xpose.msra.mxu0 0
          %1740 = vmatprep.subr.bf16.mxu0 0
          %1741 = vmatpush2.bf16.xpose.msra.mxu0 0
          %1742 = vmatprep.subr.bf16.mxu0 0
          %1743 = vmatpush2.bf16.xpose.msra.mxu0 0
          %1744 = vmatprep.subr.bf16.mxu0 0
          %1745 = vmatpush2.bf16.xpose.msra.mxu0 0
          %1746 = vmatprep.mubr.bf16.mxu0 0
          %1747 = vmatmul.mubr.bf16.gmra.mxu0 %v1706
          %v1748 = vpop.f32.mrf.mxu0
          %v1749 = vadd.f32 0.0, %v1748
          %v1750 = vpop.f32.mrf.mxu0
          %v1751 = vpop.f32.mrf.mxu0
          %v1752 = vpop.f32.mrf.mxu0
          %1753 = vdwg.mxu0
          %v1758 = vunpack.c.l.b16 %v1683
          %v1759 = vunpack.c.l.b16 %v1684
          %v1760 = vunpack.c.l.b16 %v1685
          %v1761 = vunpack.c.l.b16 %v1686
          %v1762 = vpack.c.b16 %v1759, %v1758
          %v1763 = vpack.c.b16 %v1761, %v1760
          %v1765 = vsel %vm1245, %v1676, 0
          %v1768 = vsel %vm1245, %v1762, 0
          %v1771 = vsel %vm1245, %v1763, 0
          %1773 = vmatprep.subr.bf16.mxu0 0
          %1774 = vmatpush1.bf16.xpose.msra.mxu0 0
          %1775 = vmatprep.subr.bf16.mxu0 0
          %1776 = vmatpush1.bf16.xpose.msra.mxu0 0
          %1777 = vmatprep.subr.bf16.mxu0 0
          %1778 = vmatpush1.bf16.xpose.msra.mxu0 0
          %1779 = vmatprep.subr.bf16.mxu0 0
          %1780 = vmatpush1.bf16.xpose.msra.mxu0 0
          %1781 = vmatprep.subr.bf16.mxu0 0
          %1782 = vmatpush1.bf16.xpose.msra.mxu0 0
          %1783 = vmatprep.subr.bf16.mxu0 0
          %1784 = vmatpush1.bf16.xpose.msra.mxu0 0
          %1785 = vmatprep.subr.bf16.mxu0 0
          %1786 = vmatpush1.bf16.xpose.msra.mxu0 %v1771
          %1787 = vmatprep.subr.bf16.mxu0 0
          %1788 = vmatpush1.bf16.xpose.msra.mxu0 %v1768
          %1789 = vmatprep.subr.bf16.mxu0 0
          %1790 = vmatpush2.bf16.xpose.msra.mxu0 0
          %1791 = vmatprep.subr.bf16.mxu0 0
          %1792 = vmatpush2.bf16.xpose.msra.mxu0 0
          %1793 = vmatprep.subr.bf16.mxu0 0
          %1794 = vmatpush2.bf16.xpose.msra.mxu0 0
          %1795 = vmatprep.subr.bf16.mxu0 0
          %1796 = vmatpush2.bf16.xpose.msra.mxu0 0
          %1797 = vmatprep.subr.bf16.mxu0 0
          %1798 = vmatpush2.bf16.xpose.msra.mxu0 0
          %1799 = vmatprep.subr.bf16.mxu0 0
          %1800 = vmatpush2.bf16.xpose.msra.mxu0 0
          %1801 = vmatprep.subr.bf16.mxu0 0
          %1802 = vmatpush2.bf16.xpose.msra.mxu0 0
          %1803 = vmatprep.subr.bf16.mxu0 0
          %1804 = vmatpush2.bf16.xpose.msra.mxu0 0
          %1805 = vmatprep.mubr.bf16.mxu0 0
          %1806 = vmatmul.mubr.bf16.gmra.mxu0 %v1765
          %v1807 = vpop.f32.mrf.mxu0
          %v1808 = vadd.f32 0.0, %v1807
          %v1809 = vpop.f32.mrf.mxu0
          %v1810 = vpop.f32.mrf.mxu0
          %v1811 = vpop.f32.mrf.mxu0
          %1812 = vdwg.mxu0
          %v1817 = vunpack.c.l.b16 %v1687
          %v1818 = vunpack.c.l.b16 %v1688
          %v1819 = vunpack.c.l.b16 %v1689
          %v1820 = vunpack.c.l.b16 %v1690
          %v1821 = vpack.c.b16 %v1818, %v1817
          %v1822 = vpack.c.b16 %v1820, %v1819
          %v1824 = vsel %vm1245, %v1677, 0
          %v1827 = vsel %vm1245, %v1821, 0
          %v1830 = vsel %vm1245, %v1822, 0
          %1832 = vmatprep.subr.bf16.mxu0 0
          %1833 = vmatpush1.bf16.xpose.msra.mxu0 0
          %1834 = vmatprep.subr.bf16.mxu0 0
          %1835 = vmatpush1.bf16.xpose.msra.mxu0 0
          %1836 = vmatprep.subr.bf16.mxu0 0
          %1837 = vmatpush1.bf16.xpose.msra.mxu0 0
          %1838 = vmatprep.subr.bf16.mxu0 0
          %1839 = vmatpush1.bf16.xpose.msra.mxu0 0
          %1840 = vmatprep.subr.bf16.mxu0 0
          %1841 = vmatpush1.bf16.xpose.msra.mxu0 0
          %1842 = vmatprep.subr.bf16.mxu0 0
          %1843 = vmatpush1.bf16.xpose.msra.mxu0 0
          %1844 = vmatprep.subr.bf16.mxu0 0
          %1845 = vmatpush1.bf16.xpose.msra.mxu0 %v1830
          %1846 = vmatprep.subr.bf16.mxu0 0
          %1847 = vmatpush1.bf16.xpose.msra.mxu0 %v1827
          %1848 = vmatprep.subr.bf16.mxu0 0
          %1849 = vmatpush2.bf16.xpose.msra.mxu0 0
          %1850 = vmatprep.subr.bf16.mxu0 0
          %1851 = vmatpush2.bf16.xpose.msra.mxu0 0
          %1852 = vmatprep.subr.bf16.mxu0 0
          %1853 = vmatpush2.bf16.xpose.msra.mxu0 0
          %1854 = vmatprep.subr.bf16.mxu0 0
          %1855 = vmatpush2.bf16.xpose.msra.mxu0 0
          %1856 = vmatprep.subr.bf16.mxu0 0
          %1857 = vmatpush2.bf16.xpose.msra.mxu0 0
          %1858 = vmatprep.subr.bf16.mxu0 0
          %1859 = vmatpush2.bf16.xpose.msra.mxu0 0
          %1860 = vmatprep.subr.bf16.mxu0 0
          %1861 = vmatpush2.bf16.xpose.msra.mxu0 0
          %1862 = vmatprep.subr.bf16.mxu0 0
          %1863 = vmatpush2.bf16.xpose.msra.mxu0 0
          %1864 = vmatprep.mubr.bf16.mxu0 0
          %1865 = vmatmul.mubr.bf16.gmra.mxu0 %v1824
          %v1866 = vpop.f32.mrf.mxu0
          %v1867 = vadd.f32 0.0, %v1866
          %v1868 = vpop.f32.mrf.mxu0
          %v1869 = vpop.f32.mrf.mxu0
          %v1870 = vpop.f32.mrf.mxu0
          %1871 = vdwg.mxu0
          %v1876 = vunpack.c.l.b16 %v1691
          %v1877 = vunpack.c.l.b16 %v1692
          %v1878 = vunpack.c.l.b16 %v1693
          %v1879 = vunpack.c.l.b16 %v1694
          %v1880 = vpack.c.b16 %v1877, %v1876
          %v1881 = vpack.c.b16 %v1879, %v1878
          %v1883 = vsel %vm1245, %v1678, 0
          %v1886 = vsel %vm1245, %v1880, 0
          %v1889 = vsel %vm1245, %v1881, 0
          %1891 = vmatprep.subr.bf16.mxu0 0
          %1892 = vmatpush1.bf16.xpose.msra.mxu0 0
          %1893 = vmatprep.subr.bf16.mxu0 0
          %1894 = vmatpush1.bf16.xpose.msra.mxu0 0
          %1895 = vmatprep.subr.bf16.mxu0 0
          %1896 = vmatpush1.bf16.xpose.msra.mxu0 0
          %1897 = vmatprep.subr.bf16.mxu0 0
          %1898 = vmatpush1.bf16.xpose.msra.mxu0 0
          %1899 = vmatprep.subr.bf16.mxu0 0
          %1900 = vmatpush1.bf16.xpose.msra.mxu0 0
          %1901 = vmatprep.subr.bf16.mxu0 0
          %1902 = vmatpush1.bf16.xpose.msra.mxu0 0
          %1903 = vmatprep.subr.bf16.mxu0 0
          %1904 = vmatpush1.bf16.xpose.msra.mxu0 %v1889
          %1905 = vmatprep.subr.bf16.mxu0 0
          %1906 = vmatpush1.bf16.xpose.msra.mxu0 %v1886
          %1907 = vmatprep.subr.bf16.mxu0 0
          %1908 = vmatpush2.bf16.xpose.msra.mxu0 0
          %1909 = vmatprep.subr.bf16.mxu0 0
          %1910 = vmatpush2.bf16.xpose.msra.mxu0 0
          %1911 = vmatprep.subr.bf16.mxu0 0
          %1912 = vmatpush2.bf16.xpose.msra.mxu0 0
          %1913 = vmatprep.subr.bf16.mxu0 0
          %1914 = vmatpush2.bf16.xpose.msra.mxu0 0
          %1915 = vmatprep.subr.bf16.mxu0 0
          %1916 = vmatpush2.bf16.xpose.msra.mxu0 0
          %1917 = vmatprep.subr.bf16.mxu0 0
          %1918 = vmatpush2.bf16.xpose.msra.mxu0 0
          %1919 = vmatprep.subr.bf16.mxu0 0
          %1920 = vmatpush2.bf16.xpose.msra.mxu0 0
          %1921 = vmatprep.subr.bf16.mxu0 0
          %1922 = vmatpush2.bf16.xpose.msra.mxu0 0
          %1923 = vmatprep.mubr.bf16.mxu0 0
          %1924 = vmatmul.mubr.bf16.gmra.mxu0 %v1883
          %v1925 = vpop.f32.mrf.mxu0
          %v1926 = vadd.f32 0.0, %v1925
          %v1927 = vpop.f32.mrf.mxu0
          %v1928 = vpop.f32.mrf.mxu0
          %v1929 = vpop.f32.mrf.mxu0
          %1930 = vdwg.mxu0
          %v1931 = vsel %vm653, %v1749, 0.0
          %v1932 = vsel %vm653, %v1808, 0.0
          %v1933 = vadd.f32 %v1931, %v1932
          %v1934 = vsel %vm653, %v1867, 0.0
          %v1935 = vadd.f32 %v1933, %v1934
          %v1936 = vsel %vm653, %v1926, 0.0
          %v1937 = vadd.f32 %v1935, %v1936
          %v1938 = vld [vmem:[%s9] sm:$0x1]
          %v1940 = vlaneseq
          %v1941 = vshrl.u32 %v1940, 7
          %v1942 = vsub.s32 0, %v1941
          %v1943 = vrot.slane %v1938, %v1942
          %v1945 = vadd.f32 %v1937, %v1943
          %v1946 = vadd.f32 %v619, %v1945
          %v1947 = vsel %vm653, %v1946, 0.0
          %1948 = vadd.xlane.f32.xlu0 %v1947
          %v1949 = vpop.xlane.xlu0 %1948
          %v1950 = vrcp.pop 32.0
          %v1951 = vmul.f32 %v1949, %v1950
          %v1952 = vsub.f32 %v1946, %v1951
          %v1953 = vmul.f32 %v1952, %v1952
          %v1954 = vsel %vm653, %v1953, 0.0
          %1955 = vadd.xlane.f32.xlu0 %v1954
          %v1956 = vpop.xlane.xlu0 %1955
          %v1957 = vmul.f32 %v1956, %v1950
          %v1958 = vadd.f32 %v1957, 1e-05
          %v1959 = vrsqrt.pop %v1958
          %v1960 = vmul.f32 %v1952, %v1959
          %v1961 = vld [vmem:[%s14] sm:$0x1]
          %v1963 = vlaneseq
          %v1964 = vshrl.u32 %v1963, 7
          %v1965 = vsub.s32 0, %v1964
          %v1966 = vrot.slane %v1961, %v1965
          %v1968 = vmul.f32 %v1960, %v1966
          %v1969 = vld [vmem:[%s15] sm:$0x1]
          %v1971 = vlaneseq
          %v1972 = vshrl.u32 %v1971, 7
          %v1973 = vsub.s32 0, %v1972
          %v1974 = vrot.slane %v1969, %v1973
          %v1976 = vadd.f32 %v1968, %v1974
          %v1977 = vpack.c.bf16 %v1976, %v1976
          %v1978 = vld [vmem:[%s10] sm:$0xf]
          %v1979 = vld [vmem:[%s10 + $0x4] sm:$0xf]
          %v1980 = vld [vmem:[%s10 + $0x8] sm:$0xf]
          %v1981 = vld [vmem:[%s10 + $0xc] sm:$0xf]
          %v1982 = vld [vmem:[%s11] sm:$0x1]
          %v1984 = vlaneseq
          %v1985 = vshrl.u32 %v1984, 7
          %v1986 = vsub.s32 0, %v1985
          %v1987 = vrot.slane %v1982, %v1986
          %v1993 = vunpack.c.l.b16 %v1978
          %v1994 = vunpack.c.l.b16 %v1979
          %v1995 = vunpack.c.l.b16 %v1980
          %v1996 = vunpack.c.l.b16 %v1981
          %v1997 = vpack.c.b16 %v1994, %v1993
          %v1998 = vpack.c.b16 %v1996, %v1995
          %v2002 = vsel %vm653, %v1977, 0
          %2004 = vmatprep.subr.bf16.mxu0 0
          %2005 = vmatpush1.bf16.msra.mxu0 0
          %2006 = vmatprep.subr.bf16.mxu0 0
          %2007 = vmatpush1.bf16.msra.mxu0 0
          %2008 = vmatprep.subr.bf16.mxu0 0
          %2009 = vmatpush1.bf16.msra.mxu0 0
          %2010 = vmatprep.subr.bf16.mxu0 0
          %2011 = vmatpush1.bf16.msra.mxu0 0
          %2012 = vmatprep.subr.bf16.mxu0 0
          %2013 = vmatpush1.bf16.msra.mxu0 0
          %2014 = vmatprep.subr.bf16.mxu0 0
          %2015 = vmatpush1.bf16.msra.mxu0 0
          %2016 = vmatprep.subr.bf16.mxu0 0
          %2017 = vmatpush1.bf16.msra.mxu0 %v1998
          %2018 = vmatprep.subr.bf16.mxu0 0
          %2019 = vmatpush1.bf16.msra.mxu0 %v1997
          %2020 = vmatprep.subr.bf16.mxu0 0
          %2021 = vmatpush2.bf16.msra.mxu0 0
          %2022 = vmatprep.subr.bf16.mxu0 0
          %2023 = vmatpush2.bf16.msra.mxu0 0
          %2024 = vmatprep.subr.bf16.mxu0 0
          %2025 = vmatpush2.bf16.msra.mxu0 0
          %2026 = vmatprep.subr.bf16.mxu0 0
          %2027 = vmatpush2.bf16.msra.mxu0 0
          %2028 = vmatprep.subr.bf16.mxu0 0
          %2029 = vmatpush2.bf16.msra.mxu0 0
          %2030 = vmatprep.subr.bf16.mxu0 0
          %2031 = vmatpush2.bf16.msra.mxu0 0
          %2032 = vmatprep.subr.bf16.mxu0 0
          %2033 = vmatpush2.bf16.msra.mxu0 0
          %2034 = vmatprep.subr.bf16.mxu0 0
          %2035 = vmatpush2.bf16.msra.mxu0 0
          %2036 = vmatprep.mubr.bf16.mxu0 0
          %2037 = vmatmul.mubr.bf16.gmra.mxu0 %v2002
          %v2038 = vpop.f32.mrf.mxu0
          %v2039 = vadd.f32 %v1987, %v2038
          %v2040 = vpop.f32.mrf.mxu0
          %v2041 = vpop.f32.mrf.mxu0
          %v2042 = vpop.f32.mrf.mxu0
          %2043 = vdwg.mxu0
          %v2044 = vmax.f32 %v2039, 0.0
          %v2045 = vpack.c.bf16 %v2044, %v2044
          %v2046 = vld [vmem:[%s12] sm:$0xf]
          %v2047 = vld [vmem:[%s12 + $0x4] sm:$0xf]
          %v2048 = vld [vmem:[%s12 + $0x8] sm:$0xf]
          %v2049 = vld [vmem:[%s12 + $0xc] sm:$0xf]
          %v2050 = vld [vmem:[%s12 + $0x10] sm:$0xf]
          %v2051 = vld [vmem:[%s12 + $0x14] sm:$0xf]
          %v2052 = vld [vmem:[%s12 + $0x18] sm:$0xf]
          %v2053 = vld [vmem:[%s12 + $0x1c] sm:$0xf]
          %v2054 = vld [vmem:[%s13] sm:$0x1]
          %v2056 = vlaneseq
          %v2057 = vshrl.u32 %v2056, 7
          %v2058 = vsub.s32 0, %v2057
          %v2059 = vrot.slane %v2054, %v2058
          %v2069 = vunpack.c.l.b16 %v2046
          %v2070 = vunpack.c.l.b16 %v2047
          %v2071 = vunpack.c.l.b16 %v2048
          %v2072 = vunpack.c.l.b16 %v2049
          %v2073 = vunpack.c.l.b16 %v2050
          %v2074 = vunpack.c.l.b16 %v2051
          %v2075 = vunpack.c.l.b16 %v2052
          %v2076 = vunpack.c.l.b16 %v2053
          %v2077 = vpack.c.b16 %v2070, %v2069
          %v2078 = vpack.c.b16 %v2072, %v2071
          %v2079 = vpack.c.b16 %v2074, %v2073
          %v2080 = vpack.c.b16 %v2076, %v2075
          %vm2085 = vcmask 523264
          %v2087 = vsel %vm2085, %v2045, 0
          %2089 = vmatprep.subr.bf16.mxu0 0
          %2090 = vmatpush1.bf16.msra.mxu0 0
          %2091 = vmatprep.subr.bf16.mxu0 0
          %2092 = vmatpush1.bf16.msra.mxu0 0
          %2093 = vmatprep.subr.bf16.mxu0 0
          %2094 = vmatpush1.bf16.msra.mxu0 0
          %2095 = vmatprep.subr.bf16.mxu0 0
          %2096 = vmatpush1.bf16.msra.mxu0 0
          %2097 = vmatprep.subr.bf16.mxu0 0
          %2098 = vmatpush1.bf16.msra.mxu0 %v2080
          %2099 = vmatprep.subr.bf16.mxu0 0
          %2100 = vmatpush1.bf16.msra.mxu0 %v2079
          %2101 = vmatprep.subr.bf16.mxu0 0
          %2102 = vmatpush1.bf16.msra.mxu0 %v2078
          %2103 = vmatprep.subr.bf16.mxu0 0
          %2104 = vmatpush1.bf16.msra.mxu0 %v2077
          %2105 = vmatprep.subr.bf16.mxu0 0
          %2106 = vmatpush2.bf16.msra.mxu0 0
          %2107 = vmatprep.subr.bf16.mxu0 0
          %2108 = vmatpush2.bf16.msra.mxu0 0
          %2109 = vmatprep.subr.bf16.mxu0 0
          %2110 = vmatpush2.bf16.msra.mxu0 0
          %2111 = vmatprep.subr.bf16.mxu0 0
          %2112 = vmatpush2.bf16.msra.mxu0 0
          %2113 = vmatprep.subr.bf16.mxu0 0
          %2114 = vmatpush2.bf16.msra.mxu0 0
          %2115 = vmatprep.subr.bf16.mxu0 0
          %2116 = vmatpush2.bf16.msra.mxu0 0
          %2117 = vmatprep.subr.bf16.mxu0 0
          %2118 = vmatpush2.bf16.msra.mxu0 0
          %2119 = vmatprep.subr.bf16.mxu0 0
          %2120 = vmatpush2.bf16.msra.mxu0 0
          %2121 = vmatprep.mubr.bf16.mxu0 0
          %2122 = vmatmul.mubr.bf16.gmra.mxu0 %v2087
          %v2123 = vpop.f32.mrf.mxu0
          %v2124 = vadd.f32 %v2059, %v2123
          %v2125 = vpop.f32.mrf.mxu0
          %v2126 = vpop.f32.mrf.mxu0
          %v2127 = vpop.f32.mrf.mxu0
          %2128 = vdwg.mxu0
          %v2129 = vadd.f32 %v1976, %v2124
          %v2130 = vsel %vm653, %v2129, 0.0
          %2131 = vadd.xlane.f32.xlu0 %v2130
          %v2132 = vpop.xlane.xlu0 %2131
          %v2133 = vmul.f32 %v2132, %v1950
          %v2134 = vsub.f32 %v2129, %v2133
          %v2135 = vmul.f32 %v2134, %v2134
          %v2136 = vsel %vm653, %v2135, 0.0
          %2137 = vadd.xlane.f32.xlu0 %v2136
          %v2138 = vpop.xlane.xlu0 %2137
          %v2139 = vmul.f32 %v2138, %v1950
          %v2140 = vadd.f32 %v2139, 1e-05
          %v2141 = vrsqrt.pop %v2140
          %v2142 = vmul.f32 %v2134, %v2141
          %v2143 = vld [vmem:[%s16] sm:$0x1]
          %v2145 = vlaneseq
          %v2146 = vshrl.u32 %v2145, 7
          %v2147 = vsub.s32 0, %v2146
          %v2148 = vrot.slane %v2143, %v2147
          %v2150 = vmul.f32 %v2142, %v2148
          %v2151 = vld [vmem:[%s17] sm:$0x1]
          %v2153 = vlaneseq
          %v2154 = vshrl.u32 %v2153, 7
          %v2155 = vsub.s32 0, %v2154
          %v2156 = vrot.slane %v2151, %v2155
          %v2158 = vadd.f32 %v2150, %v2156
        $region101: #{encoder_forward.1} parent=95 // loop_footer
          %s618 = sadd.s32 1, %s614
        $region102: #{encoder_forward.1} parent=95 // loop_footer_branch
          %613 = sbr.rel target = $region98
        $region103: #{encoder_forward.1} parent=95 // loop_exit
          _
        %vm2159 = vcmask 261120
        %v2160 = vsel %vm2159, %v619, 0.0
        %2161 = vadd.xlane.f32.xlu0 %v2160
        %v2162 = vpop.xlane.xlu0 %2161
        %v2163 = vrcp.pop 32.0
        %v2164 = vmul.f32 %v2162, %v2163
        %v2165 = vsub.f32 %v619, %v2164
        %v2166 = vmul.f32 %v2165, %v2165
        %v2167 = vsel %vm2159, %v2166, 0.0
        %2168 = vadd.xlane.f32.xlu0 %v2167
        %v2169 = vpop.xlane.xlu0 %2168
        %v2170 = vmul.f32 %v2169, %v2163
        %v2171 = vadd.f32 %v2170, 1e-05
        %v2172 = vrsqrt.pop %v2171
        %v2173 = vmul.f32 %v2165, %v2172
        %v2174 = vld [vmem:[%s18] sm:$0x1]
        %v2176 = vlaneseq
        %v2177 = vshrl.u32 %v2176, 7
        %v2178 = vsub.s32 0, %v2177
        %v2179 = vrot.slane %v2174, %v2178
        %v2181 = vmul.f32 %v2173, %v2179
        %v2182 = vld [vmem:[%s19] sm:$0x1]
        %v2184 = vlaneseq
        %v2185 = vshrl.u32 %v2184, 7
        %v2186 = vsub.s32 0, %v2185
        %v2187 = vrot.slane %v2182, %v2186
        %v2189 = vadd.f32 %v2181, %v2187
        %2190 = vst.msk [vmem:[%s600] sm:$0xff] %vm2159, %v2189
        %s2191 = sand.u32 %s452, 1
        %s2192 = scalar_lea.sflag [#allocation5], %s2191
        %s2193 = sand.u32 %s452, 1
        %s2194 = smul.addr %s2193, 8
        %s2195 = scalar_lea.vmem [#allocation4], %s2194
        // Predicated region
        $region104: #{encoder_forward.1} parent=95 // pred_check
          %p2196 = pneg %p462
        $region105: #{encoder_forward.1} parent=95 // pred_check_branch
          %2198 = sbr.rel (%p2196) target = $region107
        $region106: #{encoder_forward.1} parent=95 // pred_region
          %s2200 = ssub.s32 128, 128
          %2201 = vsyncadd %s2192, %s2200
          %s2202 = smul.addr %s40, 128
          %s2203 = scalar_lea.hbm %s20, %s2202
          %s2205 = sshll.u32 %s2195, 4
          %s2206 = int_to_ptr.vmem [resolvable:$true] %s2205
          %2208 = dma.vmem_to_hbm [thread:$0]  %s2206, 128, %s2203, %s2192
        $region107: #{encoder_forward.1} parent=95 // pred_fallthru
          _
      $region96: #{encoder_forward.1} parent=5 // pred_fallthru
        _
      %p2209 = scmp.le.s32.totalorder 2, %s35
      // Predicated region
      $region108: #{encoder_forward.1} parent=5 // pred_check
        %p2210 = pneg %p2209
      $region109: #{encoder_forward.1} parent=5 // pred_check_branch
        %2212 = sbr.rel (%p2210) target = $region111
      $region110: #{encoder_forward.1} parent=5 // pred_region
        %s2213 = ssub.s32 %s35, 2
        // Predicated region
        $region112: #{encoder_forward.1} parent=110 // pred_check
          %p2214 = pneg %p468
        $region113: #{encoder_forward.1} parent=110 // pred_check_branch
          %2216 = sbr.rel (%p2214) target = $region115
        $region114: #{encoder_forward.1} parent=110 // pred_region
          %s2217 = sand.u32 %s453, 1
          %s2218 = scalar_lea.sflag [#allocation5], %s2217
          %s2219 = sand.u32 %s453, 1
          %s2220 = smul.addr %s2219, 8
          %s2221 = scalar_lea.vmem [#allocation4], %s2220
          %2222 = dma.done %s2218, 128
        $region115: #{encoder_forward.1} parent=110 // pred_fallthru
          _
      $region111: #{encoder_forward.1} parent=5 // pred_fallthru
        _
    $region6: #{encoder_forward.1} parent=1 // loop_footer
      %s39 = sadd.s32 1, %s35
    $region7: #{encoder_forward.1} parent=1 // loop_footer_branch
      %34 = sbr.rel target = $region3
    $region8: #{encoder_forward.1} parent=1 // loop_exit
      _
    %2223 = vsyncpa [#allocation5], 1
    %s2224 = scalar_lea.sflag [#allocation5], 1
    %2225 = vsyncpa %s2224, 1

</llo_original>
